<compile_context>
chip_gen: v7x
topology: tpu7x:2x2x1
jax: 0.10.0
libtpu: 0.0.40
codegen_flags: <defaults>
</compile_context>

<pallas_src>
import functools
import math

import jax
import jax.numpy as jnp
from jax.experimental import pallas as pl
from jax.experimental.pallas import tpu as pltpu

BN_EPS = 1e-5


# ---------------------------------------------------------------------------
# Shared math (plain jnp: usable both inside the kernel and in the reference)
# ---------------------------------------------------------------------------
def _bn_act(y, gamma, beta, act):
    """BatchNorm1d (training mode, biased variance, centered two-pass) + act."""
    inv_b = 1.0 / y.shape[0]
    mean = jnp.sum(y, axis=0, keepdims=True) * inv_b
    centered = y - mean
    var = jnp.sum(centered * centered, axis=0, keepdims=True) * inv_b
    y = centered * jax.lax.rsqrt(var + BN_EPS)
    y = y * gamma + beta
    if act == "relu":
        y = jnp.maximum(y, 0.0)
    elif act == "sigmoid":
        y = jax.nn.sigmoid(y)
    return y


def _linear_bn_act(h, w, gamma, beta, act):
    """y = h @ W (bf16 on the MXU, f32 accumulation) -> BN -> activation.

    The Linear bias is omitted: BN's batch-mean subtraction cancels it exactly.
    """
    y = jnp.dot(h.astype(w.dtype), w, preferred_element_type=jnp.float32)
    return _bn_act(y, gamma, beta, act)


# ---------------------------------------------------------------------------
# Fused Pallas kernel: full VAE forward for ONE BatchNorm group per grid step
# ---------------------------------------------------------------------------
def _vae_fused_kernel(x_ref, eps_ref,
                      w1_ref, g1_ref, b1_ref,      # enc_fc1
                      w2_ref, g2_ref, b2_ref,      # enc_fc2
                      wh_ref, gh_ref, bh_ref,      # merged (mu || logvar) head
                      w4_ref, g4_ref, b4_ref,      # dec_fc3
                      w5_ref, g5_ref, b5_ref,      # dec_fc2
                      w6_ref, g6_ref, b6_ref,      # dec_fc1
                      xhat_ref, mu_ref, logvar_ref, z_ref,
                      *, latent_dim):
    def layer(h, w_ref, g_ref, b_ref, act):
        return _linear_bn_act(h, w_ref[...], g_ref[...], b_ref[...], act)

    # ---- encoder ----
    h = x_ref[...]                                    # bf16, (GB, input_size)
    h = layer(h, w1_ref, g1_ref, b1_ref, "relu")
    h = layer(h, w2_ref, g2_ref, b2_ref, "relu")

    # merged mu||logvar head: one lane-dense (level_3, 2*latent) matmul.
    # BN stats are per-feature over the batch, so this equals the two separate
    # BatchNorm1d(latent_dim) modules exactly.  latent_dim is a multiple of
    # 128, so both slices stay lane-aligned.
    ml = layer(h, wh_ref, gh_ref, bh_ref, "none")     # (GB, 2*latent)
    mu = ml[:, :latent_dim]
    logvar = ml[:, latent_dim:]

    # ---- reparameterize: z = mu + eps * exp(0.5 * logvar)  (f32, EUP exp) ----
    z = mu + eps_ref[...] * jnp.exp(0.5 * logvar)

    mu_ref[...] = mu
    logvar_ref[...] = logvar
    z_ref[...] = z

    # ---- decoder ----
    h = layer(z, w4_ref, g4_ref, b4_ref, "relu")
    h = layer(h, w5_ref, g5_ref, b5_ref, "relu")
    xhat_ref[...] = layer(h, w6_ref, g6_ref, b6_ref, "sigmoid")


_LAYER_ORDER = ("enc_fc1", "enc_fc2", "enc_head", "dec_fc3", "dec_fc2", "dec_fc1")


def vae_forward(params, x, eps, *, group_batch):
    """Fused pallas_call for the whole VAE forward pass.

    x: (total_B, input_size) bf16, eps: (total_B, latent_dim) f32.
    total_B must be a multiple of group_batch; each group of `group_batch`
    rows is an independent BatchNorm batch (one grid step, one model(x) call).
    Returns (x_hat, mu, logvar, z).
    """
    total_b, input_size = x.shape
    latent_dim = eps.shape[1]
    assert total_b % group_batch == 0
    num_groups = total_b // group_batch

    # Batch-group blocks for activations; constant-index (VMEM-resident across
    # the whole grid) blocks for the small, shared weights.
    flat_args = []
    in_specs = [
        pl.BlockSpec((group_batch, input_size), lambda g: (g, 0)),   # x
        pl.BlockSpec((group_batch, latent_dim), lambda g: (g, 0)),   # eps
    ]
    for name in _LAYER_ORDER:
        p = params[name]
        for a in (p["w"], p["gamma"], p["beta"]):
            flat_args.append(a)
            in_specs.append(pl.BlockSpec(a.shape, lambda g: (0, 0)))

    out_specs = (
        pl.BlockSpec((group_batch, input_size), lambda g: (g, 0)),   # x_hat
        pl.BlockSpec((group_batch, latent_dim), lambda g: (g, 0)),   # mu
        pl.BlockSpec((group_batch, latent_dim), lambda g: (g, 0)),   # logvar
        pl.BlockSpec((group_batch, latent_dim), lambda g: (g, 0)),   # z
    )
    out_shape = (
        jax.ShapeDtypeStruct((total_b, input_size), jnp.float32),
        jax.ShapeDtypeStruct((total_b, latent_dim), jnp.float32),
        jax.ShapeDtypeStruct((total_b, latent_dim), jnp.float32),
        jax.ShapeDtypeStruct((total_b, latent_dim), jnp.float32),
    )

    # Advisory cost estimate for XLA's scheduler.
    matmul_terms = sum(
        params[n]["w"].shape[0] * params[n]["w"].shape[1] for n in _LAYER_ORDER
    )
    param_bytes = sum(int(a.size) * a.dtype.itemsize for a in flat_args)
    out_bytes = sum(math.prod(s.shape) * 4 for s in out_shape)
    cost_estimate = pl.CostEstimate(
        flops=2 * total_b * matmul_terms,
        transcendentals=total_b * (latent_dim + input_size),
        bytes_accessed=x.nbytes + eps.nbytes + param_bytes + out_bytes,
    )

    kernel = functools.partial(_vae_fused_kernel, latent_dim=latent_dim)
    return pl.pallas_call(
        kernel,
        out_shape=out_shape,
        grid_spec=pltpu.PrefetchScalarGridSpec(
            num_scalar_prefetch=0,
            grid=(num_groups,),
            in_specs=in_specs,
            out_specs=list(out_specs),
        ),
        compiler_params=pltpu.CompilerParams(
            # Independent groups: shard across both v7x TensorCores.
            dimension_semantics=("parallel",),
            vmem_limit_bytes=32 * 1024 * 1024,
        ),
        cost_estimate=cost_estimate,
    )(x, eps, *flat_args)


# ---------------------------------------------------------------------------
# Pure-JAX reference (same math, per-group BN) for a correctness check
# ---------------------------------------------------------------------------
def vae_forward_ref(params, x, eps, *, latent_dim, group_batch):
    total_b = x.shape[0]
    num_groups = total_b // group_batch
    xg = x.reshape(num_groups, group_batch, -1)
    eg = eps.reshape(num_groups, group_batch, -1)

    def one_group(xb, eb):
        def layer(h, name, act):
            p = params[name]
            return _linear_bn_act(h, p["w"], p["gamma"], p["beta"], act)

        h = layer(xb, "enc_fc1", "relu")
        h = layer(h, "enc_fc2", "relu")
        ml = layer(h, "enc_head", "none")
        mu, logvar = ml[:, :latent_dim], ml[:, latent_dim:]
        z = mu + eb * jnp.exp(0.5 * logvar)
        h = layer(z, "dec_fc3", "relu")
        h = layer(h, "dec_fc2", "relu")
        x_hat = layer(h, "dec_fc1", "sigmoid")
        return x_hat, mu, logvar, z

    x_hat, mu, logvar, z = jax.vmap(one_group)(xg, eg)
    return (x_hat.reshape(total_b, -1), mu.reshape(total_b, -1),
            logvar.reshape(total_b, -1), z.reshape(total_b, -1))


# ---------------------------------------------------------------------------
# Parameter construction (deterministic, synthetic)
# ---------------------------------------------------------------------------
def make_layer_params(key, in_dim, out_dim):
    """Linear weight stored as (in, out) in bf16 + BatchNorm affine in f32.

    The Linear bias is intentionally not materialized: the BatchNorm that
    immediately follows every Linear cancels it exactly (training-mode BN).
    """
    bound = 1.0 / jnp.sqrt(jnp.float32(in_dim))
    w = jax.random.uniform(key, (in_dim, out_dim), jnp.float32, -bound, bound)
    return dict(
        w=w.astype(jnp.bfloat16),
        gamma=jnp.ones((1, out_dim), jnp.float32),
        beta=jnp.zeros((1, out_dim), jnp.float32),
    )


def init_vae_params(key, input_size, level_2, level_3, latent_dim):
    keys = jax.random.split(key, 7)
    mean_head = make_layer_params(keys[2], level_3, latent_dim)
    logvar_head = make_layer_params(keys[3], level_3, latent_dim)
    # merge the two latent heads into one lane-dense (level_3, 2*latent) layer
    enc_head = dict(
        w=jnp.concatenate([mean_head["w"], logvar_head["w"]], axis=1),
        gamma=jnp.concatenate([mean_head["gamma"], logvar_head["gamma"]], axis=1),
        beta=jnp.concatenate([mean_head["beta"], logvar_head["beta"]], axis=1),
    )
    return {
        "enc_fc1": make_layer_params(keys[0], input_size, level_2),
        "enc_fc2": make_layer_params(keys[1], level_2, level_3),
        "enc_head": enc_head,
        "dec_fc3": make_layer_params(keys[4], latent_dim, level_3),
        "dec_fc2": make_layer_params(keys[5], level_3, level_2),
        "dec_fc1": make_layer_params(keys[6], level_2, input_size),
    }


# ---------------------------------------------------------------------------
# Main
# ---------------------------------------------------------------------------
if __name__ == "__main__":
    # Lane-dense (multiples of 128) feature dims; group_batch is a multiple of
    # 16 (full bf16 sublane packing) and large enough to occupy the MXU rows.
    input_size = 512
    level_2 = 256
    level_3 = 128
    latent_dim = 128
    group_batch = 128        # one BatchNorm group = one grid step
    num_groups = 4           # independent model(x) calls; parallel grid axis
    total_b = group_batch * num_groups

    key = jax.random.PRNGKey(0)
    k_params, k_x, k_eps = jax.random.split(key, 3)

    params = init_vae_params(k_params, input_size, level_2, level_3, latent_dim)
    # DNA-methylation beta-values live in [0, 1]; pass as bf16 (exact: the
    # kernel feeds the MXU in bf16 anyway).
    x = jax.random.uniform(k_x, (total_b, input_size), jnp.float32)
    x = x.astype(jnp.bfloat16)
    # reparameterization noise supplied externally for determinism (f32)
    eps = jax.random.normal(k_eps, (total_b, latent_dim), jnp.float32)

    fwd = jax.jit(vae_forward, static_argnames=("group_batch",))
    x_hat, mu, logvar, z = fwd(params, x, eps, group_batch=group_batch)
    jax.block_until_ready((x_hat, mu, logvar, z))

    # Shape / sanity checks
    assert x_hat.shape == (total_b, input_size)
    assert mu.shape == (total_b, latent_dim)
    assert logvar.shape == (total_b, latent_dim)
    assert z.shape == (total_b, latent_dim)
    assert bool(jnp.all(jnp.isfinite(x_hat)))
    assert bool(jnp.all((x_hat >= 0.0) & (x_hat <= 1.0)))

    # Numerical check against the pure-JAX reference (same bf16 weights / f32
    # accumulation / per-group BN); tolerances tightened vs. the old 0.2.
    ref = jax.jit(functools.partial(
        vae_forward_ref, latent_dim=latent_dim, group_batch=group_batch))
    r_xhat, r_mu, r_logvar, r_z = ref(params, x, eps)
    for got, want, tol in ((x_hat, r_xhat, 1e-2), (mu, r_mu, 1e-2),
                           (logvar, r_logvar, 1e-2), (z, r_z, 5e-2)):
        assert float(jnp.max(jnp.abs(got - want))) < tol

    print("KERNEL_OK")
</pallas_src>

<mosaic_0001>
module attributes {stable_mosaic.version = 11 : i64} {
  func.func @_vae_fused_kernel(%arg0: i32, %arg1: memref<128x512xbf16, #tpu.memory_space<vmem>>, %arg2: memref<128x128xf32, #tpu.memory_space<vmem>>, %arg3: memref<512x256xbf16, #tpu.memory_space<vmem>>, %arg4: memref<1x256xf32, #tpu.memory_space<vmem>>, %arg5: memref<1x256xf32, #tpu.memory_space<vmem>>, %arg6: memref<256x128xbf16, #tpu.memory_space<vmem>>, %arg7: memref<1x128xf32, #tpu.memory_space<vmem>>, %arg8: memref<1x128xf32, #tpu.memory_space<vmem>>, %arg9: memref<128x256xbf16, #tpu.memory_space<vmem>>, %arg10: memref<1x256xf32, #tpu.memory_space<vmem>>, %arg11: memref<1x256xf32, #tpu.memory_space<vmem>>, %arg12: memref<128x128xbf16, #tpu.memory_space<vmem>>, %arg13: memref<1x128xf32, #tpu.memory_space<vmem>>, %arg14: memref<1x128xf32, #tpu.memory_space<vmem>>, %arg15: memref<128x256xbf16, #tpu.memory_space<vmem>>, %arg16: memref<1x256xf32, #tpu.memory_space<vmem>>, %arg17: memref<1x256xf32, #tpu.memory_space<vmem>>, %arg18: memref<256x512xbf16, #tpu.memory_space<vmem>>, %arg19: memref<1x512xf32, #tpu.memory_space<vmem>>, %arg20: memref<1x512xf32, #tpu.memory_space<vmem>>, %arg21: memref<128x512xf32, #tpu.memory_space<vmem>>, %arg22: memref<128x128xf32, #tpu.memory_space<vmem>>, %arg23: memref<128x128xf32, #tpu.memory_space<vmem>>, %arg24: memref<128x128xf32, #tpu.memory_space<vmem>>) attributes {dimension_semantics = [#tpu.dimension_semantics<parallel>], iteration_bounds = array<i64: 4>, scalar_prefetch = 0 : i64, scratch_operands = 0 : i64, tpu.core_type = #tpu.core_type<tc>, window_params = [{transform_indices = @transform_0, window_bounds = array<i64: 128, 512>}, {transform_indices = @transform_1, window_bounds = array<i64: 128, 128>}, {pipeline_mode = #tpu.pipeline_mode<synchronous>, transform_indices = @transform_2, window_bounds = array<i64: 512, 256>}, {pipeline_mode = #tpu.pipeline_mode<synchronous>, transform_indices = @transform_3, window_bounds = array<i64: 1, 256>}, {pipeline_mode = #tpu.pipeline_mode<synchronous>, transform_indices = @transform_4, window_bounds = array<i64: 1, 256>}, {pipeline_mode = #tpu.pipeline_mode<synchronous>, transform_indices = @transform_5, window_bounds = array<i64: 256, 128>}, {pipeline_mode = #tpu.pipeline_mode<synchronous>, transform_indices = @transform_6, window_bounds = array<i64: 1, 128>}, {pipeline_mode = #tpu.pipeline_mode<synchronous>, transform_indices = @transform_7, window_bounds = array<i64: 1, 128>}, {pipeline_mode = #tpu.pipeline_mode<synchronous>, transform_indices = @transform_8, window_bounds = array<i64: 128, 256>}, {pipeline_mode = #tpu.pipeline_mode<synchronous>, transform_indices = @transform_9, window_bounds = array<i64: 1, 256>}, {pipeline_mode = #tpu.pipeline_mode<synchronous>, transform_indices = @transform_10, window_bounds = array<i64: 1, 256>}, {pipeline_mode = #tpu.pipeline_mode<synchronous>, transform_indices = @transform_11, window_bounds = array<i64: 128, 128>}, {pipeline_mode = #tpu.pipeline_mode<synchronous>, transform_indices = @transform_12, window_bounds = array<i64: 1, 128>}, {pipeline_mode = #tpu.pipeline_mode<synchronous>, transform_indices = @transform_13, window_bounds = array<i64: 1, 128>}, {pipeline_mode = #tpu.pipeline_mode<synchronous>, transform_indices = @transform_14, window_bounds = array<i64: 128, 256>}, {pipeline_mode = #tpu.pipeline_mode<synchronous>, transform_indices = @transform_15, window_bounds = array<i64: 1, 256>}, {pipeline_mode = #tpu.pipeline_mode<synchronous>, transform_indices = @transform_16, window_bounds = array<i64: 1, 256>}, {pipeline_mode = #tpu.pipeline_mode<synchronous>, transform_indices = @transform_17, window_bounds = array<i64: 256, 512>}, {pipeline_mode = #tpu.pipeline_mode<synchronous>, transform_indices = @transform_18, window_bounds = array<i64: 1, 512>}, {pipeline_mode = #tpu.pipeline_mode<synchronous>, transform_indices = @transform_19, window_bounds = array<i64: 1, 512>}, {transform_indices = @transform_20, window_bounds = array<i64: 128, 512>}, {transform_indices = @transform_21, window_bounds = array<i64: 128, 128>}, {transform_indices = @transform_22, window_bounds = array<i64: 128, 128>}, {transform_indices = @transform_23, window_bounds = array<i64: 128, 128>}]} {
    %c0 = arith.constant 0 : index
    %c0_0 = arith.constant 0 : index
    %0 = vector.load %arg1[%c0, %c0_0] : memref<128x512xbf16, #tpu.memory_space<vmem>>, vector<128x512xbf16>
    %c0_1 = arith.constant 0 : index
    %c0_2 = arith.constant 0 : index
    %1 = vector.load %arg3[%c0_1, %c0_2] : memref<512x256xbf16, #tpu.memory_space<vmem>>, vector<512x256xbf16>
    %c0_3 = arith.constant 0 : index
    %c0_4 = arith.constant 0 : index
    %2 = vector.load %arg4[%c0_3, %c0_4] : memref<1x256xf32, #tpu.memory_space<vmem>>, vector<1x256xf32>
    %c0_5 = arith.constant 0 : index
    %c0_6 = arith.constant 0 : index
    %3 = vector.load %arg5[%c0_5, %c0_6] : memref<1x256xf32, #tpu.memory_space<vmem>>, vector<1x256xf32>
    %cst = arith.constant dense<0.000000e+00> : vector<128x256xf32>
    %4 = tpu.matmul %0, %1, %cst {dimension_numbers = #tpu.dot_dimension_numbers<[1], [0], [0], [1], [0, 0, 1, 1], [], []>} : vector<128x512xbf16>, vector<512x256xbf16>, vector<128x256xf32> -> vector<128x256xf32>
    %cst_7 = arith.constant dense<0.000000e+00> : vector<256xf32>
    %5 = vector.multi_reduction <add>, %4, %cst_7 [0] : vector<128x256xf32> to vector<256xf32>
    %6 = vector.shape_cast %5 : vector<256xf32> to vector<1x256xf32>
    %cst_8 = arith.constant 7.812500e-03 : f32
    %7 = vector.broadcast %cst_8 : f32 to vector<1x256xf32>
    %8 = arith.mulf %6, %7 : vector<1x256xf32>
    %9 = vector.broadcast %8 : vector<1x256xf32> to vector<128x256xf32>
    %10 = arith.subf %4, %9 : vector<128x256xf32>
    %11 = arith.mulf %10, %10 : vector<128x256xf32>
    %cst_9 = arith.constant dense<0.000000e+00> : vector<256xf32>
    %12 = vector.multi_reduction <add>, %11, %cst_9 [0] : vector<128x256xf32> to vector<256xf32>
    %13 = vector.shape_cast %12 : vector<256xf32> to vector<1x256xf32>
    %cst_10 = arith.constant 7.812500e-03 : f32
    %14 = vector.broadcast %cst_10 : f32 to vector<1x256xf32>
    %15 = arith.mulf %13, %14 : vector<1x256xf32>
    %cst_11 = arith.constant 9.99999974E-6 : f32
    %16 = vector.broadcast %cst_11 : f32 to vector<1x256xf32>
    %17 = arith.addf %15, %16 : vector<1x256xf32>
    %18 = math.rsqrt %17 : vector<1x256xf32>
    %19 = vector.broadcast %18 : vector<1x256xf32> to vector<128x256xf32>
    %20 = arith.mulf %10, %19 : vector<128x256xf32>
    %21 = vector.broadcast %2 : vector<1x256xf32> to vector<128x256xf32>
    %22 = arith.mulf %20, %21 : vector<128x256xf32>
    %23 = vector.broadcast %3 : vector<1x256xf32> to vector<128x256xf32>
    %24 = arith.addf %22, %23 : vector<128x256xf32>
    %cst_12 = arith.constant 0.000000e+00 : f32
    %25 = vector.broadcast %cst_12 : f32 to vector<128x256xf32>
    %26 = arith.maximumf %24, %25 : vector<128x256xf32>
    %c0_13 = arith.constant 0 : index
    %c0_14 = arith.constant 0 : index
    %27 = vector.load %arg6[%c0_13, %c0_14] : memref<256x128xbf16, #tpu.memory_space<vmem>>, vector<256x128xbf16>
    %c0_15 = arith.constant 0 : index
    %c0_16 = arith.constant 0 : index
    %28 = vector.load %arg7[%c0_15, %c0_16] : memref<1x128xf32, #tpu.memory_space<vmem>>, vector<1x128xf32>
    %c0_17 = arith.constant 0 : index
    %c0_18 = arith.constant 0 : index
    %29 = vector.load %arg8[%c0_17, %c0_18] : memref<1x128xf32, #tpu.memory_space<vmem>>, vector<1x128xf32>
    %30 = arith.truncf %26 : vector<128x256xf32> to vector<128x256xbf16>
    %cst_19 = arith.constant dense<0.000000e+00> : vector<128x128xf32>
    %31 = tpu.matmul %30, %27, %cst_19 {dimension_numbers = #tpu.dot_dimension_numbers<[1], [0], [0], [1], [0, 0, 1, 1], [], []>} : vector<128x256xbf16>, vector<256x128xbf16>, vector<128x128xf32> -> vector<128x128xf32>
    %cst_20 = arith.constant dense<0.000000e+00> : vector<128xf32>
    %32 = vector.multi_reduction <add>, %31, %cst_20 [0] : vector<128x128xf32> to vector<128xf32>
    %33 = vector.shape_cast %32 : vector<128xf32> to vector<1x128xf32>
    %cst_21 = arith.constant 7.812500e-03 : f32
    %34 = vector.broadcast %cst_21 : f32 to vector<1x128xf32>
    %35 = arith.mulf %33, %34 : vector<1x128xf32>
    %36 = vector.broadcast %35 : vector<1x128xf32> to vector<128x128xf32>
    %37 = arith.subf %31, %36 : vector<128x128xf32>
    %38 = arith.mulf %37, %37 : vector<128x128xf32>
    %cst_22 = arith.constant dense<0.000000e+00> : vector<128xf32>
    %39 = vector.multi_reduction <add>, %38, %cst_22 [0] : vector<128x128xf32> to vector<128xf32>
    %40 = vector.shape_cast %39 : vector<128xf32> to vector<1x128xf32>
    %cst_23 = arith.constant 7.812500e-03 : f32
    %41 = vector.broadcast %cst_23 : f32 to vector<1x128xf32>
    %42 = arith.mulf %40, %41 : vector<1x128xf32>
    %cst_24 = arith.constant 9.99999974E-6 : f32
    %43 = vector.broadcast %cst_24 : f32 to vector<1x128xf32>
    %44 = arith.addf %42, %43 : vector<1x128xf32>
    %45 = math.rsqrt %44 : vector<1x128xf32>
    %46 = vector.broadcast %45 : vector<1x128xf32> to vector<128x128xf32>
    %47 = arith.mulf %37, %46 : vector<128x128xf32>
    %48 = vector.broadcast %28 : vector<1x128xf32> to vector<128x128xf32>
    %49 = arith.mulf %47, %48 : vector<128x128xf32>
    %50 = vector.broadcast %29 : vector<1x128xf32> to vector<128x128xf32>
    %51 = arith.addf %49, %50 : vector<128x128xf32>
    %cst_25 = arith.constant 0.000000e+00 : f32
    %52 = vector.broadcast %cst_25 : f32 to vector<128x128xf32>
    %53 = arith.maximumf %51, %52 : vector<128x128xf32>
    %c0_26 = arith.constant 0 : index
    %c0_27 = arith.constant 0 : index
    %54 = vector.load %arg9[%c0_26, %c0_27] : memref<128x256xbf16, #tpu.memory_space<vmem>>, vector<128x256xbf16>
    %c0_28 = arith.constant 0 : index
    %c0_29 = arith.constant 0 : index
    %55 = vector.load %arg10[%c0_28, %c0_29] : memref<1x256xf32, #tpu.memory_space<vmem>>, vector<1x256xf32>
    %c0_30 = arith.constant 0 : index
    %c0_31 = arith.constant 0 : index
    %56 = vector.load %arg11[%c0_30, %c0_31] : memref<1x256xf32, #tpu.memory_space<vmem>>, vector<1x256xf32>
    %57 = arith.truncf %53 : vector<128x128xf32> to vector<128x128xbf16>
    %cst_32 = arith.constant dense<0.000000e+00> : vector<128x256xf32>
    %58 = tpu.matmul %57, %54, %cst_32 {dimension_numbers = #tpu.dot_dimension_numbers<[1], [0], [0], [1], [0, 0, 1, 1], [], []>} : vector<128x128xbf16>, vector<128x256xbf16>, vector<128x256xf32> -> vector<128x256xf32>
    %cst_33 = arith.constant dense<0.000000e+00> : vector<256xf32>
    %59 = vector.multi_reduction <add>, %58, %cst_33 [0] : vector<128x256xf32> to vector<256xf32>
    %60 = vector.shape_cast %59 : vector<256xf32> to vector<1x256xf32>
    %cst_34 = arith.constant 7.812500e-03 : f32
    %61 = vector.broadcast %cst_34 : f32 to vector<1x256xf32>
    %62 = arith.mulf %60, %61 : vector<1x256xf32>
    %63 = vector.broadcast %62 : vector<1x256xf32> to vector<128x256xf32>
    %64 = arith.subf %58, %63 : vector<128x256xf32>
    %65 = arith.mulf %64, %64 : vector<128x256xf32>
    %cst_35 = arith.constant dense<0.000000e+00> : vector<256xf32>
    %66 = vector.multi_reduction <add>, %65, %cst_35 [0] : vector<128x256xf32> to vector<256xf32>
    %67 = vector.shape_cast %66 : vector<256xf32> to vector<1x256xf32>
    %cst_36 = arith.constant 7.812500e-03 : f32
    %68 = vector.broadcast %cst_36 : f32 to vector<1x256xf32>
    %69 = arith.mulf %67, %68 : vector<1x256xf32>
    %cst_37 = arith.constant 9.99999974E-6 : f32
    %70 = vector.broadcast %cst_37 : f32 to vector<1x256xf32>
    %71 = arith.addf %69, %70 : vector<1x256xf32>
    %72 = math.rsqrt %71 : vector<1x256xf32>
    %73 = vector.broadcast %72 : vector<1x256xf32> to vector<128x256xf32>
    %74 = arith.mulf %64, %73 : vector<128x256xf32>
    %75 = vector.broadcast %55 : vector<1x256xf32> to vector<128x256xf32>
    %76 = arith.mulf %74, %75 : vector<128x256xf32>
    %77 = vector.broadcast %56 : vector<1x256xf32> to vector<128x256xf32>
    %78 = arith.addf %76, %77 : vector<128x256xf32>
    %79 = vector.extract_strided_slice %78 {offsets = [0, 0], sizes = [128, 128], strides = [1, 1]} : vector<128x256xf32> to vector<128x128xf32>
    %80 = vector.extract_strided_slice %78 {offsets = [0, 128], sizes = [128, 128], strides = [1, 1]} : vector<128x256xf32> to vector<128x128xf32>
    %c0_38 = arith.constant 0 : index
    %c0_39 = arith.constant 0 : index
    %81 = vector.load %arg2[%c0_38, %c0_39] : memref<128x128xf32, #tpu.memory_space<vmem>>, vector<128x128xf32>
    %cst_40 = arith.constant 5.000000e-01 : f32
    %82 = vector.broadcast %cst_40 : f32 to vector<128x128xf32>
    %83 = arith.mulf %82, %80 : vector<128x128xf32>
    %84 = math.exp %83 : vector<128x128xf32>
    %85 = arith.mulf %81, %84 : vector<128x128xf32>
    %86 = arith.addf %79, %85 : vector<128x128xf32>
    %c0_41 = arith.constant 0 : index
    %c0_42 = arith.constant 0 : index
    %87 = vector.load %arg22[%c0_41, %c0_42] : memref<128x128xf32, #tpu.memory_space<vmem>>, vector<128x128xf32>
    tpu.vector_store %arg22[%c0_41, %c0_42], %79 {strides = array<i32>} : memref<128x128xf32, #tpu.memory_space<vmem>>, vector<128x128xf32>,
    %c0_43 = arith.constant 0 : index
    %c0_44 = arith.constant 0 : index
    %88 = vector.load %arg23[%c0_43, %c0_44] : memref<128x128xf32, #tpu.memory_space<vmem>>, vector<128x128xf32>
    tpu.vector_store %arg23[%c0_43, %c0_44], %80 {strides = array<i32>} : memref<128x128xf32, #tpu.memory_space<vmem>>, vector<128x128xf32>,
    %c0_45 = arith.constant 0 : index
    %c0_46 = arith.constant 0 : index
    %89 = vector.load %arg24[%c0_45, %c0_46] : memref<128x128xf32, #tpu.memory_space<vmem>>, vector<128x128xf32>
    tpu.vector_store %arg24[%c0_45, %c0_46], %86 {strides = array<i32>} : memref<128x128xf32, #tpu.memory_space<vmem>>, vector<128x128xf32>,
    %c0_47 = arith.constant 0 : index
    %c0_48 = arith.constant 0 : index
    %90 = vector.load %arg12[%c0_47, %c0_48] : memref<128x128xbf16, #tpu.memory_space<vmem>>, vector<128x128xbf16>
    %c0_49 = arith.constant 0 : index
    %c0_50 = arith.constant 0 : index
    %91 = vector.load %arg13[%c0_49, %c0_50] : memref<1x128xf32, #tpu.memory_space<vmem>>, vector<1x128xf32>
    %c0_51 = arith.constant 0 : index
    %c0_52 = arith.constant 0 : index
    %92 = vector.load %arg14[%c0_51, %c0_52] : memref<1x128xf32, #tpu.memory_space<vmem>>, vector<1x128xf32>
    %93 = arith.truncf %86 : vector<128x128xf32> to vector<128x128xbf16>
    %cst_53 = arith.constant dense<0.000000e+00> : vector<128x128xf32>
    %94 = tpu.matmul %93, %90, %cst_53 {dimension_numbers = #tpu.dot_dimension_numbers<[1], [0], [0], [1], [0, 0, 1, 1], [], []>} : vector<128x128xbf16>, vector<128x128xbf16>, vector<128x128xf32> -> vector<128x128xf32>
    %cst_54 = arith.constant dense<0.000000e+00> : vector<128xf32>
    %95 = vector.multi_reduction <add>, %94, %cst_54 [0] : vector<128x128xf32> to vector<128xf32>
    %96 = vector.shape_cast %95 : vector<128xf32> to vector<1x128xf32>
    %cst_55 = arith.constant 7.812500e-03 : f32
    %97 = vector.broadcast %cst_55 : f32 to vector<1x128xf32>
    %98 = arith.mulf %96, %97 : vector<1x128xf32>
    %99 = vector.broadcast %98 : vector<1x128xf32> to vector<128x128xf32>
    %100 = arith.subf %94, %99 : vector<128x128xf32>
    %101 = arith.mulf %100, %100 : vector<128x128xf32>
    %cst_56 = arith.constant dense<0.000000e+00> : vector<128xf32>
    %102 = vector.multi_reduction <add>, %101, %cst_56 [0] : vector<128x128xf32> to vector<128xf32>
    %103 = vector.shape_cast %102 : vector<128xf32> to vector<1x128xf32>
    %cst_57 = arith.constant 7.812500e-03 : f32
    %104 = vector.broadcast %cst_57 : f32 to vector<1x128xf32>
    %105 = arith.mulf %103, %104 : vector<1x128xf32>
    %cst_58 = arith.constant 9.99999974E-6 : f32
    %106 = vector.broadcast %cst_58 : f32 to vector<1x128xf32>
    %107 = arith.addf %105, %106 : vector<1x128xf32>
    %108 = math.rsqrt %107 : vector<1x128xf32>
    %109 = vector.broadcast %108 : vector<1x128xf32> to vector<128x128xf32>
    %110 = arith.mulf %100, %109 : vector<128x128xf32>
    %111 = vector.broadcast %91 : vector<1x128xf32> to vector<128x128xf32>
    %112 = arith.mulf %110, %111 : vector<128x128xf32>
    %113 = vector.broadcast %92 : vector<1x128xf32> to vector<128x128xf32>
    %114 = arith.addf %112, %113 : vector<128x128xf32>
    %cst_59 = arith.constant 0.000000e+00 : f32
    %115 = vector.broadcast %cst_59 : f32 to vector<128x128xf32>
    %116 = arith.maximumf %114, %115 : vector<128x128xf32>
    %c0_60 = arith.constant 0 : index
    %c0_61 = arith.constant 0 : index
    %117 = vector.load %arg15[%c0_60, %c0_61] : memref<128x256xbf16, #tpu.memory_space<vmem>>, vector<128x256xbf16>
    %c0_62 = arith.constant 0 : index
    %c0_63 = arith.constant 0 : index
    %118 = vector.load %arg16[%c0_62, %c0_63] : memref<1x256xf32, #tpu.memory_space<vmem>>, vector<1x256xf32>
    %c0_64 = arith.constant 0 : index
    %c0_65 = arith.constant 0 : index
    %119 = vector.load %arg17[%c0_64, %c0_65] : memref<1x256xf32, #tpu.memory_space<vmem>>, vector<1x256xf32>
    %120 = arith.truncf %116 : vector<128x128xf32> to vector<128x128xbf16>
    %cst_66 = arith.constant dense<0.000000e+00> : vector<128x256xf32>
    %121 = tpu.matmul %120, %117, %cst_66 {dimension_numbers = #tpu.dot_dimension_numbers<[1], [0], [0], [1], [0, 0, 1, 1], [], []>} : vector<128x128xbf16>, vector<128x256xbf16>, vector<128x256xf32> -> vector<128x256xf32>
    %cst_67 = arith.constant dense<0.000000e+00> : vector<256xf32>
    %122 = vector.multi_reduction <add>, %121, %cst_67 [0] : vector<128x256xf32> to vector<256xf32>
    %123 = vector.shape_cast %122 : vector<256xf32> to vector<1x256xf32>
    %cst_68 = arith.constant 7.812500e-03 : f32
    %124 = vector.broadcast %cst_68 : f32 to vector<1x256xf32>
    %125 = arith.mulf %123, %124 : vector<1x256xf32>
    %126 = vector.broadcast %125 : vector<1x256xf32> to vector<128x256xf32>
    %127 = arith.subf %121, %126 : vector<128x256xf32>
    %128 = arith.mulf %127, %127 : vector<128x256xf32>
    %cst_69 = arith.constant dense<0.000000e+00> : vector<256xf32>
    %129 = vector.multi_reduction <add>, %128, %cst_69 [0] : vector<128x256xf32> to vector<256xf32>
    %130 = vector.shape_cast %129 : vector<256xf32> to vector<1x256xf32>
    %cst_70 = arith.constant 7.812500e-03 : f32
    %131 = vector.broadcast %cst_70 : f32 to vector<1x256xf32>
    %132 = arith.mulf %130, %131 : vector<1x256xf32>
    %cst_71 = arith.constant 9.99999974E-6 : f32
    %133 = vector.broadcast %cst_71 : f32 to vector<1x256xf32>
    %134 = arith.addf %132, %133 : vector<1x256xf32>
    %135 = math.rsqrt %134 : vector<1x256xf32>
    %136 = vector.broadcast %135 : vector<1x256xf32> to vector<128x256xf32>
    %137 = arith.mulf %127, %136 : vector<128x256xf32>
    %138 = vector.broadcast %118 : vector<1x256xf32> to vector<128x256xf32>
    %139 = arith.mulf %137, %138 : vector<128x256xf32>
    %140 = vector.broadcast %119 : vector<1x256xf32> to vector<128x256xf32>
    %141 = arith.addf %139, %140 : vector<128x256xf32>
    %cst_72 = arith.constant 0.000000e+00 : f32
    %142 = vector.broadcast %cst_72 : f32 to vector<128x256xf32>
    %143 = arith.maximumf %141, %142 : vector<128x256xf32>
    %c0_73 = arith.constant 0 : index
    %c0_74 = arith.constant 0 : index
    %144 = vector.load %arg18[%c0_73, %c0_74] : memref<256x512xbf16, #tpu.memory_space<vmem>>, vector<256x512xbf16>
    %c0_75 = arith.constant 0 : index
    %c0_76 = arith.constant 0 : index
    %145 = vector.load %arg19[%c0_75, %c0_76] : memref<1x512xf32, #tpu.memory_space<vmem>>, vector<1x512xf32>
    %c0_77 = arith.constant 0 : index
    %c0_78 = arith.constant 0 : index
    %146 = vector.load %arg20[%c0_77, %c0_78] : memref<1x512xf32, #tpu.memory_space<vmem>>, vector<1x512xf32>
    %147 = arith.truncf %143 : vector<128x256xf32> to vector<128x256xbf16>
    %cst_79 = arith.constant dense<0.000000e+00> : vector<128x512xf32>
    %148 = tpu.matmul %147, %144, %cst_79 {dimension_numbers = #tpu.dot_dimension_numbers<[1], [0], [0], [1], [0, 0, 1, 1], [], []>} : vector<128x256xbf16>, vector<256x512xbf16>, vector<128x512xf32> -> vector<128x512xf32>
    %cst_80 = arith.constant dense<0.000000e+00> : vector<512xf32>
    %149 = vector.multi_reduction <add>, %148, %cst_80 [0] : vector<128x512xf32> to vector<512xf32>
    %150 = vector.shape_cast %149 : vector<512xf32> to vector<1x512xf32>
    %cst_81 = arith.constant 7.812500e-03 : f32
    %151 = vector.broadcast %cst_81 : f32 to vector<1x512xf32>
    %152 = arith.mulf %150, %151 : vector<1x512xf32>
    %153 = vector.broadcast %152 : vector<1x512xf32> to vector<128x512xf32>
    %154 = arith.subf %148, %153 : vector<128x512xf32>
    %155 = arith.mulf %154, %154 : vector<128x512xf32>
    %cst_82 = arith.constant dense<0.000000e+00> : vector<512xf32>
    %156 = vector.multi_reduction <add>, %155, %cst_82 [0] : vector<128x512xf32> to vector<512xf32>
    %157 = vector.shape_cast %156 : vector<512xf32> to vector<1x512xf32>
    %cst_83 = arith.constant 7.812500e-03 : f32
    %158 = vector.broadcast %cst_83 : f32 to vector<1x512xf32>
    %159 = arith.mulf %157, %158 : vector<1x512xf32>
    %cst_84 = arith.constant 9.99999974E-6 : f32
    %160 = vector.broadcast %cst_84 : f32 to vector<1x512xf32>
    %161 = arith.addf %159, %160 : vector<1x512xf32>
    %162 = math.rsqrt %161 : vector<1x512xf32>
    %163 = vector.broadcast %162 : vector<1x512xf32> to vector<128x512xf32>
    %164 = arith.mulf %154, %163 : vector<128x512xf32>
    %165 = vector.broadcast %145 : vector<1x512xf32> to vector<128x512xf32>
    %166 = arith.mulf %164, %165 : vector<128x512xf32>
    %167 = vector.broadcast %146 : vector<1x512xf32> to vector<128x512xf32>
    %168 = arith.addf %166, %167 : vector<128x512xf32>
    %169 = arith.negf %168 : vector<128x512xf32>
    %170 = math.exp %169 : vector<128x512xf32>
    %cst_85 = arith.constant 1.000000e+00 : f32
    %171 = vector.broadcast %cst_85 : f32 to vector<128x512xf32>
    %172 = arith.addf %171, %170 : vector<128x512xf32>
    %173 = arith.divf %171, %172 : vector<128x512xf32>
    %c0_86 = arith.constant 0 : index
    %c0_87 = arith.constant 0 : index
    %174 = vector.load %arg21[%c0_86, %c0_87] : memref<128x512xf32, #tpu.memory_space<vmem>>, vector<128x512xf32>
    tpu.vector_store %arg21[%c0_86, %c0_87], %173 {strides = array<i32>} : memref<128x512xf32, #tpu.memory_space<vmem>>, vector<128x512xf32>,
    return
  }
  func.func @transform_0(%arg0: i32) -> (i32, i32) {
    %c0_i32 = arith.constant 0 : i32
    %c0_i32_0 = arith.constant 0 : i32
    return %arg0, %c0_i32 : i32, i32
  }
  func.func @transform_1(%arg0: i32) -> (i32, i32) {
    %c0_i32 = arith.constant 0 : i32
    %c0_i32_0 = arith.constant 0 : i32
    return %arg0, %c0_i32 : i32, i32
  }
  func.func @transform_2(%arg0: i32) -> (i32, i32) {
    %c0_i32 = arith.constant 0 : i32
    %c0_i32_0 = arith.constant 0 : i32
    %c0_i32_1 = arith.constant 0 : i32
    return %c0_i32, %c0_i32_0 : i32, i32
  }
  func.func @transform_3(%arg0: i32) -> (i32, i32) {
    %c0_i32 = arith.constant 0 : i32
    %c0_i32_0 = arith.constant 0 : i32
    %c0_i32_1 = arith.constant 0 : i32
    return %c0_i32, %c0_i32_0 : i32, i32
  }
  func.func @transform_4(%arg0: i32) -> (i32, i32) {
    %c0_i32 = arith.constant 0 : i32
    %c0_i32_0 = arith.constant 0 : i32
    %c0_i32_1 = arith.constant 0 : i32
    return %c0_i32, %c0_i32_0 : i32, i32
  }
  func.func @transform_5(%arg0: i32) -> (i32, i32) {
    %c0_i32 = arith.constant 0 : i32
    %c0_i32_0 = arith.constant 0 : i32
    %c0_i32_1 = arith.constant 0 : i32
    return %c0_i32, %c0_i32_0 : i32, i32
  }
  func.func @transform_6(%arg0: i32) -> (i32, i32) {
    %c0_i32 = arith.constant 0 : i32
    %c0_i32_0 = arith.constant 0 : i32
    %c0_i32_1 = arith.constant 0 : i32
    return %c0_i32, %c0_i32_0 : i32, i32
  }
  func.func @transform_7(%arg0: i32) -> (i32, i32) {
    %c0_i32 = arith.constant 0 : i32
    %c0_i32_0 = arith.constant 0 : i32
    %c0_i32_1 = arith.constant 0 : i32
    return %c0_i32, %c0_i32_0 : i32, i32
  }
  func.func @transform_8(%arg0: i32) -> (i32, i32) {
    %c0_i32 = arith.constant 0 : i32
    %c0_i32_0 = arith.constant 0 : i32
    %c0_i32_1 = arith.constant 0 : i32
    return %c0_i32, %c0_i32_0 : i32, i32
  }
  func.func @transform_9(%arg0: i32) -> (i32, i32) {
    %c0_i32 = arith.constant 0 : i32
    %c0_i32_0 = arith.constant 0 : i32
    %c0_i32_1 = arith.constant 0 : i32
    return %c0_i32, %c0_i32_0 : i32, i32
  }
  func.func @transform_10(%arg0: i32) -> (i32, i32) {
    %c0_i32 = arith.constant 0 : i32
    %c0_i32_0 = arith.constant 0 : i32
    %c0_i32_1 = arith.constant 0 : i32
    return %c0_i32, %c0_i32_0 : i32, i32
  }
  func.func @transform_11(%arg0: i32) -> (i32, i32) {
    %c0_i32 = arith.constant 0 : i32
    %c0_i32_0 = arith.constant 0 : i32
    %c0_i32_1 = arith.constant 0 : i32
    return %c0_i32, %c0_i32_0 : i32, i32
  }
  func.func @transform_12(%arg0: i32) -> (i32, i32) {
    %c0_i32 = arith.constant 0 : i32
    %c0_i32_0 = arith.constant 0 : i32
    %c0_i32_1 = arith.constant 0 : i32
    return %c0_i32, %c0_i32_0 : i32, i32
  }
  func.func @transform_13(%arg0: i32) -> (i32, i32) {
    %c0_i32 = arith.constant 0 : i32
    %c0_i32_0 = arith.constant 0 : i32
    %c0_i32_1 = arith.constant 0 : i32
    return %c0_i32, %c0_i32_0 : i32, i32
  }
  func.func @transform_14(%arg0: i32) -> (i32, i32) {
    %c0_i32 = arith.constant 0 : i32
    %c0_i32_0 = arith.constant 0 : i32
    %c0_i32_1 = arith.constant 0 : i32
    return %c0_i32, %c0_i32_0 : i32, i32
  }
  func.func @transform_15(%arg0: i32) -> (i32, i32) {
    %c0_i32 = arith.constant 0 : i32
    %c0_i32_0 = arith.constant 0 : i32
    %c0_i32_1 = arith.constant 0 : i32
    return %c0_i32, %c0_i32_0 : i32, i32
  }
  func.func @transform_16(%arg0: i32) -> (i32, i32) {
    %c0_i32 = arith.constant 0 : i32
    %c0_i32_0 = arith.constant 0 : i32
    %c0_i32_1 = arith.constant 0 : i32
    return %c0_i32, %c0_i32_0 : i32, i32
  }
  func.func @transform_17(%arg0: i32) -> (i32, i32) {
    %c0_i32 = arith.constant 0 : i32
    %c0_i32_0 = arith.constant 0 : i32
    %c0_i32_1 = arith.constant 0 : i32
    return %c0_i32, %c0_i32_0 : i32, i32
  }
  func.func @transform_18(%arg0: i32) -> (i32, i32) {
    %c0_i32 = arith.constant 0 : i32
    %c0_i32_0 = arith.constant 0 : i32
    %c0_i32_1 = arith.constant 0 : i32
    return %c0_i32, %c0_i32_0 : i32, i32
  }
  func.func @transform_19(%arg0: i32) -> (i32, i32) {
    %c0_i32 = arith.constant 0 : i32
    %c0_i32_0 = arith.constant 0 : i32
    %c0_i32_1 = arith.constant 0 : i32
    return %c0_i32, %c0_i32_0 : i32, i32
  }
  func.func @transform_20(%arg0: i32) -> (i32, i32) {
    %c0_i32 = arith.constant 0 : i32
    %c0_i32_0 = arith.constant 0 : i32
    return %arg0, %c0_i32 : i32, i32
  }
  func.func @transform_21(%arg0: i32) -> (i32, i32) {
    %c0_i32 = arith.constant 0 : i32
    %c0_i32_0 = arith.constant 0 : i32
    return %arg0, %c0_i32 : i32, i32
  }
  func.func @transform_22(%arg0: i32) -> (i32, i32) {
    %c0_i32 = arith.constant 0 : i32
    %c0_i32_0 = arith.constant 0 : i32
    return %arg0, %c0_i32 : i32, i32
  }
  func.func @transform_23(%arg0: i32) -> (i32, i32) {
    %c0_i32 = arith.constant 0 : i32
    %c0_i32_0 = arith.constant 0 : i32
    return %arg0, %c0_i32 : i32, i32
  }
}

</mosaic_0001>

<llo_original>
// kernel: vae_forward.1
$region0: #{vae_forward.1}
  #allocation0 [shape = 'u32[]', space=smem, size = 0x4, offset = 0x4, fixed_abs, tag = 'smem constant byte address 0x4 - core index']
  #allocation1 [shape = 'u32[144,128]{1,0:T(1,128)}', space=vmem, size = 0x12000, scoped, tag = 'internal scratch']
  %s0 = inlined_call_operand.hbm [shape: bf16[512,512], index: 0, kind: input, shape index: {}]
  %s1 = inlined_call_operand.hbm [shape: f32[512,128], index: 1, kind: input, shape index: {}]
  %s2 = inlined_call_operand.hbm [shape: bf16[512,256], index: 2, kind: input, shape index: {}]
  %s3 = inlined_call_operand.vmem [shape: f32[1,256], index: 3, kind: input, shape index: {}]
  %s4 = inlined_call_operand.vmem [shape: f32[1,256], index: 4, kind: input, shape index: {}]
  %s5 = inlined_call_operand.hbm [shape: bf16[256,128], index: 5, kind: input, shape index: {}]
  %s6 = inlined_call_operand.vmem [shape: f32[1,128], index: 6, kind: input, shape index: {}]
  %s7 = inlined_call_operand.vmem [shape: f32[1,128], index: 7, kind: input, shape index: {}]
  %s8 = inlined_call_operand.hbm [shape: bf16[128,256], index: 8, kind: input, shape index: {}]
  %s9 = inlined_call_operand.vmem [shape: f32[1,256], index: 9, kind: input, shape index: {}]
  %s10 = inlined_call_operand.vmem [shape: f32[1,256], index: 10, kind: input, shape index: {}]
  %s11 = inlined_call_operand.hbm [shape: bf16[128,128], index: 11, kind: input, shape index: {}]
  %s12 = inlined_call_operand.vmem [shape: f32[1,128], index: 12, kind: input, shape index: {}]
  %s13 = inlined_call_operand.vmem [shape: f32[1,128], index: 13, kind: input, shape index: {}]
  %s14 = inlined_call_operand.hbm [shape: bf16[128,256], index: 14, kind: input, shape index: {}]
  %s15 = inlined_call_operand.vmem [shape: f32[1,256], index: 15, kind: input, shape index: {}]
  %s16 = inlined_call_operand.hbm [shape: f32[1,256], index: 16, kind: input, shape index: {}]
  %s17 = inlined_call_operand.hbm [shape: bf16[256,512], index: 17, kind: input, shape index: {}]
  %s18 = inlined_call_operand.hbm [shape: f32[1,512], index: 18, kind: input, shape index: {}]
  %s19 = inlined_call_operand.hbm [shape: f32[1,512], index: 19, kind: input, shape index: {}]
  %s20 = inlined_call_operand.hbm [shape: f32[512,512], index: 20, kind: output, shape index: {0}]
  %s21 = inlined_call_operand.hbm [shape: f32[512,128], index: 21, kind: output, shape index: {1}]
  %s22 = inlined_call_operand.hbm [shape: f32[512,128], index: 22, kind: output, shape index: {2}]
  %s23 = inlined_call_operand.hbm [shape: f32[512,128], index: 23, kind: output, shape index: {3}]
  %24 = xla_tuple %s20, %s21, %s22, %s23
  %s25 = sld [smem:[#allocation0]]
  $region181: #{vae_forward.1} parent=0
    _
  %s27 = ssub.s32 1, %s25
  %s28 = scalar_select 0, %s27, %s25
  $region1: #{vae_forward.1} parent=0
    #allocation2 [shape = 'u8[262144]{0}', space=vmem, size = 0x40000, scoped, tag = 'input window, operand 0']
    #allocation3 [shape = 's32[2]{0}', space=sflag, size = 0x8, scoped, tag = 'scoped memory for vae_forward.1']
    #allocation4 [shape = 's32[2]{0}', space=sflag, size = 0x8, scoped, tag = 'scoped memory for vae_forward.1']
    #allocation5 [shape = 'u8[131072]{0}', space=vmem, size = 0x20000, scoped, tag = 'input window, operand 1']
    #allocation6 [shape = 's32[2]{0}', space=sflag, size = 0x8, scoped, tag = 'scoped memory for vae_forward.1']
    #allocation7 [shape = 'u8[262144]{0}', space=vmem, size = 0x40000, scoped, tag = 'input window, operand 2, single buffered']
    #allocation8 [shape = 'u8[65536]{0}', space=vmem, size = 0x10000, scoped, tag = 'input window, operand 5, single buffered']
    #allocation9 [shape = 's32[1]{0}', space=sflag, size = 0x4, scoped, tag = 'scoped memory for vae_forward.1']
    #allocation10 [shape = 'u8[65536]{0}', space=vmem, size = 0x10000, scoped, tag = 'input window, operand 8, single buffered']
    #allocation11 [shape = 'u8[32768]{0}', space=vmem, size = 0x8000, scoped, tag = 'input window, operand 11, single buffered']
    #allocation12 [shape = 's32[1]{0}', space=sflag, size = 0x4, scoped, tag = 'scoped memory for vae_forward.1']
    #allocation13 [shape = 'u8[65536]{0}', space=vmem, size = 0x10000, scoped, tag = 'input window, operand 14, single buffered']
    #allocation14 [shape = 'u8[1024]{0}', space=vmem, size = 0x400, scoped, tag = 'input window, operand 16, single buffered']
    #allocation15 [shape = 's32[1]{0}', space=sflag, size = 0x4, scoped, tag = 'scoped memory for vae_forward.1']
    #allocation16 [shape = 'u8[262144]{0}', space=vmem, size = 0x40000, scoped, tag = 'input window, operand 17, single buffered']
    #allocation17 [shape = 'u8[2048]{0}', space=vmem, size = 0x800, scoped, tag = 'input window, operand 18, single buffered']
    #allocation18 [shape = 's32[1]{0}', space=sflag, size = 0x4, scoped, tag = 'scoped memory for vae_forward.1']
    #allocation19 [shape = 'u8[2048]{0}', space=vmem, size = 0x800, scoped, tag = 'input window, operand 19, single buffered']
    #allocation20 [shape = 'u8[524288]{0}', space=vmem, size = 0x80000, scoped, tag = 'output window, operand 0']
    #allocation21 [shape = 'u8[131072]{0}', space=vmem, size = 0x20000, scoped, tag = 'output window, operand 1']
    #allocation22 [shape = 's32[2]{0}', space=sflag, size = 0x8, scoped, tag = 'scoped memory for vae_forward.1']
    #allocation23 [shape = 'u8[131072]{0}', space=vmem, size = 0x20000, scoped, tag = 'output window, operand 2']
    #allocation24 [shape = 'u8[131072]{0}', space=vmem, size = 0x20000, scoped, tag = 'output window, operand 3']
    #allocation25 [shape = 's32[2]{0}', space=sflag, size = 0x8, scoped, tag = 'scoped memory for vae_forward.1']
    %29 = vsyncpa [#allocation3], 0
    %s30 = scalar_lea.sflag [#allocation3], 1
    %31 = vsyncpa %s30, 0
    %32 = vsyncpa [#allocation6], 0
    %s33 = scalar_lea.sflag [#allocation6], 1
    %34 = vsyncpa %s33, 0
    %35 = vsyncpa [#allocation9], 0
    %36 = vsyncpa [#allocation12], 0
    %37 = vsyncpa [#allocation15], 0
    %38 = vsyncpa [#allocation18], 0
    %39 = vsyncpa [#allocation4], 0
    %s40 = scalar_lea.sflag [#allocation4], 1
    %41 = vsyncpa %s40, 0
    %42 = vsyncpa [#allocation22], 0
    %s43 = scalar_lea.sflag [#allocation22], 1
    %44 = vsyncpa %s43, 0
    %45 = vsyncpa [#allocation25], 0
    %s46 = scalar_lea.sflag [#allocation25], 1
    %47 = vsyncpa %s46, 0
    loop: start=0, step=1, limit=6
    $region2: #{vae_forward.1} parent=1 // loop_pre_header
      _
    $region3: #{vae_forward.1} parent=1 // loop_header
      %s49 = sphi 0, %s53
      %p50 = scmp.ge.s32.totalorder %s49, 6
      %s59 = sphi 0, %s61
      %s62 = sphi 0, %s59
      %s63 = sphi 0, %s62
      %s79 = sphi 0, %s63
      %s85 = sphi 0, %s87
      %s88 = sphi 0, %s85
      %s89 = sphi 0, %s88
      %s105 = sphi 0, %s89
      %s109 = sphi 0, %s109
      %s111 = sphi 0, %s109
      %s112 = sphi 0, %s111
      %s126 = sphi 0, %s112
      %s130 = sphi 0, %s130
      %s132 = sphi 0, %s130
      %s133 = sphi 0, %s132
      %s147 = sphi 0, %s133
      %s151 = sphi 0, %s151
      %s153 = sphi 0, %s151
      %s154 = sphi 0, %s153
      %s168 = sphi 0, %s154
      %s172 = sphi 0, %s172
      %s174 = sphi 0, %s172
      %s175 = sphi 0, %s174
      %s189 = sphi 0, %s175
      %s193 = sphi 0, %s193
      %s195 = sphi 0, %s193
      %s196 = sphi 0, %s195
      %s210 = sphi 0, %s196
      %s214 = sphi 0, %s214
      %s216 = sphi 0, %s214
      %s217 = sphi 0, %s216
      %s231 = sphi 0, %s217
      %s235 = sphi 0, %s235
      %s237 = sphi 0, %s235
      %s238 = sphi 0, %s237
      %s252 = sphi 0, %s238
      %s256 = sphi 0, %s256
      %s258 = sphi 0, %s256
      %s259 = sphi 0, %s258
      %s273 = sphi 0, %s259
      %s277 = sphi 0, %s277
      %s279 = sphi 0, %s277
      %s280 = sphi 0, %s279
      %s294 = sphi 0, %s280
      %s298 = sphi 0, %s298
      %s300 = sphi 0, %s298
      %s301 = sphi 0, %s300
      %s315 = sphi 0, %s301
      %s319 = sphi 0, %s319
      %s321 = sphi 0, %s319
      %s322 = sphi 0, %s321
      %s336 = sphi 0, %s322
      %s340 = sphi 0, %s340
      %s342 = sphi 0, %s340
      %s343 = sphi 0, %s342
      %s357 = sphi 0, %s343
      %s361 = sphi 0, %s361
      %s363 = sphi 0, %s361
      %s364 = sphi 0, %s363
      %s378 = sphi 0, %s364
      %s382 = sphi 0, %s382
      %s384 = sphi 0, %s382
      %s385 = sphi 0, %s384
      %s399 = sphi 0, %s385
      %s403 = sphi 0, %s403
      %s405 = sphi 0, %s403
      %s406 = sphi 0, %s405
      %s420 = sphi 0, %s406
      %s424 = sphi 0, %s424
      %s426 = sphi 0, %s424
      %s427 = sphi 0, %s426
      %s441 = sphi 0, %s427
      %s445 = sphi 0, %s445
      %s447 = sphi 0, %s445
      %s448 = sphi 0, %s447
      %s462 = sphi 0, %s448
      %s466 = sphi 0, %s466
      %s468 = sphi 0, %s466
      %s469 = sphi 0, %s468
      %s483 = sphi 0, %s469
      %s489 = sphi 0, %s491
      %s492 = sphi 0, %s489
      %s493 = sphi 0, %s492
      %s509 = sphi 0, %s493
      %s515 = sphi 0, %s517
      %s518 = sphi 0, %s515
      %s519 = sphi 0, %s518
      %s535 = sphi 0, %s519
      %s541 = sphi 0, %s543
      %s544 = sphi 0, %s541
      %s545 = sphi 0, %s544
      %s561 = sphi 0, %s545
      %s567 = sphi 0, %s569
      %s570 = sphi 0, %s567
      %s571 = sphi 0, %s570
      %s587 = sphi 0, %s571
    $region4: #{vae_forward.1} parent=1 // loop_header_branch
      %52 = sbr.rel (%p50) target = $region8
    $region5: #{vae_forward.1} parent=1 // loop_body
      %s54 = ssub.s32 %s49, 1
      %s55 = ssub.s32 %s49, 2
      %s56 = sadd.s32 %s49, 1
      %s57 = ssub.s32 %s49, %s56
      %p58 = scmp.eq.s32.totalorder %s57, 0
      %s60 = sadd.s32 %s59, 1
      %s61 = scalar_select %p58, %s59, %s60
      %p64 = pneg %p58
      %p65 = scmp.eq.s32.totalorder %s49, 3
      %p66 = por %p64, %p65
      %p67 = scmp.ne.s32.totalorder %s59, %s62
      %p68 = scmp.eq.s32.totalorder %s49, 0
      %p69 = por %p67, %p68
      %p70 = scmp.ne.s32.totalorder %s59, %s62
      %p71 = scmp.eq.s32.totalorder %s54, 3
      %p72 = por %p70, %p71
      %p73 = scmp.ne.s32.totalorder %s62, %s63
      %p74 = scmp.eq.s32.totalorder %s54, 0
      %p75 = por %p73, %p74
      %p76 = scmp.ne.s32.totalorder %s62, %s63
      %p77 = scmp.eq.s32.totalorder %s55, 3
      %p78 = por %p76, %p77
      %p80 = scmp.ne.s32.totalorder %s63, %s79
      %p81 = scmp.eq.s32.totalorder %s55, 0
      %p82 = por %p80, %p81
      %s83 = ssub.s32 %s49, %s56
      %p84 = scmp.eq.s32.totalorder %s83, 0
      %s86 = sadd.s32 %s85, 1
      %s87 = scalar_select %p84, %s85, %s86
      %p90 = pneg %p84
      %p91 = scmp.eq.s32.totalorder %s49, 3
      %p92 = por %p90, %p91
      %p93 = scmp.ne.s32.totalorder %s85, %s88
      %p94 = scmp.eq.s32.totalorder %s49, 0
      %p95 = por %p93, %p94
      %p96 = scmp.ne.s32.totalorder %s85, %s88
      %p97 = scmp.eq.s32.totalorder %s54, 3
      %p98 = por %p96, %p97
      %p99 = scmp.ne.s32.totalorder %s88, %s89
      %p100 = scmp.eq.s32.totalorder %s54, 0
      %p101 = por %p99, %p100
      %p102 = scmp.ne.s32.totalorder %s88, %s89
      %p103 = scmp.eq.s32.totalorder %s55, 3
      %p104 = por %p102, %p103
      %p106 = scmp.ne.s32.totalorder %s89, %s105
      %p107 = scmp.eq.s32.totalorder %s55, 0
      %p108 = por %p106, %p107
      %s110 = sadd.s32 %s109, 1
      %p113 = scmp.eq.s32.totalorder %s49, 3
      %p114 = scmp.ne.s32.totalorder %s109, %s111
      %p115 = scmp.eq.s32.totalorder %s49, 0
      %p116 = por %p114, %p115
      %p117 = scmp.ne.s32.totalorder %s109, %s111
      %p118 = scmp.eq.s32.totalorder %s54, 3
      %p119 = por %p117, %p118
      %p120 = scmp.ne.s32.totalorder %s111, %s112
      %p121 = scmp.eq.s32.totalorder %s54, 0
      %p122 = por %p120, %p121
      %p123 = scmp.ne.s32.totalorder %s111, %s112
      %p124 = scmp.eq.s32.totalorder %s55, 3
      %p125 = por %p123, %p124
      %p127 = scmp.ne.s32.totalorder %s112, %s126
      %p128 = scmp.eq.s32.totalorder %s55, 0
      %p129 = por %p127, %p128
      %s131 = sadd.s32 %s130, 1
      %p134 = scmp.eq.s32.totalorder %s49, 3
      %p135 = scmp.ne.s32.totalorder %s130, %s132
      %p136 = scmp.eq.s32.totalorder %s49, 0
      %p137 = por %p135, %p136
      %p138 = scmp.ne.s32.totalorder %s130, %s132
      %p139 = scmp.eq.s32.totalorder %s54, 3
      %p140 = por %p138, %p139
      %p141 = scmp.ne.s32.totalorder %s132, %s133
      %p142 = scmp.eq.s32.totalorder %s54, 0
      %p143 = por %p141, %p142
      %p144 = scmp.ne.s32.totalorder %s132, %s133
      %p145 = scmp.eq.s32.totalorder %s55, 3
      %p146 = por %p144, %p145
      %p148 = scmp.ne.s32.totalorder %s133, %s147
      %p149 = scmp.eq.s32.totalorder %s55, 0
      %p150 = por %p148, %p149
      %s152 = sadd.s32 %s151, 1
      %p155 = scmp.eq.s32.totalorder %s49, 3
      %p156 = scmp.ne.s32.totalorder %s151, %s153
      %p157 = scmp.eq.s32.totalorder %s49, 0
      %p158 = por %p156, %p157
      %p159 = scmp.ne.s32.totalorder %s151, %s153
      %p160 = scmp.eq.s32.totalorder %s54, 3
      %p161 = por %p159, %p160
      %p162 = scmp.ne.s32.totalorder %s153, %s154
      %p163 = scmp.eq.s32.totalorder %s54, 0
      %p164 = por %p162, %p163
      %p165 = scmp.ne.s32.totalorder %s153, %s154
      %p166 = scmp.eq.s32.totalorder %s55, 3
      %p167 = por %p165, %p166
      %p169 = scmp.ne.s32.totalorder %s154, %s168
      %p170 = scmp.eq.s32.totalorder %s55, 0
      %p171 = por %p169, %p170
      %s173 = sadd.s32 %s172, 1
      %p176 = scmp.eq.s32.totalorder %s49, 3
      %p177 = scmp.ne.s32.totalorder %s172, %s174
      %p178 = scmp.eq.s32.totalorder %s49, 0
      %p179 = por %p177, %p178
      %p180 = scmp.ne.s32.totalorder %s172, %s174
      %p181 = scmp.eq.s32.totalorder %s54, 3
      %p182 = por %p180, %p181
      %p183 = scmp.ne.s32.totalorder %s174, %s175
      %p184 = scmp.eq.s32.totalorder %s54, 0
      %p185 = por %p183, %p184
      %p186 = scmp.ne.s32.totalorder %s174, %s175
      %p187 = scmp.eq.s32.totalorder %s55, 3
      %p188 = por %p186, %p187
      %p190 = scmp.ne.s32.totalorder %s175, %s189
      %p191 = scmp.eq.s32.totalorder %s55, 0
      %p192 = por %p190, %p191
      %s194 = sadd.s32 %s193, 1
      %p197 = scmp.eq.s32.totalorder %s49, 3
      %p198 = scmp.ne.s32.totalorder %s193, %s195
      %p199 = scmp.eq.s32.totalorder %s49, 0
      %p200 = por %p198, %p199
      %p201 = scmp.ne.s32.totalorder %s193, %s195
      %p202 = scmp.eq.s32.totalorder %s54, 3
      %p203 = por %p201, %p202
      %p204 = scmp.ne.s32.totalorder %s195, %s196
      %p205 = scmp.eq.s32.totalorder %s54, 0
      %p206 = por %p204, %p205
      %p207 = scmp.ne.s32.totalorder %s195, %s196
      %p208 = scmp.eq.s32.totalorder %s55, 3
      %p209 = por %p207, %p208
      %p211 = scmp.ne.s32.totalorder %s196, %s210
      %p212 = scmp.eq.s32.totalorder %s55, 0
      %p213 = por %p211, %p212
      %s215 = sadd.s32 %s214, 1
      %p218 = scmp.eq.s32.totalorder %s49, 3
      %p219 = scmp.ne.s32.totalorder %s214, %s216
      %p220 = scmp.eq.s32.totalorder %s49, 0
      %p221 = por %p219, %p220
      %p222 = scmp.ne.s32.totalorder %s214, %s216
      %p223 = scmp.eq.s32.totalorder %s54, 3
      %p224 = por %p222, %p223
      %p225 = scmp.ne.s32.totalorder %s216, %s217
      %p226 = scmp.eq.s32.totalorder %s54, 0
      %p227 = por %p225, %p226
      %p228 = scmp.ne.s32.totalorder %s216, %s217
      %p229 = scmp.eq.s32.totalorder %s55, 3
      %p230 = por %p228, %p229
      %p232 = scmp.ne.s32.totalorder %s217, %s231
      %p233 = scmp.eq.s32.totalorder %s55, 0
      %p234 = por %p232, %p233
      %s236 = sadd.s32 %s235, 1
      %p239 = scmp.eq.s32.totalorder %s49, 3
      %p240 = scmp.ne.s32.totalorder %s235, %s237
      %p241 = scmp.eq.s32.totalorder %s49, 0
      %p242 = por %p240, %p241
      %p243 = scmp.ne.s32.totalorder %s235, %s237
      %p244 = scmp.eq.s32.totalorder %s54, 3
      %p245 = por %p243, %p244
      %p246 = scmp.ne.s32.totalorder %s237, %s238
      %p247 = scmp.eq.s32.totalorder %s54, 0
      %p248 = por %p246, %p247
      %p249 = scmp.ne.s32.totalorder %s237, %s238
      %p250 = scmp.eq.s32.totalorder %s55, 3
      %p251 = por %p249, %p250
      %p253 = scmp.ne.s32.totalorder %s238, %s252
      %p254 = scmp.eq.s32.totalorder %s55, 0
      %p255 = por %p253, %p254
      %s257 = sadd.s32 %s256, 1
      %p260 = scmp.eq.s32.totalorder %s49, 3
      %p261 = scmp.ne.s32.totalorder %s256, %s258
      %p262 = scmp.eq.s32.totalorder %s49, 0
      %p263 = por %p261, %p262
      %p264 = scmp.ne.s32.totalorder %s256, %s258
      %p265 = scmp.eq.s32.totalorder %s54, 3
      %p266 = por %p264, %p265
      %p267 = scmp.ne.s32.totalorder %s258, %s259
      %p268 = scmp.eq.s32.totalorder %s54, 0
      %p269 = por %p267, %p268
      %p270 = scmp.ne.s32.totalorder %s258, %s259
      %p271 = scmp.eq.s32.totalorder %s55, 3
      %p272 = por %p270, %p271
      %p274 = scmp.ne.s32.totalorder %s259, %s273
      %p275 = scmp.eq.s32.totalorder %s55, 0
      %p276 = por %p274, %p275
      %s278 = sadd.s32 %s277, 1
      %p281 = scmp.eq.s32.totalorder %s49, 3
      %p282 = scmp.ne.s32.totalorder %s277, %s279
      %p283 = scmp.eq.s32.totalorder %s49, 0
      %p284 = por %p282, %p283
      %p285 = scmp.ne.s32.totalorder %s277, %s279
      %p286 = scmp.eq.s32.totalorder %s54, 3
      %p287 = por %p285, %p286
      %p288 = scmp.ne.s32.totalorder %s279, %s280
      %p289 = scmp.eq.s32.totalorder %s54, 0
      %p290 = por %p288, %p289
      %p291 = scmp.ne.s32.totalorder %s279, %s280
      %p292 = scmp.eq.s32.totalorder %s55, 3
      %p293 = por %p291, %p292
      %p295 = scmp.ne.s32.totalorder %s280, %s294
      %p296 = scmp.eq.s32.totalorder %s55, 0
      %p297 = por %p295, %p296
      %s299 = sadd.s32 %s298, 1
      %p302 = scmp.eq.s32.totalorder %s49, 3
      %p303 = scmp.ne.s32.totalorder %s298, %s300
      %p304 = scmp.eq.s32.totalorder %s49, 0
      %p305 = por %p303, %p304
      %p306 = scmp.ne.s32.totalorder %s298, %s300
      %p307 = scmp.eq.s32.totalorder %s54, 3
      %p308 = por %p306, %p307
      %p309 = scmp.ne.s32.totalorder %s300, %s301
      %p310 = scmp.eq.s32.totalorder %s54, 0
      %p311 = por %p309, %p310
      %p312 = scmp.ne.s32.totalorder %s300, %s301
      %p313 = scmp.eq.s32.totalorder %s55, 3
      %p314 = por %p312, %p313
      %p316 = scmp.ne.s32.totalorder %s301, %s315
      %p317 = scmp.eq.s32.totalorder %s55, 0
      %p318 = por %p316, %p317
      %s320 = sadd.s32 %s319, 1
      %p323 = scmp.eq.s32.totalorder %s49, 3
      %p324 = scmp.ne.s32.totalorder %s319, %s321
      %p325 = scmp.eq.s32.totalorder %s49, 0
      %p326 = por %p324, %p325
      %p327 = scmp.ne.s32.totalorder %s319, %s321
      %p328 = scmp.eq.s32.totalorder %s54, 3
      %p329 = por %p327, %p328
      %p330 = scmp.ne.s32.totalorder %s321, %s322
      %p331 = scmp.eq.s32.totalorder %s54, 0
      %p332 = por %p330, %p331
      %p333 = scmp.ne.s32.totalorder %s321, %s322
      %p334 = scmp.eq.s32.totalorder %s55, 3
      %p335 = por %p333, %p334
      %p337 = scmp.ne.s32.totalorder %s322, %s336
      %p338 = scmp.eq.s32.totalorder %s55, 0
      %p339 = por %p337, %p338
      %s341 = sadd.s32 %s340, 1
      %p344 = scmp.eq.s32.totalorder %s49, 3
      %p345 = scmp.ne.s32.totalorder %s340, %s342
      %p346 = scmp.eq.s32.totalorder %s49, 0
      %p347 = por %p345, %p346
      %p348 = scmp.ne.s32.totalorder %s340, %s342
      %p349 = scmp.eq.s32.totalorder %s54, 3
      %p350 = por %p348, %p349
      %p351 = scmp.ne.s32.totalorder %s342, %s343
      %p352 = scmp.eq.s32.totalorder %s54, 0
      %p353 = por %p351, %p352
      %p354 = scmp.ne.s32.totalorder %s342, %s343
      %p355 = scmp.eq.s32.totalorder %s55, 3
      %p356 = por %p354, %p355
      %p358 = scmp.ne.s32.totalorder %s343, %s357
      %p359 = scmp.eq.s32.totalorder %s55, 0
      %p360 = por %p358, %p359
      %s362 = sadd.s32 %s361, 1
      %p365 = scmp.eq.s32.totalorder %s49, 3
      %p366 = scmp.ne.s32.totalorder %s361, %s363
      %p367 = scmp.eq.s32.totalorder %s49, 0
      %p368 = por %p366, %p367
      %p369 = scmp.ne.s32.totalorder %s361, %s363
      %p370 = scmp.eq.s32.totalorder %s54, 3
      %p371 = por %p369, %p370
      %p372 = scmp.ne.s32.totalorder %s363, %s364
      %p373 = scmp.eq.s32.totalorder %s54, 0
      %p374 = por %p372, %p373
      %p375 = scmp.ne.s32.totalorder %s363, %s364
      %p376 = scmp.eq.s32.totalorder %s55, 3
      %p377 = por %p375, %p376
      %p379 = scmp.ne.s32.totalorder %s364, %s378
      %p380 = scmp.eq.s32.totalorder %s55, 0
      %p381 = por %p379, %p380
      %s383 = sadd.s32 %s382, 1
      %p386 = scmp.eq.s32.totalorder %s49, 3
      %p387 = scmp.ne.s32.totalorder %s382, %s384
      %p388 = scmp.eq.s32.totalorder %s49, 0
      %p389 = por %p387, %p388
      %p390 = scmp.ne.s32.totalorder %s382, %s384
      %p391 = scmp.eq.s32.totalorder %s54, 3
      %p392 = por %p390, %p391
      %p393 = scmp.ne.s32.totalorder %s384, %s385
      %p394 = scmp.eq.s32.totalorder %s54, 0
      %p395 = por %p393, %p394
      %p396 = scmp.ne.s32.totalorder %s384, %s385
      %p397 = scmp.eq.s32.totalorder %s55, 3
      %p398 = por %p396, %p397
      %p400 = scmp.ne.s32.totalorder %s385, %s399
      %p401 = scmp.eq.s32.totalorder %s55, 0
      %p402 = por %p400, %p401
      %s404 = sadd.s32 %s403, 1
      %p407 = scmp.eq.s32.totalorder %s49, 3
      %p408 = scmp.ne.s32.totalorder %s403, %s405
      %p409 = scmp.eq.s32.totalorder %s49, 0
      %p410 = por %p408, %p409
      %p411 = scmp.ne.s32.totalorder %s403, %s405
      %p412 = scmp.eq.s32.totalorder %s54, 3
      %p413 = por %p411, %p412
      %p414 = scmp.ne.s32.totalorder %s405, %s406
      %p415 = scmp.eq.s32.totalorder %s54, 0
      %p416 = por %p414, %p415
      %p417 = scmp.ne.s32.totalorder %s405, %s406
      %p418 = scmp.eq.s32.totalorder %s55, 3
      %p419 = por %p417, %p418
      %p421 = scmp.ne.s32.totalorder %s406, %s420
      %p422 = scmp.eq.s32.totalorder %s55, 0
      %p423 = por %p421, %p422
      %s425 = sadd.s32 %s424, 1
      %p428 = scmp.eq.s32.totalorder %s49, 3
      %p429 = scmp.ne.s32.totalorder %s424, %s426
      %p430 = scmp.eq.s32.totalorder %s49, 0
      %p431 = por %p429, %p430
      %p432 = scmp.ne.s32.totalorder %s424, %s426
      %p433 = scmp.eq.s32.totalorder %s54, 3
      %p434 = por %p432, %p433
      %p435 = scmp.ne.s32.totalorder %s426, %s427
      %p436 = scmp.eq.s32.totalorder %s54, 0
      %p437 = por %p435, %p436
      %p438 = scmp.ne.s32.totalorder %s426, %s427
      %p439 = scmp.eq.s32.totalorder %s55, 3
      %p440 = por %p438, %p439
      %p442 = scmp.ne.s32.totalorder %s427, %s441
      %p443 = scmp.eq.s32.totalorder %s55, 0
      %p444 = por %p442, %p443
      %s446 = sadd.s32 %s445, 1
      %p449 = scmp.eq.s32.totalorder %s49, 3
      %p450 = scmp.ne.s32.totalorder %s445, %s447
      %p451 = scmp.eq.s32.totalorder %s49, 0
      %p452 = por %p450, %p451
      %p453 = scmp.ne.s32.totalorder %s445, %s447
      %p454 = scmp.eq.s32.totalorder %s54, 3
      %p455 = por %p453, %p454
      %p456 = scmp.ne.s32.totalorder %s447, %s448
      %p457 = scmp.eq.s32.totalorder %s54, 0
      %p458 = por %p456, %p457
      %p459 = scmp.ne.s32.totalorder %s447, %s448
      %p460 = scmp.eq.s32.totalorder %s55, 3
      %p461 = por %p459, %p460
      %p463 = scmp.ne.s32.totalorder %s448, %s462
      %p464 = scmp.eq.s32.totalorder %s55, 0
      %p465 = por %p463, %p464
      %s467 = sadd.s32 %s466, 1
      %p470 = scmp.eq.s32.totalorder %s49, 3
      %p471 = scmp.ne.s32.totalorder %s466, %s468
      %p472 = scmp.eq.s32.totalorder %s49, 0
      %p473 = por %p471, %p472
      %p474 = scmp.ne.s32.totalorder %s466, %s468
      %p475 = scmp.eq.s32.totalorder %s54, 3
      %p476 = por %p474, %p475
      %p477 = scmp.ne.s32.totalorder %s468, %s469
      %p478 = scmp.eq.s32.totalorder %s54, 0
      %p479 = por %p477, %p478
      %p480 = scmp.ne.s32.totalorder %s468, %s469
      %p481 = scmp.eq.s32.totalorder %s55, 3
      %p482 = por %p480, %p481
      %p484 = scmp.ne.s32.totalorder %s469, %s483
      %p485 = scmp.eq.s32.totalorder %s55, 0
      %p486 = por %p484, %p485
      %s487 = ssub.s32 %s49, %s56
      %p488 = scmp.eq.s32.totalorder %s487, 0
      %s490 = sadd.s32 %s489, 1
      %s491 = scalar_select %p488, %s489, %s490
      %p494 = pneg %p488
      %p495 = scmp.eq.s32.totalorder %s49, 3
      %p496 = por %p494, %p495
      %p497 = scmp.ne.s32.totalorder %s489, %s492
      %p498 = scmp.eq.s32.totalorder %s49, 0
      %p499 = por %p497, %p498
      %p500 = scmp.ne.s32.totalorder %s489, %s492
      %p501 = scmp.eq.s32.totalorder %s54, 3
      %p502 = por %p500, %p501
      %p503 = scmp.ne.s32.totalorder %s492, %s493
      %p504 = scmp.eq.s32.totalorder %s54, 0
      %p505 = por %p503, %p504
      %p506 = scmp.ne.s32.totalorder %s492, %s493
      %p507 = scmp.eq.s32.totalorder %s55, 3
      %p508 = por %p506, %p507
      %p510 = scmp.ne.s32.totalorder %s493, %s509
      %p511 = scmp.eq.s32.totalorder %s55, 0
      %p512 = por %p510, %p511
      %s513 = ssub.s32 %s49, %s56
      %p514 = scmp.eq.s32.totalorder %s513, 0
      %s516 = sadd.s32 %s515, 1
      %s517 = scalar_select %p514, %s515, %s516
      %p520 = pneg %p514
      %p521 = scmp.eq.s32.totalorder %s49, 3
      %p522 = por %p520, %p521
      %p523 = scmp.ne.s32.totalorder %s515, %s518
      %p524 = scmp.eq.s32.totalorder %s49, 0
      %p525 = por %p523, %p524
      %p526 = scmp.ne.s32.totalorder %s515, %s518
      %p527 = scmp.eq.s32.totalorder %s54, 3
      %p528 = por %p526, %p527
      %p529 = scmp.ne.s32.totalorder %s518, %s519
      %p530 = scmp.eq.s32.totalorder %s54, 0
      %p531 = por %p529, %p530
      %p532 = scmp.ne.s32.totalorder %s518, %s519
      %p533 = scmp.eq.s32.totalorder %s55, 3
      %p534 = por %p532, %p533
      %p536 = scmp.ne.s32.totalorder %s519, %s535
      %p537 = scmp.eq.s32.totalorder %s55, 0
      %p538 = por %p536, %p537
      %s539 = ssub.s32 %s49, %s56
      %p540 = scmp.eq.s32.totalorder %s539, 0
      %s542 = sadd.s32 %s541, 1
      %s543 = scalar_select %p540, %s541, %s542
      %p546 = pneg %p540
      %p547 = scmp.eq.s32.totalorder %s49, 3
      %p548 = por %p546, %p547
      %p549 = scmp.ne.s32.totalorder %s541, %s544
      %p550 = scmp.eq.s32.totalorder %s49, 0
      %p551 = por %p549, %p550
      %p552 = scmp.ne.s32.totalorder %s541, %s544
      %p553 = scmp.eq.s32.totalorder %s54, 3
      %p554 = por %p552, %p553
      %p555 = scmp.ne.s32.totalorder %s544, %s545
      %p556 = scmp.eq.s32.totalorder %s54, 0
      %p557 = por %p555, %p556
      %p558 = scmp.ne.s32.totalorder %s544, %s545
      %p559 = scmp.eq.s32.totalorder %s55, 3
      %p560 = por %p558, %p559
      %p562 = scmp.ne.s32.totalorder %s545, %s561
      %p563 = scmp.eq.s32.totalorder %s55, 0
      %p564 = por %p562, %p563
      %s565 = ssub.s32 %s49, %s56
      %p566 = scmp.eq.s32.totalorder %s565, 0
      %s568 = sadd.s32 %s567, 1
      %s569 = scalar_select %p566, %s567, %s568
      %p572 = pneg %p566
      %p573 = scmp.eq.s32.totalorder %s49, 3
      %p574 = por %p572, %p573
      %p575 = scmp.ne.s32.totalorder %s567, %s570
      %p576 = scmp.eq.s32.totalorder %s49, 0
      %p577 = por %p575, %p576
      %p578 = scmp.ne.s32.totalorder %s567, %s570
      %p579 = scmp.eq.s32.totalorder %s54, 3
      %p580 = por %p578, %p579
      %p581 = scmp.ne.s32.totalorder %s570, %s571
      %p582 = scmp.eq.s32.totalorder %s54, 0
      %p583 = por %p581, %p582
      %p584 = scmp.ne.s32.totalorder %s570, %s571
      %p585 = scmp.eq.s32.totalorder %s55, 3
      %p586 = por %p584, %p585
      %p588 = scmp.ne.s32.totalorder %s571, %s587
      %p589 = scmp.eq.s32.totalorder %s55, 0
      %p590 = por %p588, %p589
      %p591 = scmp.le.s32.totalorder 1, %s49
      %p592 = scmp.lt.s32.totalorder %s49, 5
      %p593 = pnand %p591, %p592
      %p594 = pneg %p593
      // Predicated region
      $region9: #{vae_forward.1} parent=5 // pred_check
        _
      $region10: #{vae_forward.1} parent=5 // pred_check_branch
        %596 = sbr.rel (%p593) target = $region12
      $region11: #{vae_forward.1} parent=5 // pred_region
        %s597 = ssub.s32 %s49, 1
        // Predicated region
        $region13: #{vae_forward.1} parent=11 // pred_check
          %p598 = pneg %p122
        $region14: #{vae_forward.1} parent=11 // pred_check_branch
          %600 = sbr.rel (%p598) target = $region16
        $region15: #{vae_forward.1} parent=11 // pred_region
          %s602 = ssub.s32 8192, 8192
          %603 = vsyncadd [#allocation6], %s602
          %s604 = sshll.u32 [#allocation7], 4
          %s605 = int_to_ptr.vmem [resolvable:$true] %s604
          %610 = dma.hbm_to_vmem [thread:$0]  %s2, 8192, %s605, [#allocation6], 128, 128, 8
        $region16: #{vae_forward.1} parent=11 // pred_fallthru
          _
        // Predicated region
        $region17: #{vae_forward.1} parent=11 // pred_check
          %p611 = pneg %p143
        $region18: #{vae_forward.1} parent=11 // pred_check_branch
          %613 = sbr.rel (%p611) target = $region20
        $region19: #{vae_forward.1} parent=11 // pred_region
          _
        $region20: #{vae_forward.1} parent=11 // pred_fallthru
          _
        // Predicated region
        $region21: #{vae_forward.1} parent=11 // pred_check
          %p614 = pneg %p164
        $region22: #{vae_forward.1} parent=11 // pred_check_branch
          %616 = sbr.rel (%p614) target = $region24
        $region23: #{vae_forward.1} parent=11 // pred_region
          _
        $region24: #{vae_forward.1} parent=11 // pred_fallthru
          _
        // Predicated region
        $region25: #{vae_forward.1} parent=11 // pred_check
          %p617 = pneg %p185
        $region26: #{vae_forward.1} parent=11 // pred_check_branch
          %619 = sbr.rel (%p617) target = $region28
        $region27: #{vae_forward.1} parent=11 // pred_region
          %s621 = ssub.s32 2048, 2048
          %622 = vsyncadd [#allocation9], %s621
          %s623 = sshll.u32 [#allocation8], 4
          %s624 = int_to_ptr.vmem [resolvable:$true] %s623
          %629 = dma.hbm_to_vmem [thread:$0]  %s5, 2048, %s624, [#allocation9], 64, 64, 4
        $region28: #{vae_forward.1} parent=11 // pred_fallthru
          _
        // Predicated region
        $region29: #{vae_forward.1} parent=11 // pred_check
          %p630 = pneg %p206
        $region30: #{vae_forward.1} parent=11 // pred_check_branch
          %632 = sbr.rel (%p630) target = $region32
        $region31: #{vae_forward.1} parent=11 // pred_region
          _
        $region32: #{vae_forward.1} parent=11 // pred_fallthru
          _
        // Predicated region
        $region33: #{vae_forward.1} parent=11 // pred_check
          %p633 = pneg %p227
        $region34: #{vae_forward.1} parent=11 // pred_check_branch
          %635 = sbr.rel (%p633) target = $region36
        $region35: #{vae_forward.1} parent=11 // pred_region
          _
        $region36: #{vae_forward.1} parent=11 // pred_fallthru
          _
        // Predicated region
        $region37: #{vae_forward.1} parent=11 // pred_check
          %p636 = pneg %p248
        $region38: #{vae_forward.1} parent=11 // pred_check_branch
          %638 = sbr.rel (%p636) target = $region40
        $region39: #{vae_forward.1} parent=11 // pred_region
          %s640 = ssub.s32 2048, 2048
          %641 = vsyncadd [#allocation9], %s640
          %s642 = sshll.u32 [#allocation10], 4
          %s643 = int_to_ptr.vmem [resolvable:$true] %s642
          %648 = dma.hbm_to_vmem [thread:$0]  %s8, 2048, %s643, [#allocation9], 128, 128, 8
        $region40: #{vae_forward.1} parent=11 // pred_fallthru
          _
        // Predicated region
        $region41: #{vae_forward.1} parent=11 // pred_check
          %p649 = pneg %p269
        $region42: #{vae_forward.1} parent=11 // pred_check_branch
          %651 = sbr.rel (%p649) target = $region44
        $region43: #{vae_forward.1} parent=11 // pred_region
          _
        $region44: #{vae_forward.1} parent=11 // pred_fallthru
          _
        // Predicated region
        $region45: #{vae_forward.1} parent=11 // pred_check
          %p652 = pneg %p290
        $region46: #{vae_forward.1} parent=11 // pred_check_branch
          %654 = sbr.rel (%p652) target = $region48
        $region47: #{vae_forward.1} parent=11 // pred_region
          _
        $region48: #{vae_forward.1} parent=11 // pred_fallthru
          _
        // Predicated region
        $region49: #{vae_forward.1} parent=11 // pred_check
          %p655 = pneg %p311
        $region50: #{vae_forward.1} parent=11 // pred_check_branch
          %657 = sbr.rel (%p655) target = $region52
        $region51: #{vae_forward.1} parent=11 // pred_region
          %s659 = ssub.s32 1024, 1024
          %660 = vsyncadd [#allocation12], %s659
          %s661 = sshll.u32 [#allocation11], 4
          %s662 = int_to_ptr.vmem [resolvable:$true] %s661
          %667 = dma.hbm_to_vmem [thread:$0]  %s11, 1024, %s662, [#allocation12], 64, 64, 4
        $region52: #{vae_forward.1} parent=11 // pred_fallthru
          _
        // Predicated region
        $region53: #{vae_forward.1} parent=11 // pred_check
          %p668 = pneg %p332
        $region54: #{vae_forward.1} parent=11 // pred_check_branch
          %670 = sbr.rel (%p668) target = $region56
        $region55: #{vae_forward.1} parent=11 // pred_region
          _
        $region56: #{vae_forward.1} parent=11 // pred_fallthru
          _
        // Predicated region
        $region57: #{vae_forward.1} parent=11 // pred_check
          %p671 = pneg %p353
        $region58: #{vae_forward.1} parent=11 // pred_check_branch
          %673 = sbr.rel (%p671) target = $region60
        $region59: #{vae_forward.1} parent=11 // pred_region
          _
        $region60: #{vae_forward.1} parent=11 // pred_fallthru
          _
        // Predicated region
        $region61: #{vae_forward.1} parent=11 // pred_check
          %p674 = pneg %p374
        $region62: #{vae_forward.1} parent=11 // pred_check_branch
          %676 = sbr.rel (%p674) target = $region64
        $region63: #{vae_forward.1} parent=11 // pred_region
          %s678 = ssub.s32 2048, 2048
          %679 = vsyncadd [#allocation12], %s678
          %s680 = sshll.u32 [#allocation13], 4
          %s681 = int_to_ptr.vmem [resolvable:$true] %s680
          %686 = dma.hbm_to_vmem [thread:$0]  %s14, 2048, %s681, [#allocation12], 128, 128, 8
        $region64: #{vae_forward.1} parent=11 // pred_fallthru
          _
        // Predicated region
        $region65: #{vae_forward.1} parent=11 // pred_check
          %p687 = pneg %p395
        $region66: #{vae_forward.1} parent=11 // pred_check_branch
          %689 = sbr.rel (%p687) target = $region68
        $region67: #{vae_forward.1} parent=11 // pred_region
          _
        $region68: #{vae_forward.1} parent=11 // pred_fallthru
          _
        // Predicated region
        $region69: #{vae_forward.1} parent=11 // pred_check
          %p690 = pneg %p416
        $region70: #{vae_forward.1} parent=11 // pred_check_branch
          %692 = sbr.rel (%p690) target = $region72
        $region71: #{vae_forward.1} parent=11 // pred_region
          %s694 = ssub.s32 32, 32
          %695 = vsyncadd [#allocation15], %s694
          %s697 = sshll.u32 [#allocation14], 4
          %s698 = int_to_ptr.vmem [resolvable:$true] %s697
          %700 = dma.hbm_to_vmem [thread:$0]  %s16, 32, %s698, [#allocation15]
        $region72: #{vae_forward.1} parent=11 // pred_fallthru
          _
        // Predicated region
        $region73: #{vae_forward.1} parent=11 // pred_check
          %p701 = pneg %p437
        $region74: #{vae_forward.1} parent=11 // pred_check_branch
          %703 = sbr.rel (%p701) target = $region76
        $region75: #{vae_forward.1} parent=11 // pred_region
          %s705 = ssub.s32 8192, 8192
          %706 = vsyncadd [#allocation15], %s705
          %s707 = sshll.u32 [#allocation16], 4
          %s708 = int_to_ptr.vmem [resolvable:$true] %s707
          %713 = dma.hbm_to_vmem [thread:$0]  %s17, 8192, %s708, [#allocation15], 256, 256, 16
        $region76: #{vae_forward.1} parent=11 // pred_fallthru
          _
        // Predicated region
        $region77: #{vae_forward.1} parent=11 // pred_check
          %p714 = pneg %p458
        $region78: #{vae_forward.1} parent=11 // pred_check_branch
          %716 = sbr.rel (%p714) target = $region80
        $region79: #{vae_forward.1} parent=11 // pred_region
          %s718 = ssub.s32 64, 64
          %719 = vsyncadd [#allocation18], %s718
          %s721 = sshll.u32 [#allocation17], 4
          %s722 = int_to_ptr.vmem [resolvable:$true] %s721
          %724 = dma.hbm_to_vmem [thread:$0]  %s18, 64, %s722, [#allocation18]
        $region80: #{vae_forward.1} parent=11 // pred_fallthru
          _
        // Predicated region
        $region81: #{vae_forward.1} parent=11 // pred_check
          %p725 = pneg %p479
        $region82: #{vae_forward.1} parent=11 // pred_check_branch
          %727 = sbr.rel (%p725) target = $region84
        $region83: #{vae_forward.1} parent=11 // pred_region
          %s729 = ssub.s32 64, 64
          %730 = vsyncadd [#allocation18], %s729
          %s732 = sshll.u32 [#allocation19], 4
          %s733 = int_to_ptr.vmem [resolvable:$true] %s732
          %735 = dma.hbm_to_vmem [thread:$0]  %s19, 64, %s733, [#allocation18]
        $region84: #{vae_forward.1} parent=11 // pred_fallthru
          _
      $region12: #{vae_forward.1} parent=5 // pred_fallthru
        _
      %p736 = scmp.lt.s32.totalorder %s49, 4
      // Predicated region
      $region85: #{vae_forward.1} parent=5 // pred_check
        %p737 = pneg %p736
      $region86: #{vae_forward.1} parent=5 // pred_check_branch
        %739 = sbr.rel (%p737) target = $region88
      $region87: #{vae_forward.1} parent=5 // pred_region
        // Predicated region
        $region89: #{vae_forward.1} parent=87 // pred_check
          %p740 = pneg %p69
        $region90: #{vae_forward.1} parent=87 // pred_check_branch
          %742 = sbr.rel (%p740) target = $region92
        $region91: #{vae_forward.1} parent=87 // pred_region
          %s743 = sand.u32 %s59, 1
          %s744 = scalar_lea.sflag [#allocation3], %s743
          %s745 = sand.u32 %s59, 1
          %s746 = smul.addr %s745, 256
          %s747 = scalar_lea.vmem [#allocation2], %s746
          %s748 = smul.u32 16, %s49
          %s750 = ssub.s32 4096, 4096
          %751 = vsyncadd %s744, %s750
          %s752 = smul.addr %s748, 4
          %s753 = smul.addr %s752, 64
          %s754 = scalar_lea.hbm %s0, %s753
          %s755 = sshll.u32 %s747, 4
          %s756 = int_to_ptr.vmem [resolvable:$true] %s755
          %761 = dma.hbm_to_vmem [thread:$0]  %s754, 4096, %s756, %s744, 256, 256, 16
        $region92: #{vae_forward.1} parent=87 // pred_fallthru
          _
        // Predicated region
        $region93: #{vae_forward.1} parent=87 // pred_check
          %p762 = pneg %p95
        $region94: #{vae_forward.1} parent=87 // pred_check_branch
          %764 = sbr.rel (%p762) target = $region96
        $region95: #{vae_forward.1} parent=87 // pred_region
          %s765 = sand.u32 %s49, 1
          %s766 = scalar_lea.sflag [#allocation6], %s765
          %s767 = sand.u32 %s85, 1
          %s768 = smul.addr %s767, 128
          %s769 = scalar_lea.vmem [#allocation5], %s768
          %s770 = smul.u32 16, %s49
          %s772 = ssub.s32 2048, 2048
          %773 = vsyncadd %s766, %s772
          %s774 = smul.addr %s770, 128
          %s775 = scalar_lea.hbm %s1, %s774
          %s776 = sshll.u32 %s769, 4
          %s777 = int_to_ptr.vmem [resolvable:$true] %s776
          %782 = dma.hbm_to_vmem [thread:$0]  %s775, 2048, %s777, %s766, 128, 128, 8
        $region96: #{vae_forward.1} parent=87 // pred_fallthru
          _
      $region88: #{vae_forward.1} parent=5 // pred_fallthru
        _
      %p783 = scmp.le.s32.totalorder 1, %s49
      %p784 = scmp.lt.s32.totalorder %s49, 5
      %p785 = pnand %p783, %p784
      %p786 = pneg %p785
      // Predicated region
      $region97: #{vae_forward.1} parent=5 // pred_check
        _
      $region98: #{vae_forward.1} parent=5 // pred_check_branch
        %788 = sbr.rel (%p785) target = $region100
      $region99: #{vae_forward.1} parent=5 // pred_region
        %s789 = ssub.s32 %s49, 1
        %s790 = sand.u32 %s62, 1
        %s791 = scalar_lea.sflag [#allocation3], %s790
        %s792 = sand.u32 %s62, 1
        %s793 = smul.addr %s792, 256
        %s794 = scalar_lea.vmem [#allocation2], %s793
        // Predicated region
        $region101: #{vae_forward.1} parent=99 // pred_check
          %p795 = pneg %p75
        $region102: #{vae_forward.1} parent=99 // pred_check_branch
          %797 = sbr.rel (%p795) target = $region104
        $region103: #{vae_forward.1} parent=99 // pred_region
          %798 = dma.done %s791, 4096
        $region104: #{vae_forward.1} parent=99 // pred_fallthru
          _
        %s799 = sand.u32 %s54, 1
        %s800 = scalar_lea.sflag [#allocation6], %s799
        %s801 = sand.u32 %s88, 1
        %s802 = smul.addr %s801, 128
        %s803 = scalar_lea.vmem [#allocation5], %s802
        // Predicated region
        $region105: #{vae_forward.1} parent=99 // pred_check
          %p804 = pneg %p101
        $region106: #{vae_forward.1} parent=99 // pred_check_branch
          %806 = sbr.rel (%p804) target = $region108
        $region107: #{vae_forward.1} parent=99 // pred_region
          %807 = dma.done %s800, 2048
        $region108: #{vae_forward.1} parent=99 // pred_fallthru
          _
        // Predicated region
        $region109: #{vae_forward.1} parent=99 // pred_check
          %p808 = pneg %p122
        $region110: #{vae_forward.1} parent=99 // pred_check_branch
          %810 = sbr.rel (%p808) target = $region112
        $region111: #{vae_forward.1} parent=99 // pred_region
          %811 = dma.done [#allocation6], 8192
        $region112: #{vae_forward.1} parent=99 // pred_fallthru
          _
        // Predicated region
        $region113: #{vae_forward.1} parent=99 // pred_check
          %p812 = pneg %p185
        $region114: #{vae_forward.1} parent=99 // pred_check_branch
          %814 = sbr.rel (%p812) target = $region116
        $region115: #{vae_forward.1} parent=99 // pred_region
          %815 = dma.done [#allocation9], 2048
        $region116: #{vae_forward.1} parent=99 // pred_fallthru
          _
        // Predicated region
        $region117: #{vae_forward.1} parent=99 // pred_check
          %p816 = pneg %p248
        $region118: #{vae_forward.1} parent=99 // pred_check_branch
          %818 = sbr.rel (%p816) target = $region120
        $region119: #{vae_forward.1} parent=99 // pred_region
          %819 = dma.done [#allocation9], 2048
        $region120: #{vae_forward.1} parent=99 // pred_fallthru
          _
        // Predicated region
        $region121: #{vae_forward.1} parent=99 // pred_check
          %p820 = pneg %p311
        $region122: #{vae_forward.1} parent=99 // pred_check_branch
          %822 = sbr.rel (%p820) target = $region124
        $region123: #{vae_forward.1} parent=99 // pred_region
          %823 = dma.done [#allocation12], 1024
        $region124: #{vae_forward.1} parent=99 // pred_fallthru
          _
        // Predicated region
        $region125: #{vae_forward.1} parent=99 // pred_check
          %p824 = pneg %p374
        $region126: #{vae_forward.1} parent=99 // pred_check_branch
          %826 = sbr.rel (%p824) target = $region128
        $region127: #{vae_forward.1} parent=99 // pred_region
          %827 = dma.done [#allocation12], 2048
        $region128: #{vae_forward.1} parent=99 // pred_fallthru
          _
        // Predicated region
        $region129: #{vae_forward.1} parent=99 // pred_check
          %p828 = pneg %p416
        $region130: #{vae_forward.1} parent=99 // pred_check_branch
          %830 = sbr.rel (%p828) target = $region132
        $region131: #{vae_forward.1} parent=99 // pred_region
          %831 = dma.done [#allocation15], 32
        $region132: #{vae_forward.1} parent=99 // pred_fallthru
          _
        // Predicated region
        $region133: #{vae_forward.1} parent=99 // pred_check
          %p832 = pneg %p437
        $region134: #{vae_forward.1} parent=99 // pred_check_branch
          %834 = sbr.rel (%p832) target = $region136
        $region135: #{vae_forward.1} parent=99 // pred_region
          %835 = dma.done [#allocation15], 8192
        $region136: #{vae_forward.1} parent=99 // pred_fallthru
          _
        // Predicated region
        $region137: #{vae_forward.1} parent=99 // pred_check
          %p836 = pneg %p458
        $region138: #{vae_forward.1} parent=99 // pred_check_branch
          %838 = sbr.rel (%p836) target = $region140
        $region139: #{vae_forward.1} parent=99 // pred_region
          %839 = dma.done [#allocation18], 64
        $region140: #{vae_forward.1} parent=99 // pred_fallthru
          _
        // Predicated region
        $region141: #{vae_forward.1} parent=99 // pred_check
          %p840 = pneg %p479
        $region142: #{vae_forward.1} parent=99 // pred_check_branch
          %842 = sbr.rel (%p840) target = $region144
        $region143: #{vae_forward.1} parent=99 // pred_region
          %843 = dma.done [#allocation18], 64
        $region144: #{vae_forward.1} parent=99 // pred_fallthru
          _
        %s844 = sand.u32 %s62, 1
        %s845 = scalar_lea.sflag [#allocation3], %s844
        %s846 = sand.u32 %s62, 1
        %s847 = smul.addr %s846, 256
        %s848 = scalar_lea.vmem [#allocation2], %s847
        %p849 = pneg %p75
        %p850 = pneg %p72
        %s851 = sand.u32 %s54, 1
        %s852 = scalar_lea.sflag [#allocation6], %s851
        %s853 = sand.u32 %s88, 1
        %s854 = smul.addr %s853, 128
        %s855 = scalar_lea.vmem [#allocation5], %s854
        %p856 = pneg %p101
        %p857 = pneg %p98
        %p858 = pneg %p122
        %p859 = pneg %p119
        %p860 = pneg %p143
        %p861 = pneg %p140
        %p862 = pneg %p164
        %p863 = pneg %p161
        %p864 = pneg %p185
        %p865 = pneg %p182
        %p866 = pneg %p206
        %p867 = pneg %p203
        %p868 = pneg %p227
        %p869 = pneg %p224
        %p870 = pneg %p248
        %p871 = pneg %p245
        %p872 = pneg %p269
        %p873 = pneg %p266
        %p874 = pneg %p290
        %p875 = pneg %p287
        %p876 = pneg %p311
        %p877 = pneg %p308
        %p878 = pneg %p332
        %p879 = pneg %p329
        %p880 = pneg %p353
        %p881 = pneg %p350
        %p882 = pneg %p374
        %p883 = pneg %p371
        %p884 = pneg %p395
        %p885 = pneg %p392
        %p886 = pneg %p416
        %p887 = pneg %p413
        %p888 = pneg %p437
        %p889 = pneg %p434
        %p890 = pneg %p458
        %p891 = pneg %p455
        %p892 = pneg %p479
        %p893 = pneg %p476
        %p894 = pneg %p505
        %p895 = pneg %p502
        %s896 = sand.u32 %s492, 1
        %s897 = scalar_lea.sflag [#allocation4], %s896
        %s898 = sand.u32 %s492, 1
        %s899 = smul.addr %s898, 512
        %s900 = scalar_lea.vmem [#allocation20], %s899
        %p901 = pneg %p531
        %p902 = pneg %p528
        %s903 = sand.u32 %s54, 1
        %s904 = scalar_lea.sflag [#allocation22], %s903
        %s905 = sand.u32 %s518, 1
        %s906 = smul.addr %s905, 128
        %s907 = scalar_lea.vmem [#allocation21], %s906
        %p908 = pneg %p557
        %p909 = pneg %p554
        %s910 = sand.u32 %s54, 1
        %s911 = scalar_lea.sflag [#allocation22], %s910
        %s912 = sand.u32 %s544, 1
        %s913 = smul.addr %s912, 128
        %s914 = scalar_lea.vmem [#allocation23], %s913
        %p915 = pneg %p583
        %p916 = pneg %p580
        %s917 = sand.u32 %s570, 1
        %s918 = scalar_lea.sflag [#allocation25], %s917
        %s919 = sand.u32 %s570, 1
        %s920 = smul.addr %s919, 128
        %s921 = scalar_lea.vmem [#allocation24], %s920
        %s922 = smul.u32 16, %s54
        %s923 = smul.u32 16, %s54
        %s924 = smul.u32 16, %s54
        %s925 = smul.u32 16, %s54
        %s926 = smul.u32 16, %s54
        %s927 = smul.u32 16, %s54
        %v929 = vld [vmem:[%s794] sm:$0xff]
        %v930 = vld [vmem:[%s794 + $0x8] sm:$0xff]
        %v931 = vld [vmem:[%s794 + $0x10] sm:$0xff]
        %v932 = vld [vmem:[%s794 + $0x18] sm:$0xff]
        %v933 = vld [vmem:[%s794 + $0x20] sm:$0xff]
        %v934 = vld [vmem:[%s794 + $0x28] sm:$0xff]
        %v935 = vld [vmem:[%s794 + $0x30] sm:$0xff]
        %v936 = vld [vmem:[%s794 + $0x38] sm:$0xff]
        %v937 = vld [vmem:[%s794 + $0x40] sm:$0xff]
        %v938 = vld [vmem:[%s794 + $0x48] sm:$0xff]
        %v939 = vld [vmem:[%s794 + $0x50] sm:$0xff]
        %v940 = vld [vmem:[%s794 + $0x58] sm:$0xff]
        %v941 = vld [vmem:[%s794 + $0x60] sm:$0xff]
        %v942 = vld [vmem:[%s794 + $0x68] sm:$0xff]
        %v943 = vld [vmem:[%s794 + $0x70] sm:$0xff]
        %v944 = vld [vmem:[%s794 + $0x78] sm:$0xff]
        %v945 = vld [vmem:[%s794 + $0x80] sm:$0xff]
        %v946 = vld [vmem:[%s794 + $0x88] sm:$0xff]
        %v947 = vld [vmem:[%s794 + $0x90] sm:$0xff]
        %v948 = vld [vmem:[%s794 + $0x98] sm:$0xff]
        %v949 = vld [vmem:[%s794 + $0xa0] sm:$0xff]
        %v950 = vld [vmem:[%s794 + $0xa8] sm:$0xff]
        %v951 = vld [vmem:[%s794 + $0xb0] sm:$0xff]
        %v952 = vld [vmem:[%s794 + $0xb8] sm:$0xff]
        %v953 = vld [vmem:[%s794 + $0xc0] sm:$0xff]
        %v954 = vld [vmem:[%s794 + $0xc8] sm:$0xff]
        %v955 = vld [vmem:[%s794 + $0xd0] sm:$0xff]
        %v956 = vld [vmem:[%s794 + $0xd8] sm:$0xff]
        %v957 = vld [vmem:[%s794 + $0xe0] sm:$0xff]
        %v958 = vld [vmem:[%s794 + $0xe8] sm:$0xff]
        %v959 = vld [vmem:[%s794 + $0xf0] sm:$0xff]
        %v960 = vld [vmem:[%s794 + $0xf8] sm:$0xff]
        %v961 = vld [vmem:[#allocation7] sm:$0xff]
        %v962 = vld [vmem:[#allocation7 + $0x8] sm:$0xff]
        %v963 = vld [vmem:[#allocation7 + $0x10] sm:$0xff]
        %v964 = vld [vmem:[#allocation7 + $0x18] sm:$0xff]
        %v965 = vld [vmem:[#allocation7 + $0x20] sm:$0xff]
        %v966 = vld [vmem:[#allocation7 + $0x28] sm:$0xff]
        %v967 = vld [vmem:[#allocation7 + $0x30] sm:$0xff]
        %v968 = vld [vmem:[#allocation7 + $0x38] sm:$0xff]
        %v969 = vld [vmem:[#allocation7 + $0x40] sm:$0xff]
        %v970 = vld [vmem:[#allocation7 + $0x48] sm:$0xff]
        %v971 = vld [vmem:[#allocation7 + $0x50] sm:$0xff]
        %v972 = vld [vmem:[#allocation7 + $0x58] sm:$0xff]
        %v973 = vld [vmem:[#allocation7 + $0x60] sm:$0xff]
        %v974 = vld [vmem:[#allocation7 + $0x68] sm:$0xff]
        %v975 = vld [vmem:[#allocation7 + $0x70] sm:$0xff]
        %v976 = vld [vmem:[#allocation7 + $0x78] sm:$0xff]
        %v977 = vld [vmem:[#allocation7 + $0x80] sm:$0xff]
        %v978 = vld [vmem:[#allocation7 + $0x88] sm:$0xff]
        %v979 = vld [vmem:[#allocation7 + $0x90] sm:$0xff]
        %v980 = vld [vmem:[#allocation7 + $0x98] sm:$0xff]
        %v981 = vld [vmem:[#allocation7 + $0xa0] sm:$0xff]
        %v982 = vld [vmem:[#allocation7 + $0xa8] sm:$0xff]
        %v983 = vld [vmem:[#allocation7 + $0xb0] sm:$0xff]
        %v984 = vld [vmem:[#allocation7 + $0xb8] sm:$0xff]
        %v985 = vld [vmem:[#allocation7 + $0xc0] sm:$0xff]
        %v986 = vld [vmem:[#allocation7 + $0xc8] sm:$0xff]
        %v987 = vld [vmem:[#allocation7 + $0xd0] sm:$0xff]
        %v988 = vld [vmem:[#allocation7 + $0xd8] sm:$0xff]
        %v989 = vld [vmem:[#allocation7 + $0xe0] sm:$0xff]
        %v990 = vld [vmem:[#allocation7 + $0xe8] sm:$0xff]
        %v991 = vld [vmem:[#allocation7 + $0xf0] sm:$0xff]
        %v992 = vld [vmem:[#allocation7 + $0xf8] sm:$0xff]
        %v993 = vld [vmem:[#allocation7 + $0x100] sm:$0xff]
        %v994 = vld [vmem:[#allocation7 + $0x108] sm:$0xff]
        %v995 = vld [vmem:[#allocation7 + $0x110] sm:$0xff]
        %v996 = vld [vmem:[#allocation7 + $0x118] sm:$0xff]
        %v997 = vld [vmem:[#allocation7 + $0x120] sm:$0xff]
        %v998 = vld [vmem:[#allocation7 + $0x128] sm:$0xff]
        %v999 = vld [vmem:[#allocation7 + $0x130] sm:$0xff]
        %v1000 = vld [vmem:[#allocation7 + $0x138] sm:$0xff]
        %v1001 = vld [vmem:[#allocation7 + $0x140] sm:$0xff]
        %v1002 = vld [vmem:[#allocation7 + $0x148] sm:$0xff]
        %v1003 = vld [vmem:[#allocation7 + $0x150] sm:$0xff]
        %v1004 = vld [vmem:[#allocation7 + $0x158] sm:$0xff]
        %v1005 = vld [vmem:[#allocation7 + $0x160] sm:$0xff]
        %v1006 = vld [vmem:[#allocation7 + $0x168] sm:$0xff]
        %v1007 = vld [vmem:[#allocation7 + $0x170] sm:$0xff]
        %v1008 = vld [vmem:[#allocation7 + $0x178] sm:$0xff]
        %v1009 = vld [vmem:[#allocation7 + $0x180] sm:$0xff]
        %v1010 = vld [vmem:[#allocation7 + $0x188] sm:$0xff]
        %v1011 = vld [vmem:[#allocation7 + $0x190] sm:$0xff]
        %v1012 = vld [vmem:[#allocation7 + $0x198] sm:$0xff]
        %v1013 = vld [vmem:[#allocation7 + $0x1a0] sm:$0xff]
        %v1014 = vld [vmem:[#allocation7 + $0x1a8] sm:$0xff]
        %v1015 = vld [vmem:[#allocation7 + $0x1b0] sm:$0xff]
        %v1016 = vld [vmem:[#allocation7 + $0x1b8] sm:$0xff]
        %v1017 = vld [vmem:[#allocation7 + $0x1c0] sm:$0xff]
        %v1018 = vld [vmem:[#allocation7 + $0x1c8] sm:$0xff]
        %v1019 = vld [vmem:[#allocation7 + $0x1d0] sm:$0xff]
        %v1020 = vld [vmem:[#allocation7 + $0x1d8] sm:$0xff]
        %v1021 = vld [vmem:[#allocation7 + $0x1e0] sm:$0xff]
        %v1022 = vld [vmem:[#allocation7 + $0x1e8] sm:$0xff]
        %v1023 = vld [vmem:[#allocation7 + $0x1f0] sm:$0xff]
        %v1024 = vld [vmem:[#allocation7 + $0x1f8] sm:$0xff]
        %v1025 = vld [vmem:[%s3] sm:$0x3]
        %v1026 = vld [vmem:[%s4] sm:$0x3]
        %v1059 = vunpack.c.l.b16 %v929
        %v1060 = vunpack.c.h.b16 %v929
        %v1061 = vunpack.c.l.b16 %v930
        %v1062 = vunpack.c.h.b16 %v930
        %v1063 = vunpack.c.l.b16 %v931
        %v1064 = vunpack.c.h.b16 %v931
        %v1065 = vunpack.c.l.b16 %v932
        %v1066 = vunpack.c.h.b16 %v932
        %v1067 = vunpack.c.l.b16 %v933
        %v1068 = vunpack.c.h.b16 %v933
        %v1069 = vunpack.c.l.b16 %v934
        %v1070 = vunpack.c.h.b16 %v934
        %v1071 = vunpack.c.l.b16 %v935
        %v1072 = vunpack.c.h.b16 %v935
        %v1073 = vunpack.c.l.b16 %v936
        %v1074 = vunpack.c.h.b16 %v936
        %v1075 = vunpack.c.l.b16 %v937
        %v1076 = vunpack.c.h.b16 %v937
        %v1077 = vunpack.c.l.b16 %v938
        %v1078 = vunpack.c.h.b16 %v938
        %v1079 = vunpack.c.l.b16 %v939
        %v1080 = vunpack.c.h.b16 %v939
        %v1081 = vunpack.c.l.b16 %v940
        %v1082 = vunpack.c.h.b16 %v940
        %v1083 = vunpack.c.l.b16 %v941
        %v1084 = vunpack.c.h.b16 %v941
        %v1085 = vunpack.c.l.b16 %v942
        %v1086 = vunpack.c.h.b16 %v942
        %v1087 = vunpack.c.l.b16 %v943
        %v1088 = vunpack.c.h.b16 %v943
        %v1089 = vunpack.c.l.b16 %v944
        %v1090 = vunpack.c.h.b16 %v944
        %v1091 = vunpack.c.l.b16 %v945
        %v1092 = vunpack.c.h.b16 %v945
        %v1093 = vunpack.c.l.b16 %v946
        %v1094 = vunpack.c.h.b16 %v946
        %v1095 = vunpack.c.l.b16 %v947
        %v1096 = vunpack.c.h.b16 %v947
        %v1097 = vunpack.c.l.b16 %v948
        %v1098 = vunpack.c.h.b16 %v948
        %v1099 = vunpack.c.l.b16 %v949
        %v1100 = vunpack.c.h.b16 %v949
        %v1101 = vunpack.c.l.b16 %v950
        %v1102 = vunpack.c.h.b16 %v950
        %v1103 = vunpack.c.l.b16 %v951
        %v1104 = vunpack.c.h.b16 %v951
        %v1105 = vunpack.c.l.b16 %v952
        %v1106 = vunpack.c.h.b16 %v952
        %v1107 = vunpack.c.l.b16 %v953
        %v1108 = vunpack.c.h.b16 %v953
        %v1109 = vunpack.c.l.b16 %v954
        %v1110 = vunpack.c.h.b16 %v954
        %v1111 = vunpack.c.l.b16 %v955
        %v1112 = vunpack.c.h.b16 %v955
        %v1113 = vunpack.c.l.b16 %v956
        %v1114 = vunpack.c.h.b16 %v956
        %v1115 = vunpack.c.l.b16 %v957
        %v1116 = vunpack.c.h.b16 %v957
        %v1117 = vunpack.c.l.b16 %v958
        %v1118 = vunpack.c.h.b16 %v958
        %v1119 = vunpack.c.l.b16 %v959
        %v1120 = vunpack.c.h.b16 %v959
        %v1121 = vunpack.c.l.b16 %v960
        %v1122 = vunpack.c.h.b16 %v960
        %v1123 = vpack.c.b16 %v1063, %v1059
        %v1124 = vpack.c.b16 %v1064, %v1060
        %v1125 = vpack.c.b16 %v1065, %v1061
        %v1126 = vpack.c.b16 %v1066, %v1062
        %v1127 = vpack.c.b16 %v1071, %v1067
        %v1128 = vpack.c.b16 %v1072, %v1068
        %v1129 = vpack.c.b16 %v1073, %v1069
        %v1130 = vpack.c.b16 %v1074, %v1070
        %v1131 = vpack.c.b16 %v1079, %v1075
        %v1132 = vpack.c.b16 %v1080, %v1076
        %v1133 = vpack.c.b16 %v1081, %v1077
        %v1134 = vpack.c.b16 %v1082, %v1078
        %v1135 = vpack.c.b16 %v1087, %v1083
        %v1136 = vpack.c.b16 %v1088, %v1084
        %v1137 = vpack.c.b16 %v1089, %v1085
        %v1138 = vpack.c.b16 %v1090, %v1086
        %v1139 = vpack.c.b16 %v1095, %v1091
        %v1140 = vpack.c.b16 %v1096, %v1092
        %v1141 = vpack.c.b16 %v1097, %v1093
        %v1142 = vpack.c.b16 %v1098, %v1094
        %v1143 = vpack.c.b16 %v1103, %v1099
        %v1144 = vpack.c.b16 %v1104, %v1100
        %v1145 = vpack.c.b16 %v1105, %v1101
        %v1146 = vpack.c.b16 %v1106, %v1102
        %v1147 = vpack.c.b16 %v1111, %v1107
        %v1148 = vpack.c.b16 %v1112, %v1108
        %v1149 = vpack.c.b16 %v1113, %v1109
        %v1150 = vpack.c.b16 %v1114, %v1110
        %v1151 = vpack.c.b16 %v1119, %v1115
        %v1152 = vpack.c.b16 %v1120, %v1116
        %v1153 = vpack.c.b16 %v1121, %v1117
        %v1154 = vpack.c.b16 %v1122, %v1118
        %v1251 = vunpack.c.l.b16 %v961
        %v1252 = vunpack.c.h.b16 %v961
        %v1253 = vunpack.c.l.b16 %v962
        %v1254 = vunpack.c.h.b16 %v962
        %v1255 = vunpack.c.l.b16 %v963
        %v1256 = vunpack.c.h.b16 %v963
        %v1257 = vunpack.c.l.b16 %v964
        %v1258 = vunpack.c.h.b16 %v964
        %v1259 = vunpack.c.l.b16 %v965
        %v1260 = vunpack.c.h.b16 %v965
        %v1261 = vunpack.c.l.b16 %v966
        %v1262 = vunpack.c.h.b16 %v966
        %v1263 = vunpack.c.l.b16 %v967
        %v1264 = vunpack.c.h.b16 %v967
        %v1265 = vunpack.c.l.b16 %v968
        %v1266 = vunpack.c.h.b16 %v968
        %v1267 = vunpack.c.l.b16 %v969
        %v1268 = vunpack.c.h.b16 %v969
        %v1269 = vunpack.c.l.b16 %v970
        %v1270 = vunpack.c.h.b16 %v970
        %v1271 = vunpack.c.l.b16 %v971
        %v1272 = vunpack.c.h.b16 %v971
        %v1273 = vunpack.c.l.b16 %v972
        %v1274 = vunpack.c.h.b16 %v972
        %v1275 = vunpack.c.l.b16 %v973
        %v1276 = vunpack.c.h.b16 %v973
        %v1277 = vunpack.c.l.b16 %v974
        %v1278 = vunpack.c.h.b16 %v974
        %v1279 = vunpack.c.l.b16 %v975
        %v1280 = vunpack.c.h.b16 %v975
        %v1281 = vunpack.c.l.b16 %v976
        %v1282 = vunpack.c.h.b16 %v976
        %v1283 = vunpack.c.l.b16 %v977
        %v1284 = vunpack.c.h.b16 %v977
        %v1285 = vunpack.c.l.b16 %v978
        %v1286 = vunpack.c.h.b16 %v978
        %v1287 = vunpack.c.l.b16 %v979
        %v1288 = vunpack.c.h.b16 %v979
        %v1289 = vunpack.c.l.b16 %v980
        %v1290 = vunpack.c.h.b16 %v980
        %v1291 = vunpack.c.l.b16 %v981
        %v1292 = vunpack.c.h.b16 %v981
        %v1293 = vunpack.c.l.b16 %v982
        %v1294 = vunpack.c.h.b16 %v982
        %v1295 = vunpack.c.l.b16 %v983
        %v1296 = vunpack.c.h.b16 %v983
        %v1297 = vunpack.c.l.b16 %v984
        %v1298 = vunpack.c.h.b16 %v984
        %v1299 = vunpack.c.l.b16 %v985
        %v1300 = vunpack.c.h.b16 %v985
        %v1301 = vunpack.c.l.b16 %v986
        %v1302 = vunpack.c.h.b16 %v986
        %v1303 = vunpack.c.l.b16 %v987
        %v1304 = vunpack.c.h.b16 %v987
        %v1305 = vunpack.c.l.b16 %v988
        %v1306 = vunpack.c.h.b16 %v988
        %v1307 = vunpack.c.l.b16 %v989
        %v1308 = vunpack.c.h.b16 %v989
        %v1309 = vunpack.c.l.b16 %v990
        %v1310 = vunpack.c.h.b16 %v990
        %v1311 = vunpack.c.l.b16 %v991
        %v1312 = vunpack.c.h.b16 %v991
        %v1313 = vunpack.c.l.b16 %v992
        %v1314 = vunpack.c.h.b16 %v992
        %v1315 = vunpack.c.l.b16 %v993
        %v1316 = vunpack.c.h.b16 %v993
        %v1317 = vunpack.c.l.b16 %v994
        %v1318 = vunpack.c.h.b16 %v994
        %v1319 = vunpack.c.l.b16 %v995
        %v1320 = vunpack.c.h.b16 %v995
        %v1321 = vunpack.c.l.b16 %v996
        %v1322 = vunpack.c.h.b16 %v996
        %v1323 = vunpack.c.l.b16 %v997
        %v1324 = vunpack.c.h.b16 %v997
        %v1325 = vunpack.c.l.b16 %v998
        %v1326 = vunpack.c.h.b16 %v998
        %v1327 = vunpack.c.l.b16 %v999
        %v1328 = vunpack.c.h.b16 %v999
        %v1329 = vunpack.c.l.b16 %v1000
        %v1330 = vunpack.c.h.b16 %v1000
        %v1331 = vunpack.c.l.b16 %v1001
        %v1332 = vunpack.c.h.b16 %v1001
        %v1333 = vunpack.c.l.b16 %v1002
        %v1334 = vunpack.c.h.b16 %v1002
        %v1335 = vunpack.c.l.b16 %v1003
        %v1336 = vunpack.c.h.b16 %v1003
        %v1337 = vunpack.c.l.b16 %v1004
        %v1338 = vunpack.c.h.b16 %v1004
        %v1339 = vunpack.c.l.b16 %v1005
        %v1340 = vunpack.c.h.b16 %v1005
        %v1341 = vunpack.c.l.b16 %v1006
        %v1342 = vunpack.c.h.b16 %v1006
        %v1343 = vunpack.c.l.b16 %v1007
        %v1344 = vunpack.c.h.b16 %v1007
        %v1345 = vunpack.c.l.b16 %v1008
        %v1346 = vunpack.c.h.b16 %v1008
        %v1347 = vunpack.c.l.b16 %v1009
        %v1348 = vunpack.c.h.b16 %v1009
        %v1349 = vunpack.c.l.b16 %v1010
        %v1350 = vunpack.c.h.b16 %v1010
        %v1351 = vunpack.c.l.b16 %v1011
        %v1352 = vunpack.c.h.b16 %v1011
        %v1353 = vunpack.c.l.b16 %v1012
        %v1354 = vunpack.c.h.b16 %v1012
        %v1355 = vunpack.c.l.b16 %v1013
        %v1356 = vunpack.c.h.b16 %v1013
        %v1357 = vunpack.c.l.b16 %v1014
        %v1358 = vunpack.c.h.b16 %v1014
        %v1359 = vunpack.c.l.b16 %v1015
        %v1360 = vunpack.c.h.b16 %v1015
        %v1361 = vunpack.c.l.b16 %v1016
        %v1362 = vunpack.c.h.b16 %v1016
        %v1363 = vunpack.c.l.b16 %v1017
        %v1364 = vunpack.c.h.b16 %v1017
        %v1365 = vunpack.c.l.b16 %v1018
        %v1366 = vunpack.c.h.b16 %v1018
        %v1367 = vunpack.c.l.b16 %v1019
        %v1368 = vunpack.c.h.b16 %v1019
        %v1369 = vunpack.c.l.b16 %v1020
        %v1370 = vunpack.c.h.b16 %v1020
        %v1371 = vunpack.c.l.b16 %v1021
        %v1372 = vunpack.c.h.b16 %v1021
        %v1373 = vunpack.c.l.b16 %v1022
        %v1374 = vunpack.c.h.b16 %v1022
        %v1375 = vunpack.c.l.b16 %v1023
        %v1376 = vunpack.c.h.b16 %v1023
        %v1377 = vunpack.c.l.b16 %v1024
        %v1378 = vunpack.c.h.b16 %v1024
        %v1379 = vpack.c.b16 %v1253, %v1251
        %v1380 = vpack.c.b16 %v1254, %v1252
        %v1381 = vpack.c.b16 %v1257, %v1255
        %v1382 = vpack.c.b16 %v1258, %v1256
        %v1383 = vpack.c.b16 %v1261, %v1259
        %v1384 = vpack.c.b16 %v1262, %v1260
        %v1385 = vpack.c.b16 %v1265, %v1263
        %v1386 = vpack.c.b16 %v1266, %v1264
        %v1387 = vpack.c.b16 %v1269, %v1267
        %v1388 = vpack.c.b16 %v1270, %v1268
        %v1389 = vpack.c.b16 %v1273, %v1271
        %v1390 = vpack.c.b16 %v1274, %v1272
        %v1391 = vpack.c.b16 %v1277, %v1275
        %v1392 = vpack.c.b16 %v1278, %v1276
        %v1393 = vpack.c.b16 %v1281, %v1279
        %v1394 = vpack.c.b16 %v1282, %v1280
        %v1395 = vpack.c.b16 %v1285, %v1283
        %v1396 = vpack.c.b16 %v1286, %v1284
        %v1397 = vpack.c.b16 %v1289, %v1287
        %v1398 = vpack.c.b16 %v1290, %v1288
        %v1399 = vpack.c.b16 %v1293, %v1291
        %v1400 = vpack.c.b16 %v1294, %v1292
        %v1401 = vpack.c.b16 %v1297, %v1295
        %v1402 = vpack.c.b16 %v1298, %v1296
        %v1403 = vpack.c.b16 %v1301, %v1299
        %v1404 = vpack.c.b16 %v1302, %v1300
        %v1405 = vpack.c.b16 %v1305, %v1303
        %v1406 = vpack.c.b16 %v1306, %v1304
        %v1407 = vpack.c.b16 %v1309, %v1307
        %v1408 = vpack.c.b16 %v1310, %v1308
        %v1409 = vpack.c.b16 %v1313, %v1311
        %v1410 = vpack.c.b16 %v1314, %v1312
        %v1411 = vpack.c.b16 %v1317, %v1315
        %v1412 = vpack.c.b16 %v1318, %v1316
        %v1413 = vpack.c.b16 %v1321, %v1319
        %v1414 = vpack.c.b16 %v1322, %v1320
        %v1415 = vpack.c.b16 %v1325, %v1323
        %v1416 = vpack.c.b16 %v1326, %v1324
        %v1417 = vpack.c.b16 %v1329, %v1327
        %v1418 = vpack.c.b16 %v1330, %v1328
        %v1419 = vpack.c.b16 %v1333, %v1331
        %v1420 = vpack.c.b16 %v1334, %v1332
        %v1421 = vpack.c.b16 %v1337, %v1335
        %v1422 = vpack.c.b16 %v1338, %v1336
        %v1423 = vpack.c.b16 %v1341, %v1339
        %v1424 = vpack.c.b16 %v1342, %v1340
        %v1425 = vpack.c.b16 %v1345, %v1343
        %v1426 = vpack.c.b16 %v1346, %v1344
        %v1427 = vpack.c.b16 %v1349, %v1347
        %v1428 = vpack.c.b16 %v1350, %v1348
        %v1429 = vpack.c.b16 %v1353, %v1351
        %v1430 = vpack.c.b16 %v1354, %v1352
        %v1431 = vpack.c.b16 %v1357, %v1355
        %v1432 = vpack.c.b16 %v1358, %v1356
        %v1433 = vpack.c.b16 %v1361, %v1359
        %v1434 = vpack.c.b16 %v1362, %v1360
        %v1435 = vpack.c.b16 %v1365, %v1363
        %v1436 = vpack.c.b16 %v1366, %v1364
        %v1437 = vpack.c.b16 %v1369, %v1367
        %v1438 = vpack.c.b16 %v1370, %v1368
        %v1439 = vpack.c.b16 %v1373, %v1371
        %v1440 = vpack.c.b16 %v1374, %v1372
        %v1441 = vpack.c.b16 %v1377, %v1375
        %v1442 = vpack.c.b16 %v1378, %v1376
        %1507 = vmatprep.subr.bf16.mxu0 %v1380
        %1508 = vmatpush1.bf16.msra.mxu0 %v1379
        %1509 = vmatprep.subr.bf16.mxu0 %v1382
        %1510 = vmatpush1.bf16.msra.mxu0 %v1381
        %1511 = vmatprep.subr.bf16.mxu0 %v1384
        %1512 = vmatpush1.bf16.msra.mxu0 %v1383
        %1513 = vmatprep.subr.bf16.mxu0 %v1386
        %1514 = vmatpush1.bf16.msra.mxu0 %v1385
        %1515 = vmatprep.subr.bf16.mxu0 %v1388
        %1516 = vmatpush1.bf16.msra.mxu0 %v1387
        %1517 = vmatprep.subr.bf16.mxu0 %v1390
        %1518 = vmatpush1.bf16.msra.mxu0 %v1389
        %1519 = vmatprep.subr.bf16.mxu0 %v1392
        %1520 = vmatpush1.bf16.msra.mxu0 %v1391
        %1521 = vmatprep.subr.bf16.mxu0 %v1394
        %1522 = vmatpush1.bf16.msra.mxu0 %v1393
        %1523 = vmatprep.subr.bf16.mxu0 %v1396
        %1524 = vmatpush1.bf16.msra.mxu0 %v1395
        %1525 = vmatprep.subr.bf16.mxu0 %v1398
        %1526 = vmatpush1.bf16.msra.mxu0 %v1397
        %1527 = vmatprep.subr.bf16.mxu0 %v1400
        %1528 = vmatpush1.bf16.msra.mxu0 %v1399
        %1529 = vmatprep.subr.bf16.mxu0 %v1402
        %1530 = vmatpush1.bf16.msra.mxu0 %v1401
        %1531 = vmatprep.subr.bf16.mxu0 %v1404
        %1532 = vmatpush1.bf16.msra.mxu0 %v1403
        %1533 = vmatprep.subr.bf16.mxu0 %v1406
        %1534 = vmatpush1.bf16.msra.mxu0 %v1405
        %1535 = vmatprep.subr.bf16.mxu0 %v1408
        %1536 = vmatpush1.bf16.msra.mxu0 %v1407
        %1537 = vmatprep.subr.bf16.mxu0 %v1410
        %1538 = vmatpush1.bf16.msra.mxu0 %v1409
        %1539 = vmatprep.mubr.bf16.mxu0 %v1124
        %1540 = vmatmul.mubr.bf16.gmra.mrb[0].mxu0 %v1123
        %v1541 = vpop.f32.mrb[0].mxu0
        %v1542 = vadd.f32 0.0, %v1541
        %v1543 = vpop.f32.mrb[0].mxu0
        %v1544 = vadd.f32 0.0, %v1543
        %v1545 = vpop.f32.mrb[0].mxu0
        %v1546 = vadd.f32 0.0, %v1545
        %v1547 = vpop.f32.mrb[0].mxu0
        %v1548 = vadd.f32 0.0, %v1547
        %1549 = vmatprep.mubr.bf16.mxu0 %v1128
        %1550 = vmatmul.mubr.bf16.gmra.mrb[0].mxu0 %v1127
        %v1551 = vpop.f32.mrb[0].mxu0
        %v1552 = vadd.f32 0.0, %v1551
        %v1553 = vpop.f32.mrb[0].mxu0
        %v1554 = vadd.f32 0.0, %v1553
        %v1555 = vpop.f32.mrb[0].mxu0
        %v1556 = vadd.f32 0.0, %v1555
        %v1557 = vpop.f32.mrb[0].mxu0
        %v1558 = vadd.f32 0.0, %v1557
        %1559 = vmatprep.mubr.bf16.mxu0 %v1132
        %1560 = vmatmul.mubr.bf16.gmra.mrb[0].mxu0 %v1131
        %v1561 = vpop.f32.mrb[0].mxu0
        %v1562 = vadd.f32 0.0, %v1561
        %v1563 = vpop.f32.mrb[0].mxu0
        %v1564 = vadd.f32 0.0, %v1563
        %v1565 = vpop.f32.mrb[0].mxu0
        %v1566 = vadd.f32 0.0, %v1565
        %v1567 = vpop.f32.mrb[0].mxu0
        %v1568 = vadd.f32 0.0, %v1567
        %1569 = vmatprep.mubr.bf16.mxu0 %v1136
        %1570 = vmatmul.mubr.bf16.gmra.mrb[0].mxu0 %v1135
        %v1571 = vpop.f32.mrb[0].mxu0
        %v1572 = vadd.f32 0.0, %v1571
        %v1573 = vpop.f32.mrb[0].mxu0
        %v1574 = vadd.f32 0.0, %v1573
        %v1575 = vpop.f32.mrb[0].mxu0
        %v1576 = vadd.f32 0.0, %v1575
        %v1577 = vpop.f32.mrb[0].mxu0
        %v1578 = vadd.f32 0.0, %v1577
        %1579 = vmatprep.mubr.bf16.mxu0 %v1140
        %1580 = vmatmul.mubr.bf16.gmra.mrb[0].mxu0 %v1139
        %v1581 = vpop.f32.mrb[0].mxu0
        %v1582 = vadd.f32 0.0, %v1581
        %v1583 = vpop.f32.mrb[0].mxu0
        %v1584 = vadd.f32 0.0, %v1583
        %v1585 = vpop.f32.mrb[0].mxu0
        %v1586 = vadd.f32 0.0, %v1585
        %v1587 = vpop.f32.mrb[0].mxu0
        %v1588 = vadd.f32 0.0, %v1587
        %1589 = vmatprep.mubr.bf16.mxu0 %v1144
        %1590 = vmatmul.mubr.bf16.gmra.mrb[0].mxu0 %v1143
        %v1591 = vpop.f32.mrb[0].mxu0
        %v1592 = vadd.f32 0.0, %v1591
        %v1593 = vpop.f32.mrb[0].mxu0
        %v1594 = vadd.f32 0.0, %v1593
        %v1595 = vpop.f32.mrb[0].mxu0
        %v1596 = vadd.f32 0.0, %v1595
        %v1597 = vpop.f32.mrb[0].mxu0
        %v1598 = vadd.f32 0.0, %v1597
        %1599 = vmatprep.mubr.bf16.mxu0 %v1148
        %1600 = vmatmul.mubr.bf16.gmra.mrb[0].mxu0 %v1147
        %v1601 = vpop.f32.mrb[0].mxu0
        %v1602 = vadd.f32 0.0, %v1601
        %v1603 = vpop.f32.mrb[0].mxu0
        %v1604 = vadd.f32 0.0, %v1603
        %v1605 = vpop.f32.mrb[0].mxu0
        %v1606 = vadd.f32 0.0, %v1605
        %v1607 = vpop.f32.mrb[0].mxu0
        %v1608 = vadd.f32 0.0, %v1607
        %1609 = vmatprep.mubr.bf16.mxu0 %v1152
        %1610 = vmatmul.mubr.bf16.gmra.mrb[0].mxu0 %v1151
        %v1611 = vpop.f32.mrb[0].mxu0
        %v1612 = vadd.f32 0.0, %v1611
        %v1613 = vpop.f32.mrb[0].mxu0
        %v1614 = vadd.f32 0.0, %v1613
        %v1615 = vpop.f32.mrb[0].mxu0
        %v1616 = vadd.f32 0.0, %v1615
        %v1617 = vpop.f32.mrb[0].mxu0
        %v1618 = vadd.f32 0.0, %v1617
        %1619 = vdwg.mxu0
        %1620 = vmatprep.subr.bf16.mxu0 %v1412
        %1621 = vmatpush1.bf16.msra.mxu0 %v1411
        %1622 = vmatprep.subr.bf16.mxu0 %v1414
        %1623 = vmatpush1.bf16.msra.mxu0 %v1413
        %1624 = vmatprep.subr.bf16.mxu0 %v1416
        %1625 = vmatpush1.bf16.msra.mxu0 %v1415
        %1626 = vmatprep.subr.bf16.mxu0 %v1418
        %1627 = vmatpush1.bf16.msra.mxu0 %v1417
        %1628 = vmatprep.subr.bf16.mxu0 %v1420
        %1629 = vmatpush1.bf16.msra.mxu0 %v1419
        %1630 = vmatprep.subr.bf16.mxu0 %v1422
        %1631 = vmatpush1.bf16.msra.mxu0 %v1421
        %1632 = vmatprep.subr.bf16.mxu0 %v1424
        %1633 = vmatpush1.bf16.msra.mxu0 %v1423
        %1634 = vmatprep.subr.bf16.mxu0 %v1426
        %1635 = vmatpush1.bf16.msra.mxu0 %v1425
        %1636 = vmatprep.subr.bf16.mxu0 %v1428
        %1637 = vmatpush1.bf16.msra.mxu0 %v1427
        %1638 = vmatprep.subr.bf16.mxu0 %v1430
        %1639 = vmatpush1.bf16.msra.mxu0 %v1429
        %1640 = vmatprep.subr.bf16.mxu0 %v1432
        %1641 = vmatpush1.bf16.msra.mxu0 %v1431
        %1642 = vmatprep.subr.bf16.mxu0 %v1434
        %1643 = vmatpush1.bf16.msra.mxu0 %v1433
        %1644 = vmatprep.subr.bf16.mxu0 %v1436
        %1645 = vmatpush1.bf16.msra.mxu0 %v1435
        %1646 = vmatprep.subr.bf16.mxu0 %v1438
        %1647 = vmatpush1.bf16.msra.mxu0 %v1437
        %1648 = vmatprep.subr.bf16.mxu0 %v1440
        %1649 = vmatpush1.bf16.msra.mxu0 %v1439
        %1650 = vmatprep.subr.bf16.mxu0 %v1442
        %1651 = vmatpush1.bf16.msra.mxu0 %v1441
        %1652 = vmatprep.mubr.bf16.mxu0 %v1126
        %1653 = vmatmul.mubr.bf16.gmra.mrb[0].mxu0 %v1125
        %v1654 = vpop.f32.mrb[0].mxu0
        %v1655 = vadd.f32 %v1542, %v1654
        %v1656 = vpop.f32.mrb[0].mxu0
        %v1657 = vadd.f32 %v1544, %v1656
        %v1658 = vpop.f32.mrb[0].mxu0
        %v1659 = vadd.f32 %v1546, %v1658
        %v1660 = vpop.f32.mrb[0].mxu0
        %v1661 = vadd.f32 %v1548, %v1660
        %1662 = vmatprep.mubr.bf16.mxu0 %v1130
        %1663 = vmatmul.mubr.bf16.gmra.mrb[0].mxu0 %v1129
        %v1664 = vpop.f32.mrb[0].mxu0
        %v1665 = vadd.f32 %v1552, %v1664
        %v1666 = vpop.f32.mrb[0].mxu0
        %v1667 = vadd.f32 %v1554, %v1666
        %v1668 = vpop.f32.mrb[0].mxu0
        %v1669 = vadd.f32 %v1556, %v1668
        %v1670 = vpop.f32.mrb[0].mxu0
        %v1671 = vadd.f32 %v1558, %v1670
        %1672 = vmatprep.mubr.bf16.mxu0 %v1134
        %1673 = vmatmul.mubr.bf16.gmra.mrb[0].mxu0 %v1133
        %v1674 = vpop.f32.mrb[0].mxu0
        %v1675 = vadd.f32 %v1562, %v1674
        %v1676 = vpop.f32.mrb[0].mxu0
        %v1677 = vadd.f32 %v1564, %v1676
        %v1678 = vpop.f32.mrb[0].mxu0
        %v1679 = vadd.f32 %v1566, %v1678
        %v1680 = vpop.f32.mrb[0].mxu0
        %v1681 = vadd.f32 %v1568, %v1680
        %1682 = vmatprep.mubr.bf16.mxu0 %v1138
        %1683 = vmatmul.mubr.bf16.gmra.mrb[0].mxu0 %v1137
        %v1684 = vpop.f32.mrb[0].mxu0
        %v1685 = vadd.f32 %v1572, %v1684
        %v1686 = vpop.f32.mrb[0].mxu0
        %v1687 = vadd.f32 %v1574, %v1686
        %v1688 = vpop.f32.mrb[0].mxu0
        %v1689 = vadd.f32 %v1576, %v1688
        %v1690 = vpop.f32.mrb[0].mxu0
        %v1691 = vadd.f32 %v1578, %v1690
        %1692 = vmatprep.mubr.bf16.mxu0 %v1142
        %1693 = vmatmul.mubr.bf16.gmra.mrb[0].mxu0 %v1141
        %v1694 = vpop.f32.mrb[0].mxu0
        %v1695 = vadd.f32 %v1582, %v1694
        %v1696 = vpop.f32.mrb[0].mxu0
        %v1697 = vadd.f32 %v1584, %v1696
        %v1698 = vpop.f32.mrb[0].mxu0
        %v1699 = vadd.f32 %v1586, %v1698
        %v1700 = vpop.f32.mrb[0].mxu0
        %v1701 = vadd.f32 %v1588, %v1700
        %1702 = vmatprep.mubr.bf16.mxu0 %v1146
        %1703 = vmatmul.mubr.bf16.gmra.mrb[0].mxu0 %v1145
        %v1704 = vpop.f32.mrb[0].mxu0
        %v1705 = vadd.f32 %v1592, %v1704
        %v1706 = vpop.f32.mrb[0].mxu0
        %v1707 = vadd.f32 %v1594, %v1706
        %v1708 = vpop.f32.mrb[0].mxu0
        %v1709 = vadd.f32 %v1596, %v1708
        %v1710 = vpop.f32.mrb[0].mxu0
        %v1711 = vadd.f32 %v1598, %v1710
        %1712 = vmatprep.mubr.bf16.mxu0 %v1150
        %1713 = vmatmul.mubr.bf16.gmra.mrb[0].mxu0 %v1149
        %v1714 = vpop.f32.mrb[0].mxu0
        %v1715 = vadd.f32 %v1602, %v1714
        %v1716 = vpop.f32.mrb[0].mxu0
        %v1717 = vadd.f32 %v1604, %v1716
        %v1718 = vpop.f32.mrb[0].mxu0
        %v1719 = vadd.f32 %v1606, %v1718
        %v1720 = vpop.f32.mrb[0].mxu0
        %v1721 = vadd.f32 %v1608, %v1720
        %1722 = vmatprep.mubr.bf16.mxu0 %v1154
        %1723 = vmatmul.mubr.bf16.gmra.mrb[0].mxu0 %v1153
        %v1724 = vpop.f32.mrb[0].mxu0
        %v1725 = vadd.f32 %v1612, %v1724
        %v1726 = vpop.f32.mrb[0].mxu0
        %v1727 = vadd.f32 %v1614, %v1726
        %v1728 = vpop.f32.mrb[0].mxu0
        %v1729 = vadd.f32 %v1616, %v1728
        %v1730 = vpop.f32.mrb[0].mxu0
        %v1731 = vadd.f32 %v1618, %v1730
        %1732 = vdwg.mxu0
        %v1733 = vadd.f32 %v1655, %v1659
        %v1734 = vadd.f32 %v1733, %v1665
        %v1735 = vadd.f32 %v1734, %v1669
        %v1736 = vadd.f32 %v1735, %v1675
        %v1737 = vadd.f32 %v1736, %v1679
        %v1738 = vadd.f32 %v1737, %v1685
        %v1739 = vadd.f32 %v1738, %v1689
        %v1740 = vadd.f32 %v1739, %v1695
        %v1741 = vadd.f32 %v1740, %v1699
        %v1742 = vadd.f32 %v1741, %v1705
        %v1743 = vadd.f32 %v1742, %v1709
        %v1744 = vadd.f32 %v1743, %v1715
        %v1745 = vadd.f32 %v1744, %v1719
        %v1746 = vadd.f32 %v1745, %v1725
        %v1747 = vadd.f32 %v1746, %v1729
        %v1748 = vrot.slane %v1747, 4
        %v1749 = vadd.f32 %v1747, %v1748
        %v1750 = vrot.slane %v1749, 2
        %v1751 = vadd.f32 %v1749, %v1750
        %v1752 = vrot.slane %v1751, 1
        %v1753 = vadd.f32 %v1751, %v1752
        %v1754 = vadd.f32 %v1657, %v1661
        %v1755 = vadd.f32 %v1754, %v1667
        %v1756 = vadd.f32 %v1755, %v1671
        %v1757 = vadd.f32 %v1756, %v1677
        %v1758 = vadd.f32 %v1757, %v1681
        %v1759 = vadd.f32 %v1758, %v1687
        %v1760 = vadd.f32 %v1759, %v1691
        %v1761 = vadd.f32 %v1760, %v1697
        %v1762 = vadd.f32 %v1761, %v1701
        %v1763 = vadd.f32 %v1762, %v1707
        %v1764 = vadd.f32 %v1763, %v1711
        %v1765 = vadd.f32 %v1764, %v1717
        %v1766 = vadd.f32 %v1765, %v1721
        %v1767 = vadd.f32 %v1766, %v1727
        %v1768 = vadd.f32 %v1767, %v1731
        %v1769 = vrot.slane %v1768, 4
        %v1770 = vadd.f32 %v1768, %v1769
        %v1771 = vrot.slane %v1770, 2
        %v1772 = vadd.f32 %v1770, %v1771
        %v1773 = vrot.slane %v1772, 1
        %v1774 = vadd.f32 %v1772, %v1773
        %v1775 = vmul.f32 %v1753, 0.0078125
        %v1776 = vmul.f32 %v1774, 0.0078125
        %v1777 = vsub.f32 %v1655, %v1775
        %v1778 = vsub.f32 %v1657, %v1776
        %v1779 = vsub.f32 %v1659, %v1775
        %v1780 = vsub.f32 %v1661, %v1776
        %v1781 = vsub.f32 %v1665, %v1775
        %v1782 = vsub.f32 %v1667, %v1776
        %v1783 = vsub.f32 %v1669, %v1775
        %v1784 = vsub.f32 %v1671, %v1776
        %v1785 = vsub.f32 %v1675, %v1775
        %v1786 = vsub.f32 %v1677, %v1776
        %v1787 = vsub.f32 %v1679, %v1775
        %v1788 = vsub.f32 %v1681, %v1776
        %v1789 = vsub.f32 %v1685, %v1775
        %v1790 = vsub.f32 %v1687, %v1776
        %v1791 = vsub.f32 %v1689, %v1775
        %v1792 = vsub.f32 %v1691, %v1776
        %v1793 = vsub.f32 %v1695, %v1775
        %v1794 = vsub.f32 %v1697, %v1776
        %v1795 = vsub.f32 %v1699, %v1775
        %v1796 = vsub.f32 %v1701, %v1776
        %v1797 = vsub.f32 %v1705, %v1775
        %v1798 = vsub.f32 %v1707, %v1776
        %v1799 = vsub.f32 %v1709, %v1775
        %v1800 = vsub.f32 %v1711, %v1776
        %v1801 = vsub.f32 %v1715, %v1775
        %v1802 = vsub.f32 %v1717, %v1776
        %v1803 = vsub.f32 %v1719, %v1775
        %v1804 = vsub.f32 %v1721, %v1776
        %v1805 = vsub.f32 %v1725, %v1775
        %v1806 = vsub.f32 %v1727, %v1776
        %v1807 = vsub.f32 %v1729, %v1775
        %v1808 = vsub.f32 %v1731, %v1776
        %v1809 = vmul.f32 %v1777, %v1777
        %v1810 = vmul.f32 %v1778, %v1778
        %v1811 = vmul.f32 %v1779, %v1779
        %v1812 = vmul.f32 %v1780, %v1780
        %v1813 = vmul.f32 %v1781, %v1781
        %v1814 = vmul.f32 %v1782, %v1782
        %v1815 = vmul.f32 %v1783, %v1783
        %v1816 = vmul.f32 %v1784, %v1784
        %v1817 = vmul.f32 %v1785, %v1785
        %v1818 = vmul.f32 %v1786, %v1786
        %v1819 = vmul.f32 %v1787, %v1787
        %v1820 = vmul.f32 %v1788, %v1788
        %v1821 = vmul.f32 %v1789, %v1789
        %v1822 = vmul.f32 %v1790, %v1790
        %v1823 = vmul.f32 %v1791, %v1791
        %v1824 = vmul.f32 %v1792, %v1792
        %v1825 = vmul.f32 %v1793, %v1793
        %v1826 = vmul.f32 %v1794, %v1794
        %v1827 = vmul.f32 %v1795, %v1795
        %v1828 = vmul.f32 %v1796, %v1796
        %v1829 = vmul.f32 %v1797, %v1797
        %v1830 = vmul.f32 %v1798, %v1798
        %v1831 = vmul.f32 %v1799, %v1799
        %v1832 = vmul.f32 %v1800, %v1800
        %v1833 = vmul.f32 %v1801, %v1801
        %v1834 = vmul.f32 %v1802, %v1802
        %v1835 = vmul.f32 %v1803, %v1803
        %v1836 = vmul.f32 %v1804, %v1804
        %v1837 = vmul.f32 %v1805, %v1805
        %v1838 = vmul.f32 %v1806, %v1806
        %v1839 = vmul.f32 %v1807, %v1807
        %v1840 = vmul.f32 %v1808, %v1808
        %v1841 = vadd.f32 %v1809, %v1811
        %v1842 = vadd.f32 %v1841, %v1813
        %v1843 = vadd.f32 %v1842, %v1815
        %v1844 = vadd.f32 %v1843, %v1817
        %v1845 = vadd.f32 %v1844, %v1819
        %v1846 = vadd.f32 %v1845, %v1821
        %v1847 = vadd.f32 %v1846, %v1823
        %v1848 = vadd.f32 %v1847, %v1825
        %v1849 = vadd.f32 %v1848, %v1827
        %v1850 = vadd.f32 %v1849, %v1829
        %v1851 = vadd.f32 %v1850, %v1831
        %v1852 = vadd.f32 %v1851, %v1833
        %v1853 = vadd.f32 %v1852, %v1835
        %v1854 = vadd.f32 %v1853, %v1837
        %v1855 = vadd.f32 %v1854, %v1839
        %v1856 = vrot.slane %v1855, 4
        %v1857 = vadd.f32 %v1855, %v1856
        %v1858 = vrot.slane %v1857, 2
        %v1859 = vadd.f32 %v1857, %v1858
        %v1860 = vrot.slane %v1859, 1
        %v1861 = vadd.f32 %v1859, %v1860
        %v1862 = vadd.f32 %v1810, %v1812
        %v1863 = vadd.f32 %v1862, %v1814
        %v1864 = vadd.f32 %v1863, %v1816
        %v1865 = vadd.f32 %v1864, %v1818
        %v1866 = vadd.f32 %v1865, %v1820
        %v1867 = vadd.f32 %v1866, %v1822
        %v1868 = vadd.f32 %v1867, %v1824
        %v1869 = vadd.f32 %v1868, %v1826
        %v1870 = vadd.f32 %v1869, %v1828
        %v1871 = vadd.f32 %v1870, %v1830
        %v1872 = vadd.f32 %v1871, %v1832
        %v1873 = vadd.f32 %v1872, %v1834
        %v1874 = vadd.f32 %v1873, %v1836
        %v1875 = vadd.f32 %v1874, %v1838
        %v1876 = vadd.f32 %v1875, %v1840
        %v1877 = vrot.slane %v1876, 4
        %v1878 = vadd.f32 %v1876, %v1877
        %v1879 = vrot.slane %v1878, 2
        %v1880 = vadd.f32 %v1878, %v1879
        %v1881 = vrot.slane %v1880, 1
        %v1882 = vadd.f32 %v1880, %v1881
        %v1883 = vmul.f32 %v1861, 0.0078125
        %v1884 = vmul.f32 %v1882, 0.0078125
        %v1885 = vadd.f32 %v1883, 1e-05
        %v1886 = vadd.f32 %v1884, 1e-05
        %v1887 = vrsqrt.pop %v1885
        %v1888 = vrsqrt.pop %v1886
        %v1889 = vmul.f32 %v1777, %v1887
        %v1890 = vmul.f32 %v1778, %v1888
        %v1891 = vmul.f32 %v1779, %v1887
        %v1892 = vmul.f32 %v1780, %v1888
        %v1893 = vmul.f32 %v1781, %v1887
        %v1894 = vmul.f32 %v1782, %v1888
        %v1895 = vmul.f32 %v1783, %v1887
        %v1896 = vmul.f32 %v1784, %v1888
        %v1897 = vmul.f32 %v1785, %v1887
        %v1898 = vmul.f32 %v1786, %v1888
        %v1899 = vmul.f32 %v1787, %v1887
        %v1900 = vmul.f32 %v1788, %v1888
        %v1901 = vmul.f32 %v1789, %v1887
        %v1902 = vmul.f32 %v1790, %v1888
        %v1903 = vmul.f32 %v1791, %v1887
        %v1904 = vmul.f32 %v1792, %v1888
        %v1905 = vmul.f32 %v1793, %v1887
        %v1906 = vmul.f32 %v1794, %v1888
        %v1907 = vmul.f32 %v1795, %v1887
        %v1908 = vmul.f32 %v1796, %v1888
        %v1909 = vmul.f32 %v1797, %v1887
        %v1910 = vmul.f32 %v1798, %v1888
        %v1911 = vmul.f32 %v1799, %v1887
        %v1912 = vmul.f32 %v1800, %v1888
        %v1913 = vmul.f32 %v1801, %v1887
        %v1914 = vmul.f32 %v1802, %v1888
        %v1915 = vmul.f32 %v1803, %v1887
        %v1916 = vmul.f32 %v1804, %v1888
        %v1917 = vmul.f32 %v1805, %v1887
        %v1918 = vmul.f32 %v1806, %v1888
        %v1919 = vmul.f32 %v1807, %v1887
        %v1920 = vmul.f32 %v1808, %v1888
        %v1922 = vlaneseq
        %v1923 = vshrl.u32 %v1922, 7
        %v1924 = vsub.s32 0, %v1923
        %v1925 = vrot.slane %v1025, %v1924
        %v1926 = vlaneseq
        %v1927 = vshrl.u32 %v1926, 7
        %v1928 = vsub.s32 1, %v1927
        %v1929 = vrot.slane %v1025, %v1928
        %v1932 = vmul.f32 %v1889, %v1925
        %v1933 = vmul.f32 %v1890, %v1929
        %v1934 = vmul.f32 %v1891, %v1925
        %v1935 = vmul.f32 %v1892, %v1929
        %v1936 = vmul.f32 %v1893, %v1925
        %v1937 = vmul.f32 %v1894, %v1929
        %v1938 = vmul.f32 %v1895, %v1925
        %v1939 = vmul.f32 %v1896, %v1929
        %v1940 = vmul.f32 %v1897, %v1925
        %v1941 = vmul.f32 %v1898, %v1929
        %v1942 = vmul.f32 %v1899, %v1925
        %v1943 = vmul.f32 %v1900, %v1929
        %v1944 = vmul.f32 %v1901, %v1925
        %v1945 = vmul.f32 %v1902, %v1929
        %v1946 = vmul.f32 %v1903, %v1925
        %v1947 = vmul.f32 %v1904, %v1929
        %v1948 = vmul.f32 %v1905, %v1925
        %v1949 = vmul.f32 %v1906, %v1929
        %v1950 = vmul.f32 %v1907, %v1925
        %v1951 = vmul.f32 %v1908, %v1929
        %v1952 = vmul.f32 %v1909, %v1925
        %v1953 = vmul.f32 %v1910, %v1929
        %v1954 = vmul.f32 %v1911, %v1925
        %v1955 = vmul.f32 %v1912, %v1929
        %v1956 = vmul.f32 %v1913, %v1925
        %v1957 = vmul.f32 %v1914, %v1929
        %v1958 = vmul.f32 %v1915, %v1925
        %v1959 = vmul.f32 %v1916, %v1929
        %v1960 = vmul.f32 %v1917, %v1925
        %v1961 = vmul.f32 %v1918, %v1929
        %v1962 = vmul.f32 %v1919, %v1925
        %v1963 = vmul.f32 %v1920, %v1929
        %v1965 = vlaneseq
        %v1966 = vshrl.u32 %v1965, 7
        %v1967 = vsub.s32 0, %v1966
        %v1968 = vrot.slane %v1026, %v1967
        %v1969 = vlaneseq
        %v1970 = vshrl.u32 %v1969, 7
        %v1971 = vsub.s32 1, %v1970
        %v1972 = vrot.slane %v1026, %v1971
        %v1975 = vadd.f32 %v1932, %v1968
        %v1976 = vadd.f32 %v1933, %v1972
        %v1977 = vadd.f32 %v1934, %v1968
        %v1978 = vadd.f32 %v1935, %v1972
        %v1979 = vadd.f32 %v1936, %v1968
        %v1980 = vadd.f32 %v1937, %v1972
        %v1981 = vadd.f32 %v1938, %v1968
        %v1982 = vadd.f32 %v1939, %v1972
        %v1983 = vadd.f32 %v1940, %v1968
        %v1984 = vadd.f32 %v1941, %v1972
        %v1985 = vadd.f32 %v1942, %v1968
        %v1986 = vadd.f32 %v1943, %v1972
        %v1987 = vadd.f32 %v1944, %v1968
        %v1988 = vadd.f32 %v1945, %v1972
        %v1989 = vadd.f32 %v1946, %v1968
        %v1990 = vadd.f32 %v1947, %v1972
        %v1991 = vadd.f32 %v1948, %v1968
        %v1992 = vadd.f32 %v1949, %v1972
        %v1993 = vadd.f32 %v1950, %v1968
        %v1994 = vadd.f32 %v1951, %v1972
        %v1995 = vadd.f32 %v1952, %v1968
        %v1996 = vadd.f32 %v1953, %v1972
        %v1997 = vadd.f32 %v1954, %v1968
        %v1998 = vadd.f32 %v1955, %v1972
        %v1999 = vadd.f32 %v1956, %v1968
        %v2000 = vadd.f32 %v1957, %v1972
        %v2001 = vadd.f32 %v1958, %v1968
        %v2002 = vadd.f32 %v1959, %v1972
        %v2003 = vadd.f32 %v1960, %v1968
        %v2004 = vadd.f32 %v1961, %v1972
        %v2005 = vadd.f32 %v1962, %v1968
        %v2006 = vadd.f32 %v1963, %v1972
        %v2007 = vmax.f32 %v1975, 0.0
        %v2008 = vmax.f32 %v1976, 0.0
        %v2009 = vmax.f32 %v1977, 0.0
        %v2010 = vmax.f32 %v1978, 0.0
        %v2011 = vmax.f32 %v1979, 0.0
        %v2012 = vmax.f32 %v1980, 0.0
        %v2013 = vmax.f32 %v1981, 0.0
        %v2014 = vmax.f32 %v1982, 0.0
        %v2015 = vmax.f32 %v1983, 0.0
        %v2016 = vmax.f32 %v1984, 0.0
        %v2017 = vmax.f32 %v1985, 0.0
        %v2018 = vmax.f32 %v1986, 0.0
        %v2019 = vmax.f32 %v1987, 0.0
        %v2020 = vmax.f32 %v1988, 0.0
        %v2021 = vmax.f32 %v1989, 0.0
        %v2022 = vmax.f32 %v1990, 0.0
        %v2023 = vmax.f32 %v1991, 0.0
        %v2024 = vmax.f32 %v1992, 0.0
        %v2025 = vmax.f32 %v1993, 0.0
        %v2026 = vmax.f32 %v1994, 0.0
        %v2027 = vmax.f32 %v1995, 0.0
        %v2028 = vmax.f32 %v1996, 0.0
        %v2029 = vmax.f32 %v1997, 0.0
        %v2030 = vmax.f32 %v1998, 0.0
        %v2031 = vmax.f32 %v1999, 0.0
        %v2032 = vmax.f32 %v2000, 0.0
        %v2033 = vmax.f32 %v2001, 0.0
        %v2034 = vmax.f32 %v2002, 0.0
        %v2035 = vmax.f32 %v2003, 0.0
        %v2036 = vmax.f32 %v2004, 0.0
        %v2037 = vmax.f32 %v2005, 0.0
        %v2038 = vmax.f32 %v2006, 0.0
        %v2039 = vld [vmem:[#allocation8] sm:$0xf]
        %v2040 = vld [vmem:[#allocation8 + $0x4] sm:$0xf]
        %v2041 = vld [vmem:[#allocation8 + $0x8] sm:$0xf]
        %v2042 = vld [vmem:[#allocation8 + $0xc] sm:$0xf]
        %v2043 = vld [vmem:[#allocation8 + $0x10] sm:$0xf]
        %v2044 = vld [vmem:[#allocation8 + $0x14] sm:$0xf]
        %v2045 = vld [vmem:[#allocation8 + $0x18] sm:$0xf]
        %v2046 = vld [vmem:[#allocation8 + $0x1c] sm:$0xf]
        %v2047 = vld [vmem:[#allocation8 + $0x20] sm:$0xf]
        %v2048 = vld [vmem:[#allocation8 + $0x24] sm:$0xf]
        %v2049 = vld [vmem:[#allocation8 + $0x28] sm:$0xf]
        %v2050 = vld [vmem:[#allocation8 + $0x2c] sm:$0xf]
        %v2051 = vld [vmem:[#allocation8 + $0x30] sm:$0xf]
        %v2052 = vld [vmem:[#allocation8 + $0x34] sm:$0xf]
        %v2053 = vld [vmem:[#allocation8 + $0x38] sm:$0xf]
        %v2054 = vld [vmem:[#allocation8 + $0x3c] sm:$0xf]
        %v2055 = vld [vmem:[#allocation8 + $0x40] sm:$0xf]
        %v2056 = vld [vmem:[#allocation8 + $0x44] sm:$0xf]
        %v2057 = vld [vmem:[#allocation8 + $0x48] sm:$0xf]
        %v2058 = vld [vmem:[#allocation8 + $0x4c] sm:$0xf]
        %v2059 = vld [vmem:[#allocation8 + $0x50] sm:$0xf]
        %v2060 = vld [vmem:[#allocation8 + $0x54] sm:$0xf]
        %v2061 = vld [vmem:[#allocation8 + $0x58] sm:$0xf]
        %v2062 = vld [vmem:[#allocation8 + $0x5c] sm:$0xf]
        %v2063 = vld [vmem:[#allocation8 + $0x60] sm:$0xf]
        %v2064 = vld [vmem:[#allocation8 + $0x64] sm:$0xf]
        %v2065 = vld [vmem:[#allocation8 + $0x68] sm:$0xf]
        %v2066 = vld [vmem:[#allocation8 + $0x6c] sm:$0xf]
        %v2067 = vld [vmem:[#allocation8 + $0x70] sm:$0xf]
        %v2068 = vld [vmem:[#allocation8 + $0x74] sm:$0xf]
        %v2069 = vld [vmem:[#allocation8 + $0x78] sm:$0xf]
        %v2070 = vld [vmem:[#allocation8 + $0x7c] sm:$0xf]
        %v2071 = vld [vmem:[%s6] sm:$0x1]
        %v2072 = vld [vmem:[%s7] sm:$0x1]
        %v2073 = vpack.c.bf16 %v2009, %v2007
        %v2074 = vpack.c.bf16 %v2010, %v2008
        %v2075 = vpack.c.bf16 %v2013, %v2011
        %v2076 = vpack.c.bf16 %v2014, %v2012
        %v2077 = vpack.c.bf16 %v2017, %v2015
        %v2078 = vpack.c.bf16 %v2018, %v2016
        %v2079 = vpack.c.bf16 %v2021, %v2019
        %v2080 = vpack.c.bf16 %v2022, %v2020
        %v2081 = vpack.c.bf16 %v2025, %v2023
        %v2082 = vpack.c.bf16 %v2026, %v2024
        %v2083 = vpack.c.bf16 %v2029, %v2027
        %v2084 = vpack.c.bf16 %v2030, %v2028
        %v2085 = vpack.c.bf16 %v2033, %v2031
        %v2086 = vpack.c.bf16 %v2034, %v2032
        %v2087 = vpack.c.bf16 %v2037, %v2035
        %v2088 = vpack.c.bf16 %v2038, %v2036
        %v2121 = vunpack.c.l.b16 %v2039
        %v2122 = vunpack.c.l.b16 %v2040
        %v2123 = vunpack.c.l.b16 %v2041
        %v2124 = vunpack.c.l.b16 %v2042
        %v2125 = vunpack.c.l.b16 %v2043
        %v2126 = vunpack.c.l.b16 %v2044
        %v2127 = vunpack.c.l.b16 %v2045
        %v2128 = vunpack.c.l.b16 %v2046
        %v2129 = vunpack.c.l.b16 %v2047
        %v2130 = vunpack.c.l.b16 %v2048
        %v2131 = vunpack.c.l.b16 %v2049
        %v2132 = vunpack.c.l.b16 %v2050
        %v2133 = vunpack.c.l.b16 %v2051
        %v2134 = vunpack.c.l.b16 %v2052
        %v2135 = vunpack.c.l.b16 %v2053
        %v2136 = vunpack.c.l.b16 %v2054
        %v2137 = vunpack.c.l.b16 %v2055
        %v2138 = vunpack.c.l.b16 %v2056
        %v2139 = vunpack.c.l.b16 %v2057
        %v2140 = vunpack.c.l.b16 %v2058
        %v2141 = vunpack.c.l.b16 %v2059
        %v2142 = vunpack.c.l.b16 %v2060
        %v2143 = vunpack.c.l.b16 %v2061
        %v2144 = vunpack.c.l.b16 %v2062
        %v2145 = vunpack.c.l.b16 %v2063
        %v2146 = vunpack.c.l.b16 %v2064
        %v2147 = vunpack.c.l.b16 %v2065
        %v2148 = vunpack.c.l.b16 %v2066
        %v2149 = vunpack.c.l.b16 %v2067
        %v2150 = vunpack.c.l.b16 %v2068
        %v2151 = vunpack.c.l.b16 %v2069
        %v2152 = vunpack.c.l.b16 %v2070
        %v2153 = vpack.c.b16 %v2122, %v2121
        %v2154 = vpack.c.b16 %v2124, %v2123
        %v2155 = vpack.c.b16 %v2126, %v2125
        %v2156 = vpack.c.b16 %v2128, %v2127
        %v2157 = vpack.c.b16 %v2130, %v2129
        %v2158 = vpack.c.b16 %v2132, %v2131
        %v2159 = vpack.c.b16 %v2134, %v2133
        %v2160 = vpack.c.b16 %v2136, %v2135
        %v2161 = vpack.c.b16 %v2138, %v2137
        %v2162 = vpack.c.b16 %v2140, %v2139
        %v2163 = vpack.c.b16 %v2142, %v2141
        %v2164 = vpack.c.b16 %v2144, %v2143
        %v2165 = vpack.c.b16 %v2146, %v2145
        %v2166 = vpack.c.b16 %v2148, %v2147
        %v2167 = vpack.c.b16 %v2150, %v2149
        %v2168 = vpack.c.b16 %v2152, %v2151
        %2185 = vmatprep.subr.bf16.mxu0 0
        %2186 = vmatpush1.bf16.msra.mxu0 %v2153
        %2187 = vmatprep.subr.bf16.mxu0 0
        %2188 = vmatpush1.bf16.msra.mxu0 %v2154
        %2189 = vmatprep.subr.bf16.mxu0 0
        %2190 = vmatpush1.bf16.msra.mxu0 %v2155
        %2191 = vmatprep.subr.bf16.mxu0 0
        %2192 = vmatpush1.bf16.msra.mxu0 %v2156
        %2193 = vmatprep.subr.bf16.mxu0 0
        %2194 = vmatpush1.bf16.msra.mxu0 %v2157
        %2195 = vmatprep.subr.bf16.mxu0 0
        %2196 = vmatpush1.bf16.msra.mxu0 %v2158
        %2197 = vmatprep.subr.bf16.mxu0 0
        %2198 = vmatpush1.bf16.msra.mxu0 %v2159
        %2199 = vmatprep.subr.bf16.mxu0 0
        %2200 = vmatpush1.bf16.msra.mxu0 %v2160
        %2201 = vmatprep.subr.bf16.mxu0 0
        %2202 = vmatpush1.bf16.msra.mxu0 %v2161
        %2203 = vmatprep.subr.bf16.mxu0 0
        %2204 = vmatpush1.bf16.msra.mxu0 %v2162
        %2205 = vmatprep.subr.bf16.mxu0 0
        %2206 = vmatpush1.bf16.msra.mxu0 %v2163
        %2207 = vmatprep.subr.bf16.mxu0 0
        %2208 = vmatpush1.bf16.msra.mxu0 %v2164
        %2209 = vmatprep.subr.bf16.mxu0 0
        %2210 = vmatpush1.bf16.msra.mxu0 %v2165
        %2211 = vmatprep.subr.bf16.mxu0 0
        %2212 = vmatpush1.bf16.msra.mxu0 %v2166
        %2213 = vmatprep.subr.bf16.mxu0 0
        %2214 = vmatpush1.bf16.msra.mxu0 %v2167
        %2215 = vmatprep.subr.bf16.mxu0 0
        %2216 = vmatpush1.bf16.msra.mxu0 %v2168
        %2217 = vmatprep.mubr.bf16.mxu0 %v2074
        %2218 = vmatmul.mubr.bf16.gmra.mrb[0].mxu0 %v2073
        %v2219 = vpop.f32.mrb[0].mxu0
        %v2220 = vadd.f32 0.0, %v2219
        %v2221 = vpop.f32.mrb[0].mxu0
        %v2222 = vpop.f32.mrb[0].mxu0
        %v2223 = vadd.f32 0.0, %v2222
        %v2224 = vpop.f32.mrb[0].mxu0
        %2225 = vmatprep.mubr.bf16.mxu0 %v2076
        %2226 = vmatmul.mubr.bf16.gmra.mrb[0].mxu0 %v2075
        %v2227 = vpop.f32.mrb[0].mxu0
        %v2228 = vadd.f32 0.0, %v2227
        %v2229 = vpop.f32.mrb[0].mxu0
        %v2230 = vpop.f32.mrb[0].mxu0
        %v2231 = vadd.f32 0.0, %v2230
        %v2232 = vpop.f32.mrb[0].mxu0
        %2233 = vmatprep.mubr.bf16.mxu0 %v2078
        %2234 = vmatmul.mubr.bf16.gmra.mrb[0].mxu0 %v2077
        %v2235 = vpop.f32.mrb[0].mxu0
        %v2236 = vadd.f32 0.0, %v2235
        %v2237 = vpop.f32.mrb[0].mxu0
        %v2238 = vpop.f32.mrb[0].mxu0
        %v2239 = vadd.f32 0.0, %v2238
        %v2240 = vpop.f32.mrb[0].mxu0
        %2241 = vmatprep.mubr.bf16.mxu0 %v2080
        %2242 = vmatmul.mubr.bf16.gmra.mrb[0].mxu0 %v2079
        %v2243 = vpop.f32.mrb[0].mxu0
        %v2244 = vadd.f32 0.0, %v2243
        %v2245 = vpop.f32.mrb[0].mxu0
        %v2246 = vpop.f32.mrb[0].mxu0
        %v2247 = vadd.f32 0.0, %v2246
        %v2248 = vpop.f32.mrb[0].mxu0
        %2249 = vmatprep.mubr.bf16.mxu0 %v2082
        %2250 = vmatmul.mubr.bf16.gmra.mrb[0].mxu0 %v2081
        %v2251 = vpop.f32.mrb[0].mxu0
        %v2252 = vadd.f32 0.0, %v2251
        %v2253 = vpop.f32.mrb[0].mxu0
        %v2254 = vpop.f32.mrb[0].mxu0
        %v2255 = vadd.f32 0.0, %v2254
        %v2256 = vpop.f32.mrb[0].mxu0
        %2257 = vmatprep.mubr.bf16.mxu0 %v2084
        %2258 = vmatmul.mubr.bf16.gmra.mrb[0].mxu0 %v2083
        %v2259 = vpop.f32.mrb[0].mxu0
        %v2260 = vadd.f32 0.0, %v2259
        %v2261 = vpop.f32.mrb[0].mxu0
        %v2262 = vpop.f32.mrb[0].mxu0
        %v2263 = vadd.f32 0.0, %v2262
        %v2264 = vpop.f32.mrb[0].mxu0
        %2265 = vmatprep.mubr.bf16.mxu0 %v2086
        %2266 = vmatmul.mubr.bf16.gmra.mrb[0].mxu0 %v2085
        %v2267 = vpop.f32.mrb[0].mxu0
        %v2268 = vadd.f32 0.0, %v2267
        %v2269 = vpop.f32.mrb[0].mxu0
        %v2270 = vpop.f32.mrb[0].mxu0
        %v2271 = vadd.f32 0.0, %v2270
        %v2272 = vpop.f32.mrb[0].mxu0
        %2273 = vmatprep.mubr.bf16.mxu0 %v2088
        %2274 = vmatmul.mubr.bf16.gmra.mrb[0].mxu0 %v2087
        %v2275 = vpop.f32.mrb[0].mxu0
        %v2276 = vadd.f32 0.0, %v2275
        %v2277 = vpop.f32.mrb[0].mxu0
        %v2278 = vpop.f32.mrb[0].mxu0
        %v2279 = vadd.f32 0.0, %v2278
        %v2280 = vpop.f32.mrb[0].mxu0
        %2281 = vdwg.mxu0
        %v2282 = vadd.f32 %v2220, %v2223
        %v2283 = vadd.f32 %v2282, %v2228
        %v2284 = vadd.f32 %v2283, %v2231
        %v2285 = vadd.f32 %v2284, %v2236
        %v2286 = vadd.f32 %v2285, %v2239
        %v2287 = vadd.f32 %v2286, %v2244
        %v2288 = vadd.f32 %v2287, %v2247
        %v2289 = vadd.f32 %v2288, %v2252
        %v2290 = vadd.f32 %v2289, %v2255
        %v2291 = vadd.f32 %v2290, %v2260
        %v2292 = vadd.f32 %v2291, %v2263
        %v2293 = vadd.f32 %v2292, %v2268
        %v2294 = vadd.f32 %v2293, %v2271
        %v2295 = vadd.f32 %v2294, %v2276
        %v2296 = vadd.f32 %v2295, %v2279
        %v2297 = vrot.slane %v2296, 4
        %v2298 = vadd.f32 %v2296, %v2297
        %v2299 = vrot.slane %v2298, 2
        %v2300 = vadd.f32 %v2298, %v2299
        %v2301 = vrot.slane %v2300, 1
        %v2302 = vadd.f32 %v2300, %v2301
        %v2303 = vmul.f32 %v2302, 0.0078125
        %v2304 = vsub.f32 %v2220, %v2303
        %v2305 = vsub.f32 %v2223, %v2303
        %v2306 = vsub.f32 %v2228, %v2303
        %v2307 = vsub.f32 %v2231, %v2303
        %v2308 = vsub.f32 %v2236, %v2303
        %v2309 = vsub.f32 %v2239, %v2303
        %v2310 = vsub.f32 %v2244, %v2303
        %v2311 = vsub.f32 %v2247, %v2303
        %v2312 = vsub.f32 %v2252, %v2303
        %v2313 = vsub.f32 %v2255, %v2303
        %v2314 = vsub.f32 %v2260, %v2303
        %v2315 = vsub.f32 %v2263, %v2303
        %v2316 = vsub.f32 %v2268, %v2303
        %v2317 = vsub.f32 %v2271, %v2303
        %v2318 = vsub.f32 %v2276, %v2303
        %v2319 = vsub.f32 %v2279, %v2303
        %v2320 = vmul.f32 %v2304, %v2304
        %v2321 = vmul.f32 %v2305, %v2305
        %v2322 = vmul.f32 %v2306, %v2306
        %v2323 = vmul.f32 %v2307, %v2307
        %v2324 = vmul.f32 %v2308, %v2308
        %v2325 = vmul.f32 %v2309, %v2309
        %v2326 = vmul.f32 %v2310, %v2310
        %v2327 = vmul.f32 %v2311, %v2311
        %v2328 = vmul.f32 %v2312, %v2312
        %v2329 = vmul.f32 %v2313, %v2313
        %v2330 = vmul.f32 %v2314, %v2314
        %v2331 = vmul.f32 %v2315, %v2315
        %v2332 = vmul.f32 %v2316, %v2316
        %v2333 = vmul.f32 %v2317, %v2317
        %v2334 = vmul.f32 %v2318, %v2318
        %v2335 = vmul.f32 %v2319, %v2319
        %v2336 = vadd.f32 %v2320, %v2321
        %v2337 = vadd.f32 %v2336, %v2322
        %v2338 = vadd.f32 %v2337, %v2323
        %v2339 = vadd.f32 %v2338, %v2324
        %v2340 = vadd.f32 %v2339, %v2325
        %v2341 = vadd.f32 %v2340, %v2326
        %v2342 = vadd.f32 %v2341, %v2327
        %v2343 = vadd.f32 %v2342, %v2328
        %v2344 = vadd.f32 %v2343, %v2329
        %v2345 = vadd.f32 %v2344, %v2330
        %v2346 = vadd.f32 %v2345, %v2331
        %v2347 = vadd.f32 %v2346, %v2332
        %v2348 = vadd.f32 %v2347, %v2333
        %v2349 = vadd.f32 %v2348, %v2334
        %v2350 = vadd.f32 %v2349, %v2335
        %v2351 = vrot.slane %v2350, 4
        %v2352 = vadd.f32 %v2350, %v2351
        %v2353 = vrot.slane %v2352, 2
        %v2354 = vadd.f32 %v2352, %v2353
        %v2355 = vrot.slane %v2354, 1
        %v2356 = vadd.f32 %v2354, %v2355
        %v2357 = vmul.f32 %v2356, 0.0078125
        %v2358 = vadd.f32 %v2357, 1e-05
        %v2359 = vrsqrt.pop %v2358
        %v2360 = vmul.f32 %v2304, %v2359
        %v2361 = vmul.f32 %v2305, %v2359
        %v2362 = vmul.f32 %v2306, %v2359
        %v2363 = vmul.f32 %v2307, %v2359
        %v2364 = vmul.f32 %v2308, %v2359
        %v2365 = vmul.f32 %v2309, %v2359
        %v2366 = vmul.f32 %v2310, %v2359
        %v2367 = vmul.f32 %v2311, %v2359
        %v2368 = vmul.f32 %v2312, %v2359
        %v2369 = vmul.f32 %v2313, %v2359
        %v2370 = vmul.f32 %v2314, %v2359
        %v2371 = vmul.f32 %v2315, %v2359
        %v2372 = vmul.f32 %v2316, %v2359
        %v2373 = vmul.f32 %v2317, %v2359
        %v2374 = vmul.f32 %v2318, %v2359
        %v2375 = vmul.f32 %v2319, %v2359
        %v2377 = vlaneseq
        %v2378 = vshrl.u32 %v2377, 7
        %v2379 = vsub.s32 0, %v2378
        %v2380 = vrot.slane %v2071, %v2379
        %v2382 = vmul.f32 %v2360, %v2380
        %v2383 = vmul.f32 %v2361, %v2380
        %v2384 = vmul.f32 %v2362, %v2380
        %v2385 = vmul.f32 %v2363, %v2380
        %v2386 = vmul.f32 %v2364, %v2380
        %v2387 = vmul.f32 %v2365, %v2380
        %v2388 = vmul.f32 %v2366, %v2380
        %v2389 = vmul.f32 %v2367, %v2380
        %v2390 = vmul.f32 %v2368, %v2380
        %v2391 = vmul.f32 %v2369, %v2380
        %v2392 = vmul.f32 %v2370, %v2380
        %v2393 = vmul.f32 %v2371, %v2380
        %v2394 = vmul.f32 %v2372, %v2380
        %v2395 = vmul.f32 %v2373, %v2380
        %v2396 = vmul.f32 %v2374, %v2380
        %v2397 = vmul.f32 %v2375, %v2380
        %v2399 = vlaneseq
        %v2400 = vshrl.u32 %v2399, 7
        %v2401 = vsub.s32 0, %v2400
        %v2402 = vrot.slane %v2072, %v2401
        %v2404 = vadd.f32 %v2382, %v2402
        %v2405 = vadd.f32 %v2383, %v2402
        %v2406 = vadd.f32 %v2384, %v2402
        %v2407 = vadd.f32 %v2385, %v2402
        %v2408 = vadd.f32 %v2386, %v2402
        %v2409 = vadd.f32 %v2387, %v2402
        %v2410 = vadd.f32 %v2388, %v2402
        %v2411 = vadd.f32 %v2389, %v2402
        %v2412 = vadd.f32 %v2390, %v2402
        %v2413 = vadd.f32 %v2391, %v2402
        %v2414 = vadd.f32 %v2392, %v2402
        %v2415 = vadd.f32 %v2393, %v2402
        %v2416 = vadd.f32 %v2394, %v2402
        %v2417 = vadd.f32 %v2395, %v2402
        %v2418 = vadd.f32 %v2396, %v2402
        %v2419 = vadd.f32 %v2397, %v2402
        %v2420 = vmax.f32 %v2404, 0.0
        %v2421 = vmax.f32 %v2405, 0.0
        %v2422 = vmax.f32 %v2406, 0.0
        %v2423 = vmax.f32 %v2407, 0.0
        %v2424 = vmax.f32 %v2408, 0.0
        %v2425 = vmax.f32 %v2409, 0.0
        %v2426 = vmax.f32 %v2410, 0.0
        %v2427 = vmax.f32 %v2411, 0.0
        %v2428 = vmax.f32 %v2412, 0.0
        %v2429 = vmax.f32 %v2413, 0.0
        %v2430 = vmax.f32 %v2414, 0.0
        %v2431 = vmax.f32 %v2415, 0.0
        %v2432 = vmax.f32 %v2416, 0.0
        %v2433 = vmax.f32 %v2417, 0.0
        %v2434 = vmax.f32 %v2418, 0.0
        %v2435 = vmax.f32 %v2419, 0.0
        %v2436 = vld [vmem:[#allocation10] sm:$0xff]
        %v2437 = vld [vmem:[#allocation10 + $0x8] sm:$0xff]
        %v2438 = vld [vmem:[#allocation10 + $0x10] sm:$0xff]
        %v2439 = vld [vmem:[#allocation10 + $0x18] sm:$0xff]
        %v2440 = vld [vmem:[#allocation10 + $0x20] sm:$0xff]
        %v2441 = vld [vmem:[#allocation10 + $0x28] sm:$0xff]
        %v2442 = vld [vmem:[#allocation10 + $0x30] sm:$0xff]
        %v2443 = vld [vmem:[#allocation10 + $0x38] sm:$0xff]
        %v2444 = vld [vmem:[#allocation10 + $0x40] sm:$0xff]
        %v2445 = vld [vmem:[#allocation10 + $0x48] sm:$0xff]
        %v2446 = vld [vmem:[#allocation10 + $0x50] sm:$0xff]
        %v2447 = vld [vmem:[#allocation10 + $0x58] sm:$0xff]
        %v2448 = vld [vmem:[#allocation10 + $0x60] sm:$0xff]
        %v2449 = vld [vmem:[#allocation10 + $0x68] sm:$0xff]
        %v2450 = vld [vmem:[#allocation10 + $0x70] sm:$0xff]
        %v2451 = vld [vmem:[#allocation10 + $0x78] sm:$0xff]
        %v2452 = vld [vmem:[%s9] sm:$0x3]
        %v2453 = vld [vmem:[%s10] sm:$0x3]
        %v2454 = vpack.c.bf16 %v2421, %v2420
        %v2455 = vpack.c.bf16 %v2423, %v2422
        %v2456 = vpack.c.bf16 %v2425, %v2424
        %v2457 = vpack.c.bf16 %v2427, %v2426
        %v2458 = vpack.c.bf16 %v2429, %v2428
        %v2459 = vpack.c.bf16 %v2431, %v2430
        %v2460 = vpack.c.bf16 %v2433, %v2432
        %v2461 = vpack.c.bf16 %v2435, %v2434
        %v2478 = vunpack.c.l.b16 %v2436
        %v2479 = vunpack.c.h.b16 %v2436
        %v2480 = vunpack.c.l.b16 %v2437
        %v2481 = vunpack.c.h.b16 %v2437
        %v2482 = vunpack.c.l.b16 %v2438
        %v2483 = vunpack.c.h.b16 %v2438
        %v2484 = vunpack.c.l.b16 %v2439
        %v2485 = vunpack.c.h.b16 %v2439
        %v2486 = vunpack.c.l.b16 %v2440
        %v2487 = vunpack.c.h.b16 %v2440
        %v2488 = vunpack.c.l.b16 %v2441
        %v2489 = vunpack.c.h.b16 %v2441
        %v2490 = vunpack.c.l.b16 %v2442
        %v2491 = vunpack.c.h.b16 %v2442
        %v2492 = vunpack.c.l.b16 %v2443
        %v2493 = vunpack.c.h.b16 %v2443
        %v2494 = vunpack.c.l.b16 %v2444
        %v2495 = vunpack.c.h.b16 %v2444
        %v2496 = vunpack.c.l.b16 %v2445
        %v2497 = vunpack.c.h.b16 %v2445
        %v2498 = vunpack.c.l.b16 %v2446
        %v2499 = vunpack.c.h.b16 %v2446
        %v2500 = vunpack.c.l.b16 %v2447
        %v2501 = vunpack.c.h.b16 %v2447
        %v2502 = vunpack.c.l.b16 %v2448
        %v2503 = vunpack.c.h.b16 %v2448
        %v2504 = vunpack.c.l.b16 %v2449
        %v2505 = vunpack.c.h.b16 %v2449
        %v2506 = vunpack.c.l.b16 %v2450
        %v2507 = vunpack.c.h.b16 %v2450
        %v2508 = vunpack.c.l.b16 %v2451
        %v2509 = vunpack.c.h.b16 %v2451
        %v2510 = vpack.c.b16 %v2480, %v2478
        %v2511 = vpack.c.b16 %v2481, %v2479
        %v2512 = vpack.c.b16 %v2484, %v2482
        %v2513 = vpack.c.b16 %v2485, %v2483
        %v2514 = vpack.c.b16 %v2488, %v2486
        %v2515 = vpack.c.b16 %v2489, %v2487
        %v2516 = vpack.c.b16 %v2492, %v2490
        %v2517 = vpack.c.b16 %v2493, %v2491
        %v2518 = vpack.c.b16 %v2496, %v2494
        %v2519 = vpack.c.b16 %v2497, %v2495
        %v2520 = vpack.c.b16 %v2500, %v2498
        %v2521 = vpack.c.b16 %v2501, %v2499
        %v2522 = vpack.c.b16 %v2504, %v2502
        %v2523 = vpack.c.b16 %v2505, %v2503
        %v2524 = vpack.c.b16 %v2508, %v2506
        %v2525 = vpack.c.b16 %v2509, %v2507
        %2542 = vmatprep.subr.bf16.mxu0 %v2511
        %2543 = vmatpush1.bf16.msra.mxu0 %v2510
        %2544 = vmatprep.subr.bf16.mxu0 %v2513
        %2545 = vmatpush1.bf16.msra.mxu0 %v2512
        %2546 = vmatprep.subr.bf16.mxu0 %v2515
        %2547 = vmatpush1.bf16.msra.mxu0 %v2514
        %2548 = vmatprep.subr.bf16.mxu0 %v2517
        %2549 = vmatpush1.bf16.msra.mxu0 %v2516
        %2550 = vmatprep.subr.bf16.mxu0 %v2519
        %2551 = vmatpush1.bf16.msra.mxu0 %v2518
        %2552 = vmatprep.subr.bf16.mxu0 %v2521
        %2553 = vmatpush1.bf16.msra.mxu0 %v2520
        %2554 = vmatprep.subr.bf16.mxu0 %v2523
        %2555 = vmatpush1.bf16.msra.mxu0 %v2522
        %2556 = vmatprep.subr.bf16.mxu0 %v2525
        %2557 = vmatpush1.bf16.msra.mxu0 %v2524
        %2558 = vmatprep.subr.bf16.mxu0 0
        %2559 = vmatpush1.bf16.msra.mxu0 0
        %2560 = vmatprep.subr.bf16.mxu0 0
        %2561 = vmatpush1.bf16.msra.mxu0 0
        %2562 = vmatprep.subr.bf16.mxu0 0
        %2563 = vmatpush1.bf16.msra.mxu0 0
        %2564 = vmatprep.subr.bf16.mxu0 0
        %2565 = vmatpush1.bf16.msra.mxu0 0
        %2566 = vmatprep.subr.bf16.mxu0 0
        %2567 = vmatpush1.bf16.msra.mxu0 0
        %2568 = vmatprep.subr.bf16.mxu0 0
        %2569 = vmatpush1.bf16.msra.mxu0 0
        %2570 = vmatprep.subr.bf16.mxu0 0
        %2571 = vmatpush1.bf16.msra.mxu0 0
        %2572 = vmatprep.subr.bf16.mxu0 0
        %2573 = vmatpush1.bf16.msra.mxu0 0
        %2574 = vmatprep.mubr.bf16.mxu0 0
        %2575 = vmatmul.mubr.bf16.gmra.mrb[0].mxu0 %v2454
        %v2576 = vpop.f32.mrb[0].mxu0
        %v2577 = vadd.f32 0.0, %v2576
        %v2578 = vpop.f32.mrb[0].mxu0
        %v2579 = vadd.f32 0.0, %v2578
        %v2580 = vpop.f32.mrb[0].mxu0
        %v2581 = vadd.f32 0.0, %v2580
        %v2582 = vpop.f32.mrb[0].mxu0
        %v2583 = vadd.f32 0.0, %v2582
        %2584 = vmatprep.mubr.bf16.mxu0 0
        %2585 = vmatmul.mubr.bf16.gmra.mrb[0].mxu0 %v2455
        %v2586 = vpop.f32.mrb[0].mxu0
        %v2587 = vadd.f32 0.0, %v2586
        %v2588 = vpop.f32.mrb[0].mxu0
        %v2589 = vadd.f32 0.0, %v2588
        %v2590 = vpop.f32.mrb[0].mxu0
        %v2591 = vadd.f32 0.0, %v2590
        %v2592 = vpop.f32.mrb[0].mxu0
        %v2593 = vadd.f32 0.0, %v2592
        %2594 = vmatprep.mubr.bf16.mxu0 0
        %2595 = vmatmul.mubr.bf16.gmra.mrb[0].mxu0 %v2456
        %v2596 = vpop.f32.mrb[0].mxu0
        %v2597 = vadd.f32 0.0, %v2596
        %v2598 = vpop.f32.mrb[0].mxu0
        %v2599 = vadd.f32 0.0, %v2598
        %v2600 = vpop.f32.mrb[0].mxu0
        %v2601 = vadd.f32 0.0, %v2600
        %v2602 = vpop.f32.mrb[0].mxu0
        %v2603 = vadd.f32 0.0, %v2602
        %2604 = vmatprep.mubr.bf16.mxu0 0
        %2605 = vmatmul.mubr.bf16.gmra.mrb[0].mxu0 %v2457
        %v2606 = vpop.f32.mrb[0].mxu0
        %v2607 = vadd.f32 0.0, %v2606
        %v2608 = vpop.f32.mrb[0].mxu0
        %v2609 = vadd.f32 0.0, %v2608
        %v2610 = vpop.f32.mrb[0].mxu0
        %v2611 = vadd.f32 0.0, %v2610
        %v2612 = vpop.f32.mrb[0].mxu0
        %v2613 = vadd.f32 0.0, %v2612
        %2614 = vmatprep.mubr.bf16.mxu0 0
        %2615 = vmatmul.mubr.bf16.gmra.mrb[0].mxu0 %v2458
        %v2616 = vpop.f32.mrb[0].mxu0
        %v2617 = vadd.f32 0.0, %v2616
        %v2618 = vpop.f32.mrb[0].mxu0
        %v2619 = vadd.f32 0.0, %v2618
        %v2620 = vpop.f32.mrb[0].mxu0
        %v2621 = vadd.f32 0.0, %v2620
        %v2622 = vpop.f32.mrb[0].mxu0
        %v2623 = vadd.f32 0.0, %v2622
        %2624 = vmatprep.mubr.bf16.mxu0 0
        %2625 = vmatmul.mubr.bf16.gmra.mrb[0].mxu0 %v2459
        %v2626 = vpop.f32.mrb[0].mxu0
        %v2627 = vadd.f32 0.0, %v2626
        %v2628 = vpop.f32.mrb[0].mxu0
        %v2629 = vadd.f32 0.0, %v2628
        %v2630 = vpop.f32.mrb[0].mxu0
        %v2631 = vadd.f32 0.0, %v2630
        %v2632 = vpop.f32.mrb[0].mxu0
        %v2633 = vadd.f32 0.0, %v2632
        %2634 = vmatprep.mubr.bf16.mxu0 0
        %2635 = vmatmul.mubr.bf16.gmra.mrb[0].mxu0 %v2460
        %v2636 = vpop.f32.mrb[0].mxu0
        %v2637 = vadd.f32 0.0, %v2636
        %v2638 = vpop.f32.mrb[0].mxu0
        %v2639 = vadd.f32 0.0, %v2638
        %v2640 = vpop.f32.mrb[0].mxu0
        %v2641 = vadd.f32 0.0, %v2640
        %v2642 = vpop.f32.mrb[0].mxu0
        %v2643 = vadd.f32 0.0, %v2642
        %2644 = vmatprep.mubr.bf16.mxu0 0
        %2645 = vmatmul.mubr.bf16.gmra.mrb[0].mxu0 %v2461
        %v2646 = vpop.f32.mrb[0].mxu0
        %v2647 = vadd.f32 0.0, %v2646
        %v2648 = vpop.f32.mrb[0].mxu0
        %v2649 = vadd.f32 0.0, %v2648
        %v2650 = vpop.f32.mrb[0].mxu0
        %v2651 = vadd.f32 0.0, %v2650
        %v2652 = vpop.f32.mrb[0].mxu0
        %v2653 = vadd.f32 0.0, %v2652
        %2654 = vdwg.mxu0
        %v2655 = vadd.f32 %v2577, %v2581
        %v2656 = vadd.f32 %v2655, %v2587
        %v2657 = vadd.f32 %v2656, %v2591
        %v2658 = vadd.f32 %v2657, %v2597
        %v2659 = vadd.f32 %v2658, %v2601
        %v2660 = vadd.f32 %v2659, %v2607
        %v2661 = vadd.f32 %v2660, %v2611
        %v2662 = vadd.f32 %v2661, %v2617
        %v2663 = vadd.f32 %v2662, %v2621
        %v2664 = vadd.f32 %v2663, %v2627
        %v2665 = vadd.f32 %v2664, %v2631
        %v2666 = vadd.f32 %v2665, %v2637
        %v2667 = vadd.f32 %v2666, %v2641
        %v2668 = vadd.f32 %v2667, %v2647
        %v2669 = vadd.f32 %v2668, %v2651
        %v2670 = vrot.slane %v2669, 4
        %v2671 = vadd.f32 %v2669, %v2670
        %v2672 = vrot.slane %v2671, 2
        %v2673 = vadd.f32 %v2671, %v2672
        %v2674 = vrot.slane %v2673, 1
        %v2675 = vadd.f32 %v2673, %v2674
        %v2676 = vadd.f32 %v2579, %v2583
        %v2677 = vadd.f32 %v2676, %v2589
        %v2678 = vadd.f32 %v2677, %v2593
        %v2679 = vadd.f32 %v2678, %v2599
        %v2680 = vadd.f32 %v2679, %v2603
        %v2681 = vadd.f32 %v2680, %v2609
        %v2682 = vadd.f32 %v2681, %v2613
        %v2683 = vadd.f32 %v2682, %v2619
        %v2684 = vadd.f32 %v2683, %v2623
        %v2685 = vadd.f32 %v2684, %v2629
        %v2686 = vadd.f32 %v2685, %v2633
        %v2687 = vadd.f32 %v2686, %v2639
        %v2688 = vadd.f32 %v2687, %v2643
        %v2689 = vadd.f32 %v2688, %v2649
        %v2690 = vadd.f32 %v2689, %v2653
        %v2691 = vrot.slane %v2690, 4
        %v2692 = vadd.f32 %v2690, %v2691
        %v2693 = vrot.slane %v2692, 2
        %v2694 = vadd.f32 %v2692, %v2693
        %v2695 = vrot.slane %v2694, 1
        %v2696 = vadd.f32 %v2694, %v2695
        %v2697 = vmul.f32 %v2675, 0.0078125
        %v2698 = vmul.f32 %v2696, 0.0078125
        %v2699 = vsub.f32 %v2577, %v2697
        %v2700 = vsub.f32 %v2579, %v2698
        %v2701 = vsub.f32 %v2581, %v2697
        %v2702 = vsub.f32 %v2583, %v2698
        %v2703 = vsub.f32 %v2587, %v2697
        %v2704 = vsub.f32 %v2589, %v2698
        %v2705 = vsub.f32 %v2591, %v2697
        %v2706 = vsub.f32 %v2593, %v2698
        %v2707 = vsub.f32 %v2597, %v2697
        %v2708 = vsub.f32 %v2599, %v2698
        %v2709 = vsub.f32 %v2601, %v2697
        %v2710 = vsub.f32 %v2603, %v2698
        %v2711 = vsub.f32 %v2607, %v2697
        %v2712 = vsub.f32 %v2609, %v2698
        %v2713 = vsub.f32 %v2611, %v2697
        %v2714 = vsub.f32 %v2613, %v2698
        %v2715 = vsub.f32 %v2617, %v2697
        %v2716 = vsub.f32 %v2619, %v2698
        %v2717 = vsub.f32 %v2621, %v2697
        %v2718 = vsub.f32 %v2623, %v2698
        %v2719 = vsub.f32 %v2627, %v2697
        %v2720 = vsub.f32 %v2629, %v2698
        %v2721 = vsub.f32 %v2631, %v2697
        %v2722 = vsub.f32 %v2633, %v2698
        %v2723 = vsub.f32 %v2637, %v2697
        %v2724 = vsub.f32 %v2639, %v2698
        %v2725 = vsub.f32 %v2641, %v2697
        %v2726 = vsub.f32 %v2643, %v2698
        %v2727 = vsub.f32 %v2647, %v2697
        %v2728 = vsub.f32 %v2649, %v2698
        %v2729 = vsub.f32 %v2651, %v2697
        %v2730 = vsub.f32 %v2653, %v2698
        %v2731 = vmul.f32 %v2699, %v2699
        %v2732 = vmul.f32 %v2700, %v2700
        %v2733 = vmul.f32 %v2701, %v2701
        %v2734 = vmul.f32 %v2702, %v2702
        %v2735 = vmul.f32 %v2703, %v2703
        %v2736 = vmul.f32 %v2704, %v2704
        %v2737 = vmul.f32 %v2705, %v2705
        %v2738 = vmul.f32 %v2706, %v2706
        %v2739 = vmul.f32 %v2707, %v2707
        %v2740 = vmul.f32 %v2708, %v2708
        %v2741 = vmul.f32 %v2709, %v2709
        %v2742 = vmul.f32 %v2710, %v2710
        %v2743 = vmul.f32 %v2711, %v2711
        %v2744 = vmul.f32 %v2712, %v2712
        %v2745 = vmul.f32 %v2713, %v2713
        %v2746 = vmul.f32 %v2714, %v2714
        %v2747 = vmul.f32 %v2715, %v2715
        %v2748 = vmul.f32 %v2716, %v2716
        %v2749 = vmul.f32 %v2717, %v2717
        %v2750 = vmul.f32 %v2718, %v2718
        %v2751 = vmul.f32 %v2719, %v2719
        %v2752 = vmul.f32 %v2720, %v2720
        %v2753 = vmul.f32 %v2721, %v2721
        %v2754 = vmul.f32 %v2722, %v2722
        %v2755 = vmul.f32 %v2723, %v2723
        %v2756 = vmul.f32 %v2724, %v2724
        %v2757 = vmul.f32 %v2725, %v2725
        %v2758 = vmul.f32 %v2726, %v2726
        %v2759 = vmul.f32 %v2727, %v2727
        %v2760 = vmul.f32 %v2728, %v2728
        %v2761 = vmul.f32 %v2729, %v2729
        %v2762 = vmul.f32 %v2730, %v2730
        %v2763 = vadd.f32 %v2731, %v2733
        %v2764 = vadd.f32 %v2763, %v2735
        %v2765 = vadd.f32 %v2764, %v2737
        %v2766 = vadd.f32 %v2765, %v2739
        %v2767 = vadd.f32 %v2766, %v2741
        %v2768 = vadd.f32 %v2767, %v2743
        %v2769 = vadd.f32 %v2768, %v2745
        %v2770 = vadd.f32 %v2769, %v2747
        %v2771 = vadd.f32 %v2770, %v2749
        %v2772 = vadd.f32 %v2771, %v2751
        %v2773 = vadd.f32 %v2772, %v2753
        %v2774 = vadd.f32 %v2773, %v2755
        %v2775 = vadd.f32 %v2774, %v2757
        %v2776 = vadd.f32 %v2775, %v2759
        %v2777 = vadd.f32 %v2776, %v2761
        %v2778 = vrot.slane %v2777, 4
        %v2779 = vadd.f32 %v2777, %v2778
        %v2780 = vrot.slane %v2779, 2
        %v2781 = vadd.f32 %v2779, %v2780
        %v2782 = vrot.slane %v2781, 1
        %v2783 = vadd.f32 %v2781, %v2782
        %v2784 = vadd.f32 %v2732, %v2734
        %v2785 = vadd.f32 %v2784, %v2736
        %v2786 = vadd.f32 %v2785, %v2738
        %v2787 = vadd.f32 %v2786, %v2740
        %v2788 = vadd.f32 %v2787, %v2742
        %v2789 = vadd.f32 %v2788, %v2744
        %v2790 = vadd.f32 %v2789, %v2746
        %v2791 = vadd.f32 %v2790, %v2748
        %v2792 = vadd.f32 %v2791, %v2750
        %v2793 = vadd.f32 %v2792, %v2752
        %v2794 = vadd.f32 %v2793, %v2754
        %v2795 = vadd.f32 %v2794, %v2756
        %v2796 = vadd.f32 %v2795, %v2758
        %v2797 = vadd.f32 %v2796, %v2760
        %v2798 = vadd.f32 %v2797, %v2762
        %v2799 = vrot.slane %v2798, 4
        %v2800 = vadd.f32 %v2798, %v2799
        %v2801 = vrot.slane %v2800, 2
        %v2802 = vadd.f32 %v2800, %v2801
        %v2803 = vrot.slane %v2802, 1
        %v2804 = vadd.f32 %v2802, %v2803
        %v2805 = vmul.f32 %v2783, 0.0078125
        %v2806 = vmul.f32 %v2804, 0.0078125
        %v2807 = vadd.f32 %v2805, 1e-05
        %v2808 = vadd.f32 %v2806, 1e-05
        %v2809 = vrsqrt.pop %v2807
        %v2810 = vrsqrt.pop %v2808
        %v2811 = vmul.f32 %v2699, %v2809
        %v2812 = vmul.f32 %v2700, %v2810
        %v2813 = vmul.f32 %v2701, %v2809
        %v2814 = vmul.f32 %v2702, %v2810
        %v2815 = vmul.f32 %v2703, %v2809
        %v2816 = vmul.f32 %v2704, %v2810
        %v2817 = vmul.f32 %v2705, %v2809
        %v2818 = vmul.f32 %v2706, %v2810
        %v2819 = vmul.f32 %v2707, %v2809
        %v2820 = vmul.f32 %v2708, %v2810
        %v2821 = vmul.f32 %v2709, %v2809
        %v2822 = vmul.f32 %v2710, %v2810
        %v2823 = vmul.f32 %v2711, %v2809
        %v2824 = vmul.f32 %v2712, %v2810
        %v2825 = vmul.f32 %v2713, %v2809
        %v2826 = vmul.f32 %v2714, %v2810
        %v2827 = vmul.f32 %v2715, %v2809
        %v2828 = vmul.f32 %v2716, %v2810
        %v2829 = vmul.f32 %v2717, %v2809
        %v2830 = vmul.f32 %v2718, %v2810
        %v2831 = vmul.f32 %v2719, %v2809
        %v2832 = vmul.f32 %v2720, %v2810
        %v2833 = vmul.f32 %v2721, %v2809
        %v2834 = vmul.f32 %v2722, %v2810
        %v2835 = vmul.f32 %v2723, %v2809
        %v2836 = vmul.f32 %v2724, %v2810
        %v2837 = vmul.f32 %v2725, %v2809
        %v2838 = vmul.f32 %v2726, %v2810
        %v2839 = vmul.f32 %v2727, %v2809
        %v2840 = vmul.f32 %v2728, %v2810
        %v2841 = vmul.f32 %v2729, %v2809
        %v2842 = vmul.f32 %v2730, %v2810
        %v2844 = vlaneseq
        %v2845 = vshrl.u32 %v2844, 7
        %v2846 = vsub.s32 0, %v2845
        %v2847 = vrot.slane %v2452, %v2846
        %v2848 = vlaneseq
        %v2849 = vshrl.u32 %v2848, 7
        %v2850 = vsub.s32 1, %v2849
        %v2851 = vrot.slane %v2452, %v2850
        %v2854 = vmul.f32 %v2811, %v2847
        %v2855 = vmul.f32 %v2812, %v2851
        %v2856 = vmul.f32 %v2813, %v2847
        %v2857 = vmul.f32 %v2814, %v2851
        %v2858 = vmul.f32 %v2815, %v2847
        %v2859 = vmul.f32 %v2816, %v2851
        %v2860 = vmul.f32 %v2817, %v2847
        %v2861 = vmul.f32 %v2818, %v2851
        %v2862 = vmul.f32 %v2819, %v2847
        %v2863 = vmul.f32 %v2820, %v2851
        %v2864 = vmul.f32 %v2821, %v2847
        %v2865 = vmul.f32 %v2822, %v2851
        %v2866 = vmul.f32 %v2823, %v2847
        %v2867 = vmul.f32 %v2824, %v2851
        %v2868 = vmul.f32 %v2825, %v2847
        %v2869 = vmul.f32 %v2826, %v2851
        %v2870 = vmul.f32 %v2827, %v2847
        %v2871 = vmul.f32 %v2828, %v2851
        %v2872 = vmul.f32 %v2829, %v2847
        %v2873 = vmul.f32 %v2830, %v2851
        %v2874 = vmul.f32 %v2831, %v2847
        %v2875 = vmul.f32 %v2832, %v2851
        %v2876 = vmul.f32 %v2833, %v2847
        %v2877 = vmul.f32 %v2834, %v2851
        %v2878 = vmul.f32 %v2835, %v2847
        %v2879 = vmul.f32 %v2836, %v2851
        %v2880 = vmul.f32 %v2837, %v2847
        %v2881 = vmul.f32 %v2838, %v2851
        %v2882 = vmul.f32 %v2839, %v2847
        %v2883 = vmul.f32 %v2840, %v2851
        %v2884 = vmul.f32 %v2841, %v2847
        %v2885 = vmul.f32 %v2842, %v2851
        %v2887 = vlaneseq
        %v2888 = vshrl.u32 %v2887, 7
        %v2889 = vsub.s32 0, %v2888
        %v2890 = vrot.slane %v2453, %v2889
        %v2891 = vlaneseq
        %v2892 = vshrl.u32 %v2891, 7
        %v2893 = vsub.s32 1, %v2892
        %v2894 = vrot.slane %v2453, %v2893
        %v2897 = vadd.f32 %v2854, %v2890
        %v2898 = vadd.f32 %v2855, %v2894
        %v2899 = vadd.f32 %v2856, %v2890
        %v2900 = vadd.f32 %v2857, %v2894
        %v2901 = vadd.f32 %v2858, %v2890
        %v2902 = vadd.f32 %v2859, %v2894
        %v2903 = vadd.f32 %v2860, %v2890
        %v2904 = vadd.f32 %v2861, %v2894
        %v2905 = vadd.f32 %v2862, %v2890
        %v2906 = vadd.f32 %v2863, %v2894
        %v2907 = vadd.f32 %v2864, %v2890
        %v2908 = vadd.f32 %v2865, %v2894
        %v2909 = vadd.f32 %v2866, %v2890
        %v2910 = vadd.f32 %v2867, %v2894
        %v2911 = vadd.f32 %v2868, %v2890
        %v2912 = vadd.f32 %v2869, %v2894
        %v2913 = vadd.f32 %v2870, %v2890
        %v2914 = vadd.f32 %v2871, %v2894
        %v2915 = vadd.f32 %v2872, %v2890
        %v2916 = vadd.f32 %v2873, %v2894
        %v2917 = vadd.f32 %v2874, %v2890
        %v2918 = vadd.f32 %v2875, %v2894
        %v2919 = vadd.f32 %v2876, %v2890
        %v2920 = vadd.f32 %v2877, %v2894
        %v2921 = vadd.f32 %v2878, %v2890
        %v2922 = vadd.f32 %v2879, %v2894
        %v2923 = vadd.f32 %v2880, %v2890
        %v2924 = vadd.f32 %v2881, %v2894
        %v2925 = vadd.f32 %v2882, %v2890
        %v2926 = vadd.f32 %v2883, %v2894
        %v2927 = vadd.f32 %v2884, %v2890
        %v2928 = vadd.f32 %v2885, %v2894
        %v2929 = vld [vmem:[%s803] sm:$0xff]
        %v2930 = vld [vmem:[%s803 + $0x8] sm:$0xff]
        %v2931 = vld [vmem:[%s803 + $0x10] sm:$0xff]
        %v2932 = vld [vmem:[%s803 + $0x18] sm:$0xff]
        %v2933 = vld [vmem:[%s803 + $0x20] sm:$0xff]
        %v2934 = vld [vmem:[%s803 + $0x28] sm:$0xff]
        %v2935 = vld [vmem:[%s803 + $0x30] sm:$0xff]
        %v2936 = vld [vmem:[%s803 + $0x38] sm:$0xff]
        %v2937 = vld [vmem:[%s803 + $0x40] sm:$0xff]
        %v2938 = vld [vmem:[%s803 + $0x48] sm:$0xff]
        %v2939 = vld [vmem:[%s803 + $0x50] sm:$0xff]
        %v2940 = vld [vmem:[%s803 + $0x58] sm:$0xff]
        %v2941 = vld [vmem:[%s803 + $0x60] sm:$0xff]
        %v2942 = vld [vmem:[%s803 + $0x68] sm:$0xff]
        %v2943 = vld [vmem:[%s803 + $0x70] sm:$0xff]
        %v2944 = vld [vmem:[%s803 + $0x78] sm:$0xff]
        %v2945 = vmul.f32 %v2898, 0.5
        %v2946 = vmul.f32 %v2900, 0.5
        %v2947 = vmul.f32 %v2902, 0.5
        %v2948 = vmul.f32 %v2904, 0.5
        %v2949 = vmul.f32 %v2906, 0.5
        %v2950 = vmul.f32 %v2908, 0.5
        %v2951 = vmul.f32 %v2910, 0.5
        %v2952 = vmul.f32 %v2912, 0.5
        %v2953 = vmul.f32 %v2914, 0.5
        %v2954 = vmul.f32 %v2916, 0.5
        %v2955 = vmul.f32 %v2918, 0.5
        %v2956 = vmul.f32 %v2920, 0.5
        %v2957 = vmul.f32 %v2922, 0.5
        %v2958 = vmul.f32 %v2924, 0.5
        %v2959 = vmul.f32 %v2926, 0.5
        %v2960 = vmul.f32 %v2928, 0.5
        %v2961 = vmul.f32 %v2945, 1.442695
        %v2962 = vpow.pop %v2961
        %v2963 = vmul.f32 %v2946, 1.442695
        %v2964 = vpow.pop %v2963
        %v2965 = vmul.f32 %v2947, 1.442695
        %v2966 = vpow.pop %v2965
        %v2967 = vmul.f32 %v2948, 1.442695
        %v2968 = vpow.pop %v2967
        %v2969 = vmul.f32 %v2949, 1.442695
        %v2970 = vpow.pop %v2969
        %v2971 = vmul.f32 %v2950, 1.442695
        %v2972 = vpow.pop %v2971
        %v2973 = vmul.f32 %v2951, 1.442695
        %v2974 = vpow.pop %v2973
        %v2975 = vmul.f32 %v2952, 1.442695
        %v2976 = vpow.pop %v2975
        %v2977 = vmul.f32 %v2953, 1.442695
        %v2978 = vpow.pop %v2977
        %v2979 = vmul.f32 %v2954, 1.442695
        %v2980 = vpow.pop %v2979
        %v2981 = vmul.f32 %v2955, 1.442695
        %v2982 = vpow.pop %v2981
        %v2983 = vmul.f32 %v2956, 1.442695
        %v2984 = vpow.pop %v2983
        %v2985 = vmul.f32 %v2957, 1.442695
        %v2986 = vpow.pop %v2985
        %v2987 = vmul.f32 %v2958, 1.442695
        %v2988 = vpow.pop %v2987
        %v2989 = vmul.f32 %v2959, 1.442695
        %v2990 = vpow.pop %v2989
        %v2991 = vmul.f32 %v2960, 1.442695
        %v2992 = vpow.pop %v2991
        %v2993 = vmul.f32 %v2929, %v2962
        %v2994 = vmul.f32 %v2930, %v2964
        %v2995 = vmul.f32 %v2931, %v2966
        %v2996 = vmul.f32 %v2932, %v2968
        %v2997 = vmul.f32 %v2933, %v2970
        %v2998 = vmul.f32 %v2934, %v2972
        %v2999 = vmul.f32 %v2935, %v2974
        %v3000 = vmul.f32 %v2936, %v2976
        %v3001 = vmul.f32 %v2937, %v2978
        %v3002 = vmul.f32 %v2938, %v2980
        %v3003 = vmul.f32 %v2939, %v2982
        %v3004 = vmul.f32 %v2940, %v2984
        %v3005 = vmul.f32 %v2941, %v2986
        %v3006 = vmul.f32 %v2942, %v2988
        %v3007 = vmul.f32 %v2943, %v2990
        %v3008 = vmul.f32 %v2944, %v2992
        %v3009 = vadd.f32 %v2897, %v2993
        %v3010 = vadd.f32 %v2899, %v2994
        %v3011 = vadd.f32 %v2901, %v2995
        %v3012 = vadd.f32 %v2903, %v2996
        %v3013 = vadd.f32 %v2905, %v2997
        %v3014 = vadd.f32 %v2907, %v2998
        %v3015 = vadd.f32 %v2909, %v2999
        %v3016 = vadd.f32 %v2911, %v3000
        %v3017 = vadd.f32 %v2913, %v3001
        %v3018 = vadd.f32 %v2915, %v3002
        %v3019 = vadd.f32 %v2917, %v3003
        %v3020 = vadd.f32 %v2919, %v3004
        %v3021 = vadd.f32 %v2921, %v3005
        %v3022 = vadd.f32 %v2923, %v3006
        %v3023 = vadd.f32 %v2925, %v3007
        %v3024 = vadd.f32 %v2927, %v3008
        %3025 = vst [vmem:[%s907] sm:$0xff] %v2897
        %3026 = vst [vmem:[%s907 + $0x8] sm:$0xff] %v2899
        %3027 = vst [vmem:[%s907 + $0x10] sm:$0xff] %v2901
        %3028 = vst [vmem:[%s907 + $0x18] sm:$0xff] %v2903
        %3029 = vst [vmem:[%s907 + $0x20] sm:$0xff] %v2905
        %3030 = vst [vmem:[%s907 + $0x28] sm:$0xff] %v2907
        %3031 = vst [vmem:[%s907 + $0x30] sm:$0xff] %v2909
        %3032 = vst [vmem:[%s907 + $0x38] sm:$0xff] %v2911
        %3033 = vst [vmem:[%s907 + $0x40] sm:$0xff] %v2913
        %3034 = vst [vmem:[%s907 + $0x48] sm:$0xff] %v2915
        %3035 = vst [vmem:[%s907 + $0x50] sm:$0xff] %v2917
        %3036 = vst [vmem:[%s907 + $0x58] sm:$0xff] %v2919
        %3037 = vst [vmem:[%s907 + $0x60] sm:$0xff] %v2921
        %3038 = vst [vmem:[%s907 + $0x68] sm:$0xff] %v2923
        %3039 = vst [vmem:[%s907 + $0x70] sm:$0xff] %v2925
        %3040 = vst [vmem:[%s907 + $0x78] sm:$0xff] %v2927
        %3041 = vst [vmem:[%s914] sm:$0xff] %v2898
        %3042 = vst [vmem:[%s914 + $0x8] sm:$0xff] %v2900
        %3043 = vst [vmem:[%s914 + $0x10] sm:$0xff] %v2902
        %3044 = vst [vmem:[%s914 + $0x18] sm:$0xff] %v2904
        %3045 = vst [vmem:[%s914 + $0x20] sm:$0xff] %v2906
        %3046 = vst [vmem:[%s914 + $0x28] sm:$0xff] %v2908
        %3047 = vst [vmem:[%s914 + $0x30] sm:$0xff] %v2910
        %3048 = vst [vmem:[%s914 + $0x38] sm:$0xff] %v2912
        %3049 = vst [vmem:[%s914 + $0x40] sm:$0xff] %v2914
        %3050 = vst [vmem:[%s914 + $0x48] sm:$0xff] %v2916
        %3051 = vst [vmem:[%s914 + $0x50] sm:$0xff] %v2918
        %3052 = vst [vmem:[%s914 + $0x58] sm:$0xff] %v2920
        %3053 = vst [vmem:[%s914 + $0x60] sm:$0xff] %v2922
        %3054 = vst [vmem:[%s914 + $0x68] sm:$0xff] %v2924
        %3055 = vst [vmem:[%s914 + $0x70] sm:$0xff] %v2926
        %3056 = vst [vmem:[%s914 + $0x78] sm:$0xff] %v2928
        %3057 = vst [vmem:[%s921] sm:$0xff] %v3009
        %3058 = vst [vmem:[%s921 + $0x8] sm:$0xff] %v3010
        %3059 = vst [vmem:[%s921 + $0x10] sm:$0xff] %v3011
        %3060 = vst [vmem:[%s921 + $0x18] sm:$0xff] %v3012
        %3061 = vst [vmem:[%s921 + $0x20] sm:$0xff] %v3013
        %3062 = vst [vmem:[%s921 + $0x28] sm:$0xff] %v3014
        %3063 = vst [vmem:[%s921 + $0x30] sm:$0xff] %v3015
        %3064 = vst [vmem:[%s921 + $0x38] sm:$0xff] %v3016
        %3065 = vst [vmem:[%s921 + $0x40] sm:$0xff] %v3017
        %3066 = vst [vmem:[%s921 + $0x48] sm:$0xff] %v3018
        %3067 = vst [vmem:[%s921 + $0x50] sm:$0xff] %v3019
        %3068 = vst [vmem:[%s921 + $0x58] sm:$0xff] %v3020
        %3069 = vst [vmem:[%s921 + $0x60] sm:$0xff] %v3021
        %3070 = vst [vmem:[%s921 + $0x68] sm:$0xff] %v3022
        %3071 = vst [vmem:[%s921 + $0x70] sm:$0xff] %v3023
        %3072 = vst [vmem:[%s921 + $0x78] sm:$0xff] %v3024
        %v3073 = vld [vmem:[#allocation11] sm:$0xf]
        %v3074 = vld [vmem:[#allocation11 + $0x4] sm:$0xf]
        %v3075 = vld [vmem:[#allocation11 + $0x8] sm:$0xf]
        %v3076 = vld [vmem:[#allocation11 + $0xc] sm:$0xf]
        %v3077 = vld [vmem:[#allocation11 + $0x10] sm:$0xf]
        %v3078 = vld [vmem:[#allocation11 + $0x14] sm:$0xf]
        %v3079 = vld [vmem:[#allocation11 + $0x18] sm:$0xf]
        %v3080 = vld [vmem:[#allocation11 + $0x1c] sm:$0xf]
        %v3081 = vld [vmem:[#allocation11 + $0x20] sm:$0xf]
        %v3082 = vld [vmem:[#allocation11 + $0x24] sm:$0xf]
        %v3083 = vld [vmem:[#allocation11 + $0x28] sm:$0xf]
        %v3084 = vld [vmem:[#allocation11 + $0x2c] sm:$0xf]
        %v3085 = vld [vmem:[#allocation11 + $0x30] sm:$0xf]
        %v3086 = vld [vmem:[#allocation11 + $0x34] sm:$0xf]
        %v3087 = vld [vmem:[#allocation11 + $0x38] sm:$0xf]
        %v3088 = vld [vmem:[#allocation11 + $0x3c] sm:$0xf]
        %v3089 = vld [vmem:[%s12] sm:$0x1]
        %v3090 = vld [vmem:[%s13] sm:$0x1]
        %v3091 = vpack.c.bf16 %v3010, %v3009
        %v3092 = vpack.c.bf16 %v3012, %v3011
        %v3093 = vpack.c.bf16 %v3014, %v3013
        %v3094 = vpack.c.bf16 %v3016, %v3015
        %v3095 = vpack.c.bf16 %v3018, %v3017
        %v3096 = vpack.c.bf16 %v3020, %v3019
        %v3097 = vpack.c.bf16 %v3022, %v3021
        %v3098 = vpack.c.bf16 %v3024, %v3023
        %v3115 = vunpack.c.l.b16 %v3073
        %v3116 = vunpack.c.l.b16 %v3074
        %v3117 = vunpack.c.l.b16 %v3075
        %v3118 = vunpack.c.l.b16 %v3076
        %v3119 = vunpack.c.l.b16 %v3077
        %v3120 = vunpack.c.l.b16 %v3078
        %v3121 = vunpack.c.l.b16 %v3079
        %v3122 = vunpack.c.l.b16 %v3080
        %v3123 = vunpack.c.l.b16 %v3081
        %v3124 = vunpack.c.l.b16 %v3082
        %v3125 = vunpack.c.l.b16 %v3083
        %v3126 = vunpack.c.l.b16 %v3084
        %v3127 = vunpack.c.l.b16 %v3085
        %v3128 = vunpack.c.l.b16 %v3086
        %v3129 = vunpack.c.l.b16 %v3087
        %v3130 = vunpack.c.l.b16 %v3088
        %v3131 = vpack.c.b16 %v3116, %v3115
        %v3132 = vpack.c.b16 %v3118, %v3117
        %v3133 = vpack.c.b16 %v3120, %v3119
        %v3134 = vpack.c.b16 %v3122, %v3121
        %v3135 = vpack.c.b16 %v3124, %v3123
        %v3136 = vpack.c.b16 %v3126, %v3125
        %v3137 = vpack.c.b16 %v3128, %v3127
        %v3138 = vpack.c.b16 %v3130, %v3129
        %3147 = vmatprep.subr.bf16.mxu0 0
        %3148 = vmatpush1.bf16.msra.mxu0 %v3131
        %3149 = vmatprep.subr.bf16.mxu0 0
        %3150 = vmatpush1.bf16.msra.mxu0 %v3132
        %3151 = vmatprep.subr.bf16.mxu0 0
        %3152 = vmatpush1.bf16.msra.mxu0 %v3133
        %3153 = vmatprep.subr.bf16.mxu0 0
        %3154 = vmatpush1.bf16.msra.mxu0 %v3134
        %3155 = vmatprep.subr.bf16.mxu0 0
        %3156 = vmatpush1.bf16.msra.mxu0 %v3135
        %3157 = vmatprep.subr.bf16.mxu0 0
        %3158 = vmatpush1.bf16.msra.mxu0 %v3136
        %3159 = vmatprep.subr.bf16.mxu0 0
        %3160 = vmatpush1.bf16.msra.mxu0 %v3137
        %3161 = vmatprep.subr.bf16.mxu0 0
        %3162 = vmatpush1.bf16.msra.mxu0 %v3138
        %3163 = vmatprep.subr.bf16.mxu0 0
        %3164 = vmatpush1.bf16.msra.mxu0 0
        %3165 = vmatprep.subr.bf16.mxu0 0
        %3166 = vmatpush1.bf16.msra.mxu0 0
        %3167 = vmatprep.subr.bf16.mxu0 0
        %3168 = vmatpush1.bf16.msra.mxu0 0
        %3169 = vmatprep.subr.bf16.mxu0 0
        %3170 = vmatpush1.bf16.msra.mxu0 0
        %3171 = vmatprep.subr.bf16.mxu0 0
        %3172 = vmatpush1.bf16.msra.mxu0 0
        %3173 = vmatprep.subr.bf16.mxu0 0
        %3174 = vmatpush1.bf16.msra.mxu0 0
        %3175 = vmatprep.subr.bf16.mxu0 0
        %3176 = vmatpush1.bf16.msra.mxu0 0
        %3177 = vmatprep.subr.bf16.mxu0 0
        %3178 = vmatpush1.bf16.msra.mxu0 0
        %3179 = vmatprep.mubr.bf16.mxu0 0
        %3180 = vmatmul.mubr.bf16.gmra.mrb[0].mxu0 %v3091
        %v3181 = vpop.f32.mrb[0].mxu0
        %v3182 = vadd.f32 0.0, %v3181
        %v3183 = vpop.f32.mrb[0].mxu0
        %v3184 = vpop.f32.mrb[0].mxu0
        %v3185 = vadd.f32 0.0, %v3184
        %v3186 = vpop.f32.mrb[0].mxu0
        %3187 = vmatprep.mubr.bf16.mxu0 0
        %3188 = vmatmul.mubr.bf16.gmra.mrb[0].mxu0 %v3092
        %v3189 = vpop.f32.mrb[0].mxu0
        %v3190 = vadd.f32 0.0, %v3189
        %v3191 = vpop.f32.mrb[0].mxu0
        %v3192 = vpop.f32.mrb[0].mxu0
        %v3193 = vadd.f32 0.0, %v3192
        %v3194 = vpop.f32.mrb[0].mxu0
        %3195 = vmatprep.mubr.bf16.mxu0 0
        %3196 = vmatmul.mubr.bf16.gmra.mrb[0].mxu0 %v3093
        %v3197 = vpop.f32.mrb[0].mxu0
        %v3198 = vadd.f32 0.0, %v3197
        %v3199 = vpop.f32.mrb[0].mxu0
        %v3200 = vpop.f32.mrb[0].mxu0
        %v3201 = vadd.f32 0.0, %v3200
        %v3202 = vpop.f32.mrb[0].mxu0
        %3203 = vmatprep.mubr.bf16.mxu0 0
        %3204 = vmatmul.mubr.bf16.gmra.mrb[0].mxu0 %v3094
        %v3205 = vpop.f32.mrb[0].mxu0
        %v3206 = vadd.f32 0.0, %v3205
        %v3207 = vpop.f32.mrb[0].mxu0
        %v3208 = vpop.f32.mrb[0].mxu0
        %v3209 = vadd.f32 0.0, %v3208
        %v3210 = vpop.f32.mrb[0].mxu0
        %3211 = vmatprep.mubr.bf16.mxu0 0
        %3212 = vmatmul.mubr.bf16.gmra.mrb[0].mxu0 %v3095
        %v3213 = vpop.f32.mrb[0].mxu0
        %v3214 = vadd.f32 0.0, %v3213
        %v3215 = vpop.f32.mrb[0].mxu0
        %v3216 = vpop.f32.mrb[0].mxu0
        %v3217 = vadd.f32 0.0, %v3216
        %v3218 = vpop.f32.mrb[0].mxu0
        %3219 = vmatprep.mubr.bf16.mxu0 0
        %3220 = vmatmul.mubr.bf16.gmra.mrb[0].mxu0 %v3096
        %v3221 = vpop.f32.mrb[0].mxu0
        %v3222 = vadd.f32 0.0, %v3221
        %v3223 = vpop.f32.mrb[0].mxu0
        %v3224 = vpop.f32.mrb[0].mxu0
        %v3225 = vadd.f32 0.0, %v3224
        %v3226 = vpop.f32.mrb[0].mxu0
        %3227 = vmatprep.mubr.bf16.mxu0 0
        %3228 = vmatmul.mubr.bf16.gmra.mrb[0].mxu0 %v3097
        %v3229 = vpop.f32.mrb[0].mxu0
        %v3230 = vadd.f32 0.0, %v3229
        %v3231 = vpop.f32.mrb[0].mxu0
        %v3232 = vpop.f32.mrb[0].mxu0
        %v3233 = vadd.f32 0.0, %v3232
        %v3234 = vpop.f32.mrb[0].mxu0
        %3235 = vmatprep.mubr.bf16.mxu0 0
        %3236 = vmatmul.mubr.bf16.gmra.mrb[0].mxu0 %v3098
        %v3237 = vpop.f32.mrb[0].mxu0
        %v3238 = vadd.f32 0.0, %v3237
        %v3239 = vpop.f32.mrb[0].mxu0
        %v3240 = vpop.f32.mrb[0].mxu0
        %v3241 = vadd.f32 0.0, %v3240
        %v3242 = vpop.f32.mrb[0].mxu0
        %3243 = vdwg.mxu0
        %v3244 = vadd.f32 %v3182, %v3185
        %v3245 = vadd.f32 %v3244, %v3190
        %v3246 = vadd.f32 %v3245, %v3193
        %v3247 = vadd.f32 %v3246, %v3198
        %v3248 = vadd.f32 %v3247, %v3201
        %v3249 = vadd.f32 %v3248, %v3206
        %v3250 = vadd.f32 %v3249, %v3209
        %v3251 = vadd.f32 %v3250, %v3214
        %v3252 = vadd.f32 %v3251, %v3217
        %v3253 = vadd.f32 %v3252, %v3222
        %v3254 = vadd.f32 %v3253, %v3225
        %v3255 = vadd.f32 %v3254, %v3230
        %v3256 = vadd.f32 %v3255, %v3233
        %v3257 = vadd.f32 %v3256, %v3238
        %v3258 = vadd.f32 %v3257, %v3241
        %v3259 = vrot.slane %v3258, 4
        %v3260 = vadd.f32 %v3258, %v3259
        %v3261 = vrot.slane %v3260, 2
        %v3262 = vadd.f32 %v3260, %v3261
        %v3263 = vrot.slane %v3262, 1
        %v3264 = vadd.f32 %v3262, %v3263
        %v3265 = vmul.f32 %v3264, 0.0078125
        %v3266 = vsub.f32 %v3182, %v3265
        %v3267 = vsub.f32 %v3185, %v3265
        %v3268 = vsub.f32 %v3190, %v3265
        %v3269 = vsub.f32 %v3193, %v3265
        %v3270 = vsub.f32 %v3198, %v3265
        %v3271 = vsub.f32 %v3201, %v3265
        %v3272 = vsub.f32 %v3206, %v3265
        %v3273 = vsub.f32 %v3209, %v3265
        %v3274 = vsub.f32 %v3214, %v3265
        %v3275 = vsub.f32 %v3217, %v3265
        %v3276 = vsub.f32 %v3222, %v3265
        %v3277 = vsub.f32 %v3225, %v3265
        %v3278 = vsub.f32 %v3230, %v3265
        %v3279 = vsub.f32 %v3233, %v3265
        %v3280 = vsub.f32 %v3238, %v3265
        %v3281 = vsub.f32 %v3241, %v3265
        %v3282 = vmul.f32 %v3266, %v3266
        %v3283 = vmul.f32 %v3267, %v3267
        %v3284 = vmul.f32 %v3268, %v3268
        %v3285 = vmul.f32 %v3269, %v3269
        %v3286 = vmul.f32 %v3270, %v3270
        %v3287 = vmul.f32 %v3271, %v3271
        %v3288 = vmul.f32 %v3272, %v3272
        %v3289 = vmul.f32 %v3273, %v3273
        %v3290 = vmul.f32 %v3274, %v3274
        %v3291 = vmul.f32 %v3275, %v3275
        %v3292 = vmul.f32 %v3276, %v3276
        %v3293 = vmul.f32 %v3277, %v3277
        %v3294 = vmul.f32 %v3278, %v3278
        %v3295 = vmul.f32 %v3279, %v3279
        %v3296 = vmul.f32 %v3280, %v3280
        %v3297 = vmul.f32 %v3281, %v3281
        %v3298 = vadd.f32 %v3282, %v3283
        %v3299 = vadd.f32 %v3298, %v3284
        %v3300 = vadd.f32 %v3299, %v3285
        %v3301 = vadd.f32 %v3300, %v3286
        %v3302 = vadd.f32 %v3301, %v3287
        %v3303 = vadd.f32 %v3302, %v3288
        %v3304 = vadd.f32 %v3303, %v3289
        %v3305 = vadd.f32 %v3304, %v3290
        %v3306 = vadd.f32 %v3305, %v3291
        %v3307 = vadd.f32 %v3306, %v3292
        %v3308 = vadd.f32 %v3307, %v3293
        %v3309 = vadd.f32 %v3308, %v3294
        %v3310 = vadd.f32 %v3309, %v3295
        %v3311 = vadd.f32 %v3310, %v3296
        %v3312 = vadd.f32 %v3311, %v3297
        %v3313 = vrot.slane %v3312, 4
        %v3314 = vadd.f32 %v3312, %v3313
        %v3315 = vrot.slane %v3314, 2
        %v3316 = vadd.f32 %v3314, %v3315
        %v3317 = vrot.slane %v3316, 1
        %v3318 = vadd.f32 %v3316, %v3317
        %v3319 = vmul.f32 %v3318, 0.0078125
        %v3320 = vadd.f32 %v3319, 1e-05
        %v3321 = vrsqrt.pop %v3320
        %v3322 = vmul.f32 %v3266, %v3321
        %v3323 = vmul.f32 %v3267, %v3321
        %v3324 = vmul.f32 %v3268, %v3321
        %v3325 = vmul.f32 %v3269, %v3321
        %v3326 = vmul.f32 %v3270, %v3321
        %v3327 = vmul.f32 %v3271, %v3321
        %v3328 = vmul.f32 %v3272, %v3321
        %v3329 = vmul.f32 %v3273, %v3321
        %v3330 = vmul.f32 %v3274, %v3321
        %v3331 = vmul.f32 %v3275, %v3321
        %v3332 = vmul.f32 %v3276, %v3321
        %v3333 = vmul.f32 %v3277, %v3321
        %v3334 = vmul.f32 %v3278, %v3321
        %v3335 = vmul.f32 %v3279, %v3321
        %v3336 = vmul.f32 %v3280, %v3321
        %v3337 = vmul.f32 %v3281, %v3321
        %v3339 = vlaneseq
        %v3340 = vshrl.u32 %v3339, 7
        %v3341 = vsub.s32 0, %v3340
        %v3342 = vrot.slane %v3089, %v3341
        %v3344 = vmul.f32 %v3322, %v3342
        %v3345 = vmul.f32 %v3323, %v3342
        %v3346 = vmul.f32 %v3324, %v3342
        %v3347 = vmul.f32 %v3325, %v3342
        %v3348 = vmul.f32 %v3326, %v3342
        %v3349 = vmul.f32 %v3327, %v3342
        %v3350 = vmul.f32 %v3328, %v3342
        %v3351 = vmul.f32 %v3329, %v3342
        %v3352 = vmul.f32 %v3330, %v3342
        %v3353 = vmul.f32 %v3331, %v3342
        %v3354 = vmul.f32 %v3332, %v3342
        %v3355 = vmul.f32 %v3333, %v3342
        %v3356 = vmul.f32 %v3334, %v3342
        %v3357 = vmul.f32 %v3335, %v3342
        %v3358 = vmul.f32 %v3336, %v3342
        %v3359 = vmul.f32 %v3337, %v3342
        %v3361 = vlaneseq
        %v3362 = vshrl.u32 %v3361, 7
        %v3363 = vsub.s32 0, %v3362
        %v3364 = vrot.slane %v3090, %v3363
        %v3366 = vadd.f32 %v3344, %v3364
        %v3367 = vadd.f32 %v3345, %v3364
        %v3368 = vadd.f32 %v3346, %v3364
        %v3369 = vadd.f32 %v3347, %v3364
        %v3370 = vadd.f32 %v3348, %v3364
        %v3371 = vadd.f32 %v3349, %v3364
        %v3372 = vadd.f32 %v3350, %v3364
        %v3373 = vadd.f32 %v3351, %v3364
        %v3374 = vadd.f32 %v3352, %v3364
        %v3375 = vadd.f32 %v3353, %v3364
        %v3376 = vadd.f32 %v3354, %v3364
        %v3377 = vadd.f32 %v3355, %v3364
        %v3378 = vadd.f32 %v3356, %v3364
        %v3379 = vadd.f32 %v3357, %v3364
        %v3380 = vadd.f32 %v3358, %v3364
        %v3381 = vadd.f32 %v3359, %v3364
        %v3382 = vmax.f32 %v3366, 0.0
        %v3383 = vmax.f32 %v3367, 0.0
        %v3384 = vmax.f32 %v3368, 0.0
        %v3385 = vmax.f32 %v3369, 0.0
        %v3386 = vmax.f32 %v3370, 0.0
        %v3387 = vmax.f32 %v3371, 0.0
        %v3388 = vmax.f32 %v3372, 0.0
        %v3389 = vmax.f32 %v3373, 0.0
        %v3390 = vmax.f32 %v3374, 0.0
        %v3391 = vmax.f32 %v3375, 0.0
        %v3392 = vmax.f32 %v3376, 0.0
        %v3393 = vmax.f32 %v3377, 0.0
        %v3394 = vmax.f32 %v3378, 0.0
        %v3395 = vmax.f32 %v3379, 0.0
        %v3396 = vmax.f32 %v3380, 0.0
        %v3397 = vmax.f32 %v3381, 0.0
        %v3398 = vld [vmem:[#allocation13] sm:$0xff]
        %v3399 = vld [vmem:[#allocation13 + $0x8] sm:$0xff]
        %v3400 = vld [vmem:[#allocation13 + $0x10] sm:$0xff]
        %v3401 = vld [vmem:[#allocation13 + $0x18] sm:$0xff]
        %v3402 = vld [vmem:[#allocation13 + $0x20] sm:$0xff]
        %v3403 = vld [vmem:[#allocation13 + $0x28] sm:$0xff]
        %v3404 = vld [vmem:[#allocation13 + $0x30] sm:$0xff]
        %v3405 = vld [vmem:[#allocation13 + $0x38] sm:$0xff]
        %v3406 = vld [vmem:[#allocation13 + $0x40] sm:$0xff]
        %v3407 = vld [vmem:[#allocation13 + $0x48] sm:$0xff]
        %v3408 = vld [vmem:[#allocation13 + $0x50] sm:$0xff]
        %v3409 = vld [vmem:[#allocation13 + $0x58] sm:$0xff]
        %v3410 = vld [vmem:[#allocation13 + $0x60] sm:$0xff]
        %v3411 = vld [vmem:[#allocation13 + $0x68] sm:$0xff]
        %v3412 = vld [vmem:[#allocation13 + $0x70] sm:$0xff]
        %v3413 = vld [vmem:[#allocation13 + $0x78] sm:$0xff]
        %v3414 = vld [vmem:[%s15] sm:$0x3]
        %v3415 = vld [vmem:[#allocation14] sm:$0x3]
        %v3416 = vpack.c.bf16 %v3383, %v3382
        %v3417 = vpack.c.bf16 %v3385, %v3384
        %v3418 = vpack.c.bf16 %v3387, %v3386
        %v3419 = vpack.c.bf16 %v3389, %v3388
        %v3420 = vpack.c.bf16 %v3391, %v3390
        %v3421 = vpack.c.bf16 %v3393, %v3392
        %v3422 = vpack.c.bf16 %v3395, %v3394
        %v3423 = vpack.c.bf16 %v3397, %v3396
        %v3440 = vunpack.c.l.b16 %v3398
        %v3441 = vunpack.c.h.b16 %v3398
        %v3442 = vunpack.c.l.b16 %v3399
        %v3443 = vunpack.c.h.b16 %v3399
        %v3444 = vunpack.c.l.b16 %v3400
        %v3445 = vunpack.c.h.b16 %v3400
        %v3446 = vunpack.c.l.b16 %v3401
        %v3447 = vunpack.c.h.b16 %v3401
        %v3448 = vunpack.c.l.b16 %v3402
        %v3449 = vunpack.c.h.b16 %v3402
        %v3450 = vunpack.c.l.b16 %v3403
        %v3451 = vunpack.c.h.b16 %v3403
        %v3452 = vunpack.c.l.b16 %v3404
        %v3453 = vunpack.c.h.b16 %v3404
        %v3454 = vunpack.c.l.b16 %v3405
        %v3455 = vunpack.c.h.b16 %v3405
        %v3456 = vunpack.c.l.b16 %v3406
        %v3457 = vunpack.c.h.b16 %v3406
        %v3458 = vunpack.c.l.b16 %v3407
        %v3459 = vunpack.c.h.b16 %v3407
        %v3460 = vunpack.c.l.b16 %v3408
        %v3461 = vunpack.c.h.b16 %v3408
        %v3462 = vunpack.c.l.b16 %v3409
        %v3463 = vunpack.c.h.b16 %v3409
        %v3464 = vunpack.c.l.b16 %v3410
        %v3465 = vunpack.c.h.b16 %v3410
        %v3466 = vunpack.c.l.b16 %v3411
        %v3467 = vunpack.c.h.b16 %v3411
        %v3468 = vunpack.c.l.b16 %v3412
        %v3469 = vunpack.c.h.b16 %v3412
        %v3470 = vunpack.c.l.b16 %v3413
        %v3471 = vunpack.c.h.b16 %v3413
        %v3472 = vpack.c.b16 %v3442, %v3440
        %v3473 = vpack.c.b16 %v3443, %v3441
        %v3474 = vpack.c.b16 %v3446, %v3444
        %v3475 = vpack.c.b16 %v3447, %v3445
        %v3476 = vpack.c.b16 %v3450, %v3448
        %v3477 = vpack.c.b16 %v3451, %v3449
        %v3478 = vpack.c.b16 %v3454, %v3452
        %v3479 = vpack.c.b16 %v3455, %v3453
        %v3480 = vpack.c.b16 %v3458, %v3456
        %v3481 = vpack.c.b16 %v3459, %v3457
        %v3482 = vpack.c.b16 %v3462, %v3460
        %v3483 = vpack.c.b16 %v3463, %v3461
        %v3484 = vpack.c.b16 %v3466, %v3464
        %v3485 = vpack.c.b16 %v3467, %v3465
        %v3486 = vpack.c.b16 %v3470, %v3468
        %v3487 = vpack.c.b16 %v3471, %v3469
        %3504 = vmatprep.subr.bf16.mxu0 %v3473
        %3505 = vmatpush1.bf16.msra.mxu0 %v3472
        %3506 = vmatprep.subr.bf16.mxu0 %v3475
        %3507 = vmatpush1.bf16.msra.mxu0 %v3474
        %3508 = vmatprep.subr.bf16.mxu0 %v3477
        %3509 = vmatpush1.bf16.msra.mxu0 %v3476
        %3510 = vmatprep.subr.bf16.mxu0 %v3479
        %3511 = vmatpush1.bf16.msra.mxu0 %v3478
        %3512 = vmatprep.subr.bf16.mxu0 %v3481
        %3513 = vmatpush1.bf16.msra.mxu0 %v3480
        %3514 = vmatprep.subr.bf16.mxu0 %v3483
        %3515 = vmatpush1.bf16.msra.mxu0 %v3482
        %3516 = vmatprep.subr.bf16.mxu0 %v3485
        %3517 = vmatpush1.bf16.msra.mxu0 %v3484
        %3518 = vmatprep.subr.bf16.mxu0 %v3487
        %3519 = vmatpush1.bf16.msra.mxu0 %v3486
        %3520 = vmatprep.subr.bf16.mxu0 0
        %3521 = vmatpush1.bf16.msra.mxu0 0
        %3522 = vmatprep.subr.bf16.mxu0 0
        %3523 = vmatpush1.bf16.msra.mxu0 0
        %3524 = vmatprep.subr.bf16.mxu0 0
        %3525 = vmatpush1.bf16.msra.mxu0 0
        %3526 = vmatprep.subr.bf16.mxu0 0
        %3527 = vmatpush1.bf16.msra.mxu0 0
        %3528 = vmatprep.subr.bf16.mxu0 0
        %3529 = vmatpush1.bf16.msra.mxu0 0
        %3530 = vmatprep.subr.bf16.mxu0 0
        %3531 = vmatpush1.bf16.msra.mxu0 0
        %3532 = vmatprep.subr.bf16.mxu0 0
        %3533 = vmatpush1.bf16.msra.mxu0 0
        %3534 = vmatprep.subr.bf16.mxu0 0
        %3535 = vmatpush1.bf16.msra.mxu0 0
        %3536 = vmatprep.mubr.bf16.mxu0 0
        %3537 = vmatmul.mubr.bf16.gmra.mrb[0].mxu0 %v3416
        %v3538 = vpop.f32.mrb[0].mxu0
        %v3539 = vadd.f32 0.0, %v3538
        %v3540 = vpop.f32.mrb[0].mxu0
        %v3541 = vadd.f32 0.0, %v3540
        %v3542 = vpop.f32.mrb[0].mxu0
        %v3543 = vadd.f32 0.0, %v3542
        %v3544 = vpop.f32.mrb[0].mxu0
        %v3545 = vadd.f32 0.0, %v3544
        %3546 = vmatprep.mubr.bf16.mxu0 0
        %3547 = vmatmul.mubr.bf16.gmra.mrb[0].mxu0 %v3417
        %v3548 = vpop.f32.mrb[0].mxu0
        %v3549 = vadd.f32 0.0, %v3548
        %v3550 = vpop.f32.mrb[0].mxu0
        %v3551 = vadd.f32 0.0, %v3550
        %v3552 = vpop.f32.mrb[0].mxu0
        %v3553 = vadd.f32 0.0, %v3552
        %v3554 = vpop.f32.mrb[0].mxu0
        %v3555 = vadd.f32 0.0, %v3554
        %3556 = vmatprep.mubr.bf16.mxu0 0
        %3557 = vmatmul.mubr.bf16.gmra.mrb[0].mxu0 %v3418
        %v3558 = vpop.f32.mrb[0].mxu0
        %v3559 = vadd.f32 0.0, %v3558
        %v3560 = vpop.f32.mrb[0].mxu0
        %v3561 = vadd.f32 0.0, %v3560
        %v3562 = vpop.f32.mrb[0].mxu0
        %v3563 = vadd.f32 0.0, %v3562
        %v3564 = vpop.f32.mrb[0].mxu0
        %v3565 = vadd.f32 0.0, %v3564
        %3566 = vmatprep.mubr.bf16.mxu0 0
        %3567 = vmatmul.mubr.bf16.gmra.mrb[0].mxu0 %v3419
        %v3568 = vpop.f32.mrb[0].mxu0
        %v3569 = vadd.f32 0.0, %v3568
        %v3570 = vpop.f32.mrb[0].mxu0
        %v3571 = vadd.f32 0.0, %v3570
        %v3572 = vpop.f32.mrb[0].mxu0
        %v3573 = vadd.f32 0.0, %v3572
        %v3574 = vpop.f32.mrb[0].mxu0
        %v3575 = vadd.f32 0.0, %v3574
        %3576 = vmatprep.mubr.bf16.mxu0 0
        %3577 = vmatmul.mubr.bf16.gmra.mrb[0].mxu0 %v3420
        %v3578 = vpop.f32.mrb[0].mxu0
        %v3579 = vadd.f32 0.0, %v3578
        %v3580 = vpop.f32.mrb[0].mxu0
        %v3581 = vadd.f32 0.0, %v3580
        %v3582 = vpop.f32.mrb[0].mxu0
        %v3583 = vadd.f32 0.0, %v3582
        %v3584 = vpop.f32.mrb[0].mxu0
        %v3585 = vadd.f32 0.0, %v3584
        %3586 = vmatprep.mubr.bf16.mxu0 0
        %3587 = vmatmul.mubr.bf16.gmra.mrb[0].mxu0 %v3421
        %v3588 = vpop.f32.mrb[0].mxu0
        %v3589 = vadd.f32 0.0, %v3588
        %v3590 = vpop.f32.mrb[0].mxu0
        %v3591 = vadd.f32 0.0, %v3590
        %v3592 = vpop.f32.mrb[0].mxu0
        %v3593 = vadd.f32 0.0, %v3592
        %v3594 = vpop.f32.mrb[0].mxu0
        %v3595 = vadd.f32 0.0, %v3594
        %3596 = vmatprep.mubr.bf16.mxu0 0
        %3597 = vmatmul.mubr.bf16.gmra.mrb[0].mxu0 %v3422
        %v3598 = vpop.f32.mrb[0].mxu0
        %v3599 = vadd.f32 0.0, %v3598
        %v3600 = vpop.f32.mrb[0].mxu0
        %v3601 = vadd.f32 0.0, %v3600
        %v3602 = vpop.f32.mrb[0].mxu0
        %v3603 = vadd.f32 0.0, %v3602
        %v3604 = vpop.f32.mrb[0].mxu0
        %v3605 = vadd.f32 0.0, %v3604
        %3606 = vmatprep.mubr.bf16.mxu0 0
        %3607 = vmatmul.mubr.bf16.gmra.mrb[0].mxu0 %v3423
        %v3608 = vpop.f32.mrb[0].mxu0
        %v3609 = vadd.f32 0.0, %v3608
        %v3610 = vpop.f32.mrb[0].mxu0
        %v3611 = vadd.f32 0.0, %v3610
        %v3612 = vpop.f32.mrb[0].mxu0
        %v3613 = vadd.f32 0.0, %v3612
        %v3614 = vpop.f32.mrb[0].mxu0
        %v3615 = vadd.f32 0.0, %v3614
        %3616 = vdwg.mxu0
        %v3617 = vadd.f32 %v3539, %v3543
        %v3618 = vadd.f32 %v3617, %v3549
        %v3619 = vadd.f32 %v3618, %v3553
        %v3620 = vadd.f32 %v3619, %v3559
        %v3621 = vadd.f32 %v3620, %v3563
        %v3622 = vadd.f32 %v3621, %v3569
        %v3623 = vadd.f32 %v3622, %v3573
        %v3624 = vadd.f32 %v3623, %v3579
        %v3625 = vadd.f32 %v3624, %v3583
        %v3626 = vadd.f32 %v3625, %v3589
        %v3627 = vadd.f32 %v3626, %v3593
        %v3628 = vadd.f32 %v3627, %v3599
        %v3629 = vadd.f32 %v3628, %v3603
        %v3630 = vadd.f32 %v3629, %v3609
        %v3631 = vadd.f32 %v3630, %v3613
        %v3632 = vrot.slane %v3631, 4
        %v3633 = vadd.f32 %v3631, %v3632
        %v3634 = vrot.slane %v3633, 2
        %v3635 = vadd.f32 %v3633, %v3634
        %v3636 = vrot.slane %v3635, 1
        %v3637 = vadd.f32 %v3635, %v3636
        %v3638 = vadd.f32 %v3541, %v3545
        %v3639 = vadd.f32 %v3638, %v3551
        %v3640 = vadd.f32 %v3639, %v3555
        %v3641 = vadd.f32 %v3640, %v3561
        %v3642 = vadd.f32 %v3641, %v3565
        %v3643 = vadd.f32 %v3642, %v3571
        %v3644 = vadd.f32 %v3643, %v3575
        %v3645 = vadd.f32 %v3644, %v3581
        %v3646 = vadd.f32 %v3645, %v3585
        %v3647 = vadd.f32 %v3646, %v3591
        %v3648 = vadd.f32 %v3647, %v3595
        %v3649 = vadd.f32 %v3648, %v3601
        %v3650 = vadd.f32 %v3649, %v3605
        %v3651 = vadd.f32 %v3650, %v3611
        %v3652 = vadd.f32 %v3651, %v3615
        %v3653 = vrot.slane %v3652, 4
        %v3654 = vadd.f32 %v3652, %v3653
        %v3655 = vrot.slane %v3654, 2
        %v3656 = vadd.f32 %v3654, %v3655
        %v3657 = vrot.slane %v3656, 1
        %v3658 = vadd.f32 %v3656, %v3657
        %v3659 = vmul.f32 %v3637, 0.0078125
        %v3660 = vmul.f32 %v3658, 0.0078125
        %v3661 = vsub.f32 %v3539, %v3659
        %v3662 = vsub.f32 %v3541, %v3660
        %v3663 = vsub.f32 %v3543, %v3659
        %v3664 = vsub.f32 %v3545, %v3660
        %v3665 = vsub.f32 %v3549, %v3659
        %v3666 = vsub.f32 %v3551, %v3660
        %v3667 = vsub.f32 %v3553, %v3659
        %v3668 = vsub.f32 %v3555, %v3660
        %v3669 = vsub.f32 %v3559, %v3659
        %v3670 = vsub.f32 %v3561, %v3660
        %v3671 = vsub.f32 %v3563, %v3659
        %v3672 = vsub.f32 %v3565, %v3660
        %v3673 = vsub.f32 %v3569, %v3659
        %v3674 = vsub.f32 %v3571, %v3660
        %v3675 = vsub.f32 %v3573, %v3659
        %v3676 = vsub.f32 %v3575, %v3660
        %v3677 = vsub.f32 %v3579, %v3659
        %v3678 = vsub.f32 %v3581, %v3660
        %v3679 = vsub.f32 %v3583, %v3659
        %v3680 = vsub.f32 %v3585, %v3660
        %v3681 = vsub.f32 %v3589, %v3659
        %v3682 = vsub.f32 %v3591, %v3660
        %v3683 = vsub.f32 %v3593, %v3659
        %v3684 = vsub.f32 %v3595, %v3660
        %v3685 = vsub.f32 %v3599, %v3659
        %v3686 = vsub.f32 %v3601, %v3660
        %v3687 = vsub.f32 %v3603, %v3659
        %v3688 = vsub.f32 %v3605, %v3660
        %v3689 = vsub.f32 %v3609, %v3659
        %v3690 = vsub.f32 %v3611, %v3660
        %v3691 = vsub.f32 %v3613, %v3659
        %v3692 = vsub.f32 %v3615, %v3660
        %v3693 = vmul.f32 %v3661, %v3661
        %v3694 = vmul.f32 %v3662, %v3662
        %v3695 = vmul.f32 %v3663, %v3663
        %v3696 = vmul.f32 %v3664, %v3664
        %v3697 = vmul.f32 %v3665, %v3665
        %v3698 = vmul.f32 %v3666, %v3666
        %v3699 = vmul.f32 %v3667, %v3667
        %v3700 = vmul.f32 %v3668, %v3668
        %v3701 = vmul.f32 %v3669, %v3669
        %v3702 = vmul.f32 %v3670, %v3670
        %v3703 = vmul.f32 %v3671, %v3671
        %v3704 = vmul.f32 %v3672, %v3672
        %v3705 = vmul.f32 %v3673, %v3673
        %v3706 = vmul.f32 %v3674, %v3674
        %v3707 = vmul.f32 %v3675, %v3675
        %v3708 = vmul.f32 %v3676, %v3676
        %v3709 = vmul.f32 %v3677, %v3677
        %v3710 = vmul.f32 %v3678, %v3678
        %v3711 = vmul.f32 %v3679, %v3679
        %v3712 = vmul.f32 %v3680, %v3680
        %v3713 = vmul.f32 %v3681, %v3681
        %v3714 = vmul.f32 %v3682, %v3682
        %v3715 = vmul.f32 %v3683, %v3683
        %v3716 = vmul.f32 %v3684, %v3684
        %v3717 = vmul.f32 %v3685, %v3685
        %v3718 = vmul.f32 %v3686, %v3686
        %v3719 = vmul.f32 %v3687, %v3687
        %v3720 = vmul.f32 %v3688, %v3688
        %v3721 = vmul.f32 %v3689, %v3689
        %v3722 = vmul.f32 %v3690, %v3690
        %v3723 = vmul.f32 %v3691, %v3691
        %v3724 = vmul.f32 %v3692, %v3692
        %v3725 = vadd.f32 %v3693, %v3695
        %v3726 = vadd.f32 %v3725, %v3697
        %v3727 = vadd.f32 %v3726, %v3699
        %v3728 = vadd.f32 %v3727, %v3701
        %v3729 = vadd.f32 %v3728, %v3703
        %v3730 = vadd.f32 %v3729, %v3705
        %v3731 = vadd.f32 %v3730, %v3707
        %v3732 = vadd.f32 %v3731, %v3709
        %v3733 = vadd.f32 %v3732, %v3711
        %v3734 = vadd.f32 %v3733, %v3713
        %v3735 = vadd.f32 %v3734, %v3715
        %v3736 = vadd.f32 %v3735, %v3717
        %v3737 = vadd.f32 %v3736, %v3719
        %v3738 = vadd.f32 %v3737, %v3721
        %v3739 = vadd.f32 %v3738, %v3723
        %v3740 = vrot.slane %v3739, 4
        %v3741 = vadd.f32 %v3739, %v3740
        %v3742 = vrot.slane %v3741, 2
        %v3743 = vadd.f32 %v3741, %v3742
        %v3744 = vrot.slane %v3743, 1
        %v3745 = vadd.f32 %v3743, %v3744
        %v3746 = vadd.f32 %v3694, %v3696
        %v3747 = vadd.f32 %v3746, %v3698
        %v3748 = vadd.f32 %v3747, %v3700
        %v3749 = vadd.f32 %v3748, %v3702
        %v3750 = vadd.f32 %v3749, %v3704
        %v3751 = vadd.f32 %v3750, %v3706
        %v3752 = vadd.f32 %v3751, %v3708
        %v3753 = vadd.f32 %v3752, %v3710
        %v3754 = vadd.f32 %v3753, %v3712
        %v3755 = vadd.f32 %v3754, %v3714
        %v3756 = vadd.f32 %v3755, %v3716
        %v3757 = vadd.f32 %v3756, %v3718
        %v3758 = vadd.f32 %v3757, %v3720
        %v3759 = vadd.f32 %v3758, %v3722
        %v3760 = vadd.f32 %v3759, %v3724
        %v3761 = vrot.slane %v3760, 4
        %v3762 = vadd.f32 %v3760, %v3761
        %v3763 = vrot.slane %v3762, 2
        %v3764 = vadd.f32 %v3762, %v3763
        %v3765 = vrot.slane %v3764, 1
        %v3766 = vadd.f32 %v3764, %v3765
        %v3767 = vmul.f32 %v3745, 0.0078125
        %v3768 = vmul.f32 %v3766, 0.0078125
        %v3769 = vadd.f32 %v3767, 1e-05
        %v3770 = vadd.f32 %v3768, 1e-05
        %v3771 = vrsqrt.pop %v3769
        %v3772 = vrsqrt.pop %v3770
        %v3773 = vmul.f32 %v3661, %v3771
        %v3774 = vmul.f32 %v3662, %v3772
        %v3775 = vmul.f32 %v3663, %v3771
        %v3776 = vmul.f32 %v3664, %v3772
        %v3777 = vmul.f32 %v3665, %v3771
        %v3778 = vmul.f32 %v3666, %v3772
        %v3779 = vmul.f32 %v3667, %v3771
        %v3780 = vmul.f32 %v3668, %v3772
        %v3781 = vmul.f32 %v3669, %v3771
        %v3782 = vmul.f32 %v3670, %v3772
        %v3783 = vmul.f32 %v3671, %v3771
        %v3784 = vmul.f32 %v3672, %v3772
        %v3785 = vmul.f32 %v3673, %v3771
        %v3786 = vmul.f32 %v3674, %v3772
        %v3787 = vmul.f32 %v3675, %v3771
        %v3788 = vmul.f32 %v3676, %v3772
        %v3789 = vmul.f32 %v3677, %v3771
        %v3790 = vmul.f32 %v3678, %v3772
        %v3791 = vmul.f32 %v3679, %v3771
        %v3792 = vmul.f32 %v3680, %v3772
        %v3793 = vmul.f32 %v3681, %v3771
        %v3794 = vmul.f32 %v3682, %v3772
        %v3795 = vmul.f32 %v3683, %v3771
        %v3796 = vmul.f32 %v3684, %v3772
        %v3797 = vmul.f32 %v3685, %v3771
        %v3798 = vmul.f32 %v3686, %v3772
        %v3799 = vmul.f32 %v3687, %v3771
        %v3800 = vmul.f32 %v3688, %v3772
        %v3801 = vmul.f32 %v3689, %v3771
        %v3802 = vmul.f32 %v3690, %v3772
        %v3803 = vmul.f32 %v3691, %v3771
        %v3804 = vmul.f32 %v3692, %v3772
        %v3806 = vlaneseq
        %v3807 = vshrl.u32 %v3806, 7
        %v3808 = vsub.s32 0, %v3807
        %v3809 = vrot.slane %v3414, %v3808
        %v3810 = vlaneseq
        %v3811 = vshrl.u32 %v3810, 7
        %v3812 = vsub.s32 1, %v3811
        %v3813 = vrot.slane %v3414, %v3812
        %v3816 = vmul.f32 %v3773, %v3809
        %v3817 = vmul.f32 %v3774, %v3813
        %v3818 = vmul.f32 %v3775, %v3809
        %v3819 = vmul.f32 %v3776, %v3813
        %v3820 = vmul.f32 %v3777, %v3809
        %v3821 = vmul.f32 %v3778, %v3813
        %v3822 = vmul.f32 %v3779, %v3809
        %v3823 = vmul.f32 %v3780, %v3813
        %v3824 = vmul.f32 %v3781, %v3809
        %v3825 = vmul.f32 %v3782, %v3813
        %v3826 = vmul.f32 %v3783, %v3809
        %v3827 = vmul.f32 %v3784, %v3813
        %v3828 = vmul.f32 %v3785, %v3809
        %v3829 = vmul.f32 %v3786, %v3813
        %v3830 = vmul.f32 %v3787, %v3809
        %v3831 = vmul.f32 %v3788, %v3813
        %v3832 = vmul.f32 %v3789, %v3809
        %v3833 = vmul.f32 %v3790, %v3813
        %v3834 = vmul.f32 %v3791, %v3809
        %v3835 = vmul.f32 %v3792, %v3813
        %v3836 = vmul.f32 %v3793, %v3809
        %v3837 = vmul.f32 %v3794, %v3813
        %v3838 = vmul.f32 %v3795, %v3809
        %v3839 = vmul.f32 %v3796, %v3813
        %v3840 = vmul.f32 %v3797, %v3809
        %v3841 = vmul.f32 %v3798, %v3813
        %v3842 = vmul.f32 %v3799, %v3809
        %v3843 = vmul.f32 %v3800, %v3813
        %v3844 = vmul.f32 %v3801, %v3809
        %v3845 = vmul.f32 %v3802, %v3813
        %v3846 = vmul.f32 %v3803, %v3809
        %v3847 = vmul.f32 %v3804, %v3813
        %v3849 = vlaneseq
        %v3850 = vshrl.u32 %v3849, 7
        %v3851 = vsub.s32 0, %v3850
        %v3852 = vrot.slane %v3415, %v3851
        %v3853 = vlaneseq
        %v3854 = vshrl.u32 %v3853, 7
        %v3855 = vsub.s32 1, %v3854
        %v3856 = vrot.slane %v3415, %v3855
        %v3859 = vadd.f32 %v3816, %v3852
        %v3860 = vadd.f32 %v3817, %v3856
        %v3861 = vadd.f32 %v3818, %v3852
        %v3862 = vadd.f32 %v3819, %v3856
        %v3863 = vadd.f32 %v3820, %v3852
        %v3864 = vadd.f32 %v3821, %v3856
        %v3865 = vadd.f32 %v3822, %v3852
        %v3866 = vadd.f32 %v3823, %v3856
        %v3867 = vadd.f32 %v3824, %v3852
        %v3868 = vadd.f32 %v3825, %v3856
        %v3869 = vadd.f32 %v3826, %v3852
        %v3870 = vadd.f32 %v3827, %v3856
        %v3871 = vadd.f32 %v3828, %v3852
        %v3872 = vadd.f32 %v3829, %v3856
        %v3873 = vadd.f32 %v3830, %v3852
        %v3874 = vadd.f32 %v3831, %v3856
        %v3875 = vadd.f32 %v3832, %v3852
        %v3876 = vadd.f32 %v3833, %v3856
        %v3877 = vadd.f32 %v3834, %v3852
        %v3878 = vadd.f32 %v3835, %v3856
        %v3879 = vadd.f32 %v3836, %v3852
        %v3880 = vadd.f32 %v3837, %v3856
        %v3881 = vadd.f32 %v3838, %v3852
        %v3882 = vadd.f32 %v3839, %v3856
        %v3883 = vadd.f32 %v3840, %v3852
        %v3884 = vadd.f32 %v3841, %v3856
        %v3885 = vadd.f32 %v3842, %v3852
        %v3886 = vadd.f32 %v3843, %v3856
        %v3887 = vadd.f32 %v3844, %v3852
        %v3888 = vadd.f32 %v3845, %v3856
        %v3889 = vadd.f32 %v3846, %v3852
        %v3890 = vadd.f32 %v3847, %v3856
        %v3891 = vmax.f32 %v3859, 0.0
        %v3892 = vmax.f32 %v3860, 0.0
        %v3893 = vmax.f32 %v3861, 0.0
        %v3894 = vmax.f32 %v3862, 0.0
        %v3895 = vmax.f32 %v3863, 0.0
        %v3896 = vmax.f32 %v3864, 0.0
        %v3897 = vmax.f32 %v3865, 0.0
        %v3898 = vmax.f32 %v3866, 0.0
        %v3899 = vmax.f32 %v3867, 0.0
        %v3900 = vmax.f32 %v3868, 0.0
        %v3901 = vmax.f32 %v3869, 0.0
        %v3902 = vmax.f32 %v3870, 0.0
        %v3903 = vmax.f32 %v3871, 0.0
        %v3904 = vmax.f32 %v3872, 0.0
        %v3905 = vmax.f32 %v3873, 0.0
        %v3906 = vmax.f32 %v3874, 0.0
        %v3907 = vmax.f32 %v3875, 0.0
        %v3908 = vmax.f32 %v3876, 0.0
        %v3909 = vmax.f32 %v3877, 0.0
        %v3910 = vmax.f32 %v3878, 0.0
        %v3911 = vmax.f32 %v3879, 0.0
        %v3912 = vmax.f32 %v3880, 0.0
        %v3913 = vmax.f32 %v3881, 0.0
        %v3914 = vmax.f32 %v3882, 0.0
        %v3915 = vmax.f32 %v3883, 0.0
        %v3916 = vmax.f32 %v3884, 0.0
        %v3917 = vmax.f32 %v3885, 0.0
        %v3918 = vmax.f32 %v3886, 0.0
        %v3919 = vmax.f32 %v3887, 0.0
        %v3920 = vmax.f32 %v3888, 0.0
        %v3921 = vmax.f32 %v3889, 0.0
        %v3922 = vmax.f32 %v3890, 0.0
        %v3923 = vld [vmem:[#allocation16] sm:$0xff]
        %v3924 = vld [vmem:[#allocation16 + $0x8] sm:$0xff]
        %v3925 = vld [vmem:[#allocation16 + $0x10] sm:$0xff]
        %v3926 = vld [vmem:[#allocation16 + $0x18] sm:$0xff]
        %v3927 = vld [vmem:[#allocation16 + $0x20] sm:$0xff]
        %v3928 = vld [vmem:[#allocation16 + $0x28] sm:$0xff]
        %v3929 = vld [vmem:[#allocation16 + $0x30] sm:$0xff]
        %v3930 = vld [vmem:[#allocation16 + $0x38] sm:$0xff]
        %v3931 = vld [vmem:[#allocation16 + $0x40] sm:$0xff]
        %v3932 = vld [vmem:[#allocation16 + $0x48] sm:$0xff]
        %v3933 = vld [vmem:[#allocation16 + $0x50] sm:$0xff]
        %v3934 = vld [vmem:[#allocation16 + $0x58] sm:$0xff]
        %v3935 = vld [vmem:[#allocation16 + $0x60] sm:$0xff]
        %v3936 = vld [vmem:[#allocation16 + $0x68] sm:$0xff]
        %v3937 = vld [vmem:[#allocation16 + $0x70] sm:$0xff]
        %v3938 = vld [vmem:[#allocation16 + $0x78] sm:$0xff]
        %v3939 = vld [vmem:[#allocation16 + $0x80] sm:$0xff]
        %v3940 = vld [vmem:[#allocation16 + $0x88] sm:$0xff]
        %v3941 = vld [vmem:[#allocation16 + $0x90] sm:$0xff]
        %v3942 = vld [vmem:[#allocation16 + $0x98] sm:$0xff]
        %v3943 = vld [vmem:[#allocation16 + $0xa0] sm:$0xff]
        %v3944 = vld [vmem:[#allocation16 + $0xa8] sm:$0xff]
        %v3945 = vld [vmem:[#allocation16 + $0xb0] sm:$0xff]
        %v3946 = vld [vmem:[#allocation16 + $0xb8] sm:$0xff]
        %v3947 = vld [vmem:[#allocation16 + $0xc0] sm:$0xff]
        %v3948 = vld [vmem:[#allocation16 + $0xc8] sm:$0xff]
        %v3949 = vld [vmem:[#allocation16 + $0xd0] sm:$0xff]
        %v3950 = vld [vmem:[#allocation16 + $0xd8] sm:$0xff]
        %v3951 = vld [vmem:[#allocation16 + $0xe0] sm:$0xff]
        %v3952 = vld [vmem:[#allocation16 + $0xe8] sm:$0xff]
        %v3953 = vld [vmem:[#allocation16 + $0xf0] sm:$0xff]
        %v3954 = vld [vmem:[#allocation16 + $0xf8] sm:$0xff]
        %v3955 = vld [vmem:[#allocation16 + $0x100] sm:$0xff]
        %v3956 = vld [vmem:[#allocation16 + $0x108] sm:$0xff]
        %v3957 = vld [vmem:[#allocation16 + $0x110] sm:$0xff]
        %v3958 = vld [vmem:[#allocation16 + $0x118] sm:$0xff]
        %v3959 = vld [vmem:[#allocation16 + $0x120] sm:$0xff]
        %v3960 = vld [vmem:[#allocation16 + $0x128] sm:$0xff]
        %v3961 = vld [vmem:[#allocation16 + $0x130] sm:$0xff]
        %v3962 = vld [vmem:[#allocation16 + $0x138] sm:$0xff]
        %v3963 = vld [vmem:[#allocation16 + $0x140] sm:$0xff]
        %v3964 = vld [vmem:[#allocation16 + $0x148] sm:$0xff]
        %v3965 = vld [vmem:[#allocation16 + $0x150] sm:$0xff]
        %v3966 = vld [vmem:[#allocation16 + $0x158] sm:$0xff]
        %v3967 = vld [vmem:[#allocation16 + $0x160] sm:$0xff]
        %v3968 = vld [vmem:[#allocation16 + $0x168] sm:$0xff]
        %v3969 = vld [vmem:[#allocation16 + $0x170] sm:$0xff]
        %v3970 = vld [vmem:[#allocation16 + $0x178] sm:$0xff]
        %v3971 = vld [vmem:[#allocation16 + $0x180] sm:$0xff]
        %v3972 = vld [vmem:[#allocation16 + $0x188] sm:$0xff]
        %v3973 = vld [vmem:[#allocation16 + $0x190] sm:$0xff]
        %v3974 = vld [vmem:[#allocation16 + $0x198] sm:$0xff]
        %v3975 = vld [vmem:[#allocation16 + $0x1a0] sm:$0xff]
        %v3976 = vld [vmem:[#allocation16 + $0x1a8] sm:$0xff]
        %v3977 = vld [vmem:[#allocation16 + $0x1b0] sm:$0xff]
        %v3978 = vld [vmem:[#allocation16 + $0x1b8] sm:$0xff]
        %v3979 = vld [vmem:[#allocation16 + $0x1c0] sm:$0xff]
        %v3980 = vld [vmem:[#allocation16 + $0x1c8] sm:$0xff]
        %v3981 = vld [vmem:[#allocation16 + $0x1d0] sm:$0xff]
        %v3982 = vld [vmem:[#allocation16 + $0x1d8] sm:$0xff]
        %v3983 = vld [vmem:[#allocation16 + $0x1e0] sm:$0xff]
        %v3984 = vld [vmem:[#allocation16 + $0x1e8] sm:$0xff]
        %v3985 = vld [vmem:[#allocation16 + $0x1f0] sm:$0xff]
        %v3986 = vld [vmem:[#allocation16 + $0x1f8] sm:$0xff]
        %v3987 = vld [vmem:[#allocation17] sm:$0xf]
        %v3988 = vld [vmem:[#allocation19] sm:$0xf]
        %v3989 = vpack.c.bf16 %v3893, %v3891
        %v3990 = vpack.c.bf16 %v3894, %v3892
        %v3991 = vpack.c.bf16 %v3897, %v3895
        %v3992 = vpack.c.bf16 %v3898, %v3896
        %v3993 = vpack.c.bf16 %v3901, %v3899
        %v3994 = vpack.c.bf16 %v3902, %v3900
        %v3995 = vpack.c.bf16 %v3905, %v3903
        %v3996 = vpack.c.bf16 %v3906, %v3904
        %v3997 = vpack.c.bf16 %v3909, %v3907
        %v3998 = vpack.c.bf16 %v3910, %v3908
        %v3999 = vpack.c.bf16 %v3913, %v3911
        %v4000 = vpack.c.bf16 %v3914, %v3912
        %v4001 = vpack.c.bf16 %v3917, %v3915
        %v4002 = vpack.c.bf16 %v3918, %v3916
        %v4003 = vpack.c.bf16 %v3921, %v3919
        %v4004 = vpack.c.bf16 %v3922, %v3920
        %v4069 = vunpack.c.l.b16 %v3923
        %v4070 = vunpack.c.h.b16 %v3923
        %v4071 = vunpack.c.l.b16 %v3924
        %v4072 = vunpack.c.h.b16 %v3924
        %v4073 = vunpack.c.l.b16 %v3925
        %v4074 = vunpack.c.h.b16 %v3925
        %v4075 = vunpack.c.l.b16 %v3926
        %v4076 = vunpack.c.h.b16 %v3926
        %v4077 = vunpack.c.l.b16 %v3927
        %v4078 = vunpack.c.h.b16 %v3927
        %v4079 = vunpack.c.l.b16 %v3928
        %v4080 = vunpack.c.h.b16 %v3928
        %v4081 = vunpack.c.l.b16 %v3929
        %v4082 = vunpack.c.h.b16 %v3929
        %v4083 = vunpack.c.l.b16 %v3930
        %v4084 = vunpack.c.h.b16 %v3930
        %v4085 = vunpack.c.l.b16 %v3931
        %v4086 = vunpack.c.h.b16 %v3931
        %v4087 = vunpack.c.l.b16 %v3932
        %v4088 = vunpack.c.h.b16 %v3932
        %v4089 = vunpack.c.l.b16 %v3933
        %v4090 = vunpack.c.h.b16 %v3933
        %v4091 = vunpack.c.l.b16 %v3934
        %v4092 = vunpack.c.h.b16 %v3934
        %v4093 = vunpack.c.l.b16 %v3935
        %v4094 = vunpack.c.h.b16 %v3935
        %v4095 = vunpack.c.l.b16 %v3936
        %v4096 = vunpack.c.h.b16 %v3936
        %v4097 = vunpack.c.l.b16 %v3937
        %v4098 = vunpack.c.h.b16 %v3937
        %v4099 = vunpack.c.l.b16 %v3938
        %v4100 = vunpack.c.h.b16 %v3938
        %v4101 = vunpack.c.l.b16 %v3939
        %v4102 = vunpack.c.h.b16 %v3939
        %v4103 = vunpack.c.l.b16 %v3940
        %v4104 = vunpack.c.h.b16 %v3940
        %v4105 = vunpack.c.l.b16 %v3941
        %v4106 = vunpack.c.h.b16 %v3941
        %v4107 = vunpack.c.l.b16 %v3942
        %v4108 = vunpack.c.h.b16 %v3942
        %v4109 = vunpack.c.l.b16 %v3943
        %v4110 = vunpack.c.h.b16 %v3943
        %v4111 = vunpack.c.l.b16 %v3944
        %v4112 = vunpack.c.h.b16 %v3944
        %v4113 = vunpack.c.l.b16 %v3945
        %v4114 = vunpack.c.h.b16 %v3945
        %v4115 = vunpack.c.l.b16 %v3946
        %v4116 = vunpack.c.h.b16 %v3946
        %v4117 = vunpack.c.l.b16 %v3947
        %v4118 = vunpack.c.h.b16 %v3947
        %v4119 = vunpack.c.l.b16 %v3948
        %v4120 = vunpack.c.h.b16 %v3948
        %v4121 = vunpack.c.l.b16 %v3949
        %v4122 = vunpack.c.h.b16 %v3949
        %v4123 = vunpack.c.l.b16 %v3950
        %v4124 = vunpack.c.h.b16 %v3950
        %v4125 = vunpack.c.l.b16 %v3951
        %v4126 = vunpack.c.h.b16 %v3951
        %v4127 = vunpack.c.l.b16 %v3952
        %v4128 = vunpack.c.h.b16 %v3952
        %v4129 = vunpack.c.l.b16 %v3953
        %v4130 = vunpack.c.h.b16 %v3953
        %v4131 = vunpack.c.l.b16 %v3954
        %v4132 = vunpack.c.h.b16 %v3954
        %v4133 = vunpack.c.l.b16 %v3955
        %v4134 = vunpack.c.h.b16 %v3955
        %v4135 = vunpack.c.l.b16 %v3956
        %v4136 = vunpack.c.h.b16 %v3956
        %v4137 = vunpack.c.l.b16 %v3957
        %v4138 = vunpack.c.h.b16 %v3957
        %v4139 = vunpack.c.l.b16 %v3958
        %v4140 = vunpack.c.h.b16 %v3958
        %v4141 = vunpack.c.l.b16 %v3959
        %v4142 = vunpack.c.h.b16 %v3959
        %v4143 = vunpack.c.l.b16 %v3960
        %v4144 = vunpack.c.h.b16 %v3960
        %v4145 = vunpack.c.l.b16 %v3961
        %v4146 = vunpack.c.h.b16 %v3961
        %v4147 = vunpack.c.l.b16 %v3962
        %v4148 = vunpack.c.h.b16 %v3962
        %v4149 = vunpack.c.l.b16 %v3963
        %v4150 = vunpack.c.h.b16 %v3963
        %v4151 = vunpack.c.l.b16 %v3964
        %v4152 = vunpack.c.h.b16 %v3964
        %v4153 = vunpack.c.l.b16 %v3965
        %v4154 = vunpack.c.h.b16 %v3965
        %v4155 = vunpack.c.l.b16 %v3966
        %v4156 = vunpack.c.h.b16 %v3966
        %v4157 = vunpack.c.l.b16 %v3967
        %v4158 = vunpack.c.h.b16 %v3967
        %v4159 = vunpack.c.l.b16 %v3968
        %v4160 = vunpack.c.h.b16 %v3968
        %v4161 = vunpack.c.l.b16 %v3969
        %v4162 = vunpack.c.h.b16 %v3969
        %v4163 = vunpack.c.l.b16 %v3970
        %v4164 = vunpack.c.h.b16 %v3970
        %v4165 = vunpack.c.l.b16 %v3971
        %v4166 = vunpack.c.h.b16 %v3971
        %v4167 = vunpack.c.l.b16 %v3972
        %v4168 = vunpack.c.h.b16 %v3972
        %v4169 = vunpack.c.l.b16 %v3973
        %v4170 = vunpack.c.h.b16 %v3973
        %v4171 = vunpack.c.l.b16 %v3974
        %v4172 = vunpack.c.h.b16 %v3974
        %v4173 = vunpack.c.l.b16 %v3975
        %v4174 = vunpack.c.h.b16 %v3975
        %v4175 = vunpack.c.l.b16 %v3976
        %v4176 = vunpack.c.h.b16 %v3976
        %v4177 = vunpack.c.l.b16 %v3977
        %v4178 = vunpack.c.h.b16 %v3977
        %v4179 = vunpack.c.l.b16 %v3978
        %v4180 = vunpack.c.h.b16 %v3978
        %v4181 = vunpack.c.l.b16 %v3979
        %v4182 = vunpack.c.h.b16 %v3979
        %v4183 = vunpack.c.l.b16 %v3980
        %v4184 = vunpack.c.h.b16 %v3980
        %v4185 = vunpack.c.l.b16 %v3981
        %v4186 = vunpack.c.h.b16 %v3981
        %v4187 = vunpack.c.l.b16 %v3982
        %v4188 = vunpack.c.h.b16 %v3982
        %v4189 = vunpack.c.l.b16 %v3983
        %v4190 = vunpack.c.h.b16 %v3983
        %v4191 = vunpack.c.l.b16 %v3984
        %v4192 = vunpack.c.h.b16 %v3984
        %v4193 = vunpack.c.l.b16 %v3985
        %v4194 = vunpack.c.h.b16 %v3985
        %v4195 = vunpack.c.l.b16 %v3986
        %v4196 = vunpack.c.h.b16 %v3986
        %v4197 = vpack.c.b16 %v4073, %v4069
        %v4198 = vpack.c.b16 %v4074, %v4070
        %v4199 = vpack.c.b16 %v4075, %v4071
        %v4200 = vpack.c.b16 %v4076, %v4072
        %v4201 = vpack.c.b16 %v4081, %v4077
        %v4202 = vpack.c.b16 %v4082, %v4078
        %v4203 = vpack.c.b16 %v4083, %v4079
        %v4204 = vpack.c.b16 %v4084, %v4080
        %v4205 = vpack.c.b16 %v4089, %v4085
        %v4206 = vpack.c.b16 %v4090, %v4086
        %v4207 = vpack.c.b16 %v4091, %v4087
        %v4208 = vpack.c.b16 %v4092, %v4088
        %v4209 = vpack.c.b16 %v4097, %v4093
        %v4210 = vpack.c.b16 %v4098, %v4094
        %v4211 = vpack.c.b16 %v4099, %v4095
        %v4212 = vpack.c.b16 %v4100, %v4096
        %v4213 = vpack.c.b16 %v4105, %v4101
        %v4214 = vpack.c.b16 %v4106, %v4102
        %v4215 = vpack.c.b16 %v4107, %v4103
        %v4216 = vpack.c.b16 %v4108, %v4104
        %v4217 = vpack.c.b16 %v4113, %v4109
        %v4218 = vpack.c.b16 %v4114, %v4110
        %v4219 = vpack.c.b16 %v4115, %v4111
        %v4220 = vpack.c.b16 %v4116, %v4112
        %v4221 = vpack.c.b16 %v4121, %v4117
        %v4222 = vpack.c.b16 %v4122, %v4118
        %v4223 = vpack.c.b16 %v4123, %v4119
        %v4224 = vpack.c.b16 %v4124, %v4120
        %v4225 = vpack.c.b16 %v4129, %v4125
        %v4226 = vpack.c.b16 %v4130, %v4126
        %v4227 = vpack.c.b16 %v4131, %v4127
        %v4228 = vpack.c.b16 %v4132, %v4128
        %v4229 = vpack.c.b16 %v4137, %v4133
        %v4230 = vpack.c.b16 %v4138, %v4134
        %v4231 = vpack.c.b16 %v4139, %v4135
        %v4232 = vpack.c.b16 %v4140, %v4136
        %v4233 = vpack.c.b16 %v4145, %v4141
        %v4234 = vpack.c.b16 %v4146, %v4142
        %v4235 = vpack.c.b16 %v4147, %v4143
        %v4236 = vpack.c.b16 %v4148, %v4144
        %v4237 = vpack.c.b16 %v4153, %v4149
        %v4238 = vpack.c.b16 %v4154, %v4150
        %v4239 = vpack.c.b16 %v4155, %v4151
        %v4240 = vpack.c.b16 %v4156, %v4152
        %v4241 = vpack.c.b16 %v4161, %v4157
        %v4242 = vpack.c.b16 %v4162, %v4158
        %v4243 = vpack.c.b16 %v4163, %v4159
        %v4244 = vpack.c.b16 %v4164, %v4160
        %v4245 = vpack.c.b16 %v4169, %v4165
        %v4246 = vpack.c.b16 %v4170, %v4166
        %v4247 = vpack.c.b16 %v4171, %v4167
        %v4248 = vpack.c.b16 %v4172, %v4168
        %v4249 = vpack.c.b16 %v4177, %v4173
        %v4250 = vpack.c.b16 %v4178, %v4174
        %v4251 = vpack.c.b16 %v4179, %v4175
        %v4252 = vpack.c.b16 %v4180, %v4176
        %v4253 = vpack.c.b16 %v4185, %v4181
        %v4254 = vpack.c.b16 %v4186, %v4182
        %v4255 = vpack.c.b16 %v4187, %v4183
        %v4256 = vpack.c.b16 %v4188, %v4184
        %v4257 = vpack.c.b16 %v4193, %v4189
        %v4258 = vpack.c.b16 %v4194, %v4190
        %v4259 = vpack.c.b16 %v4195, %v4191
        %v4260 = vpack.c.b16 %v4196, %v4192
        %4325 = vmatprep.subr.bf16.mxu0 %v4198
        %4326 = vmatpush1.bf16.msra.mxu0 %v4197
        %4327 = vmatprep.subr.bf16.mxu0 %v4202
        %4328 = vmatpush1.bf16.msra.mxu0 %v4201
        %4329 = vmatprep.subr.bf16.mxu0 %v4206
        %4330 = vmatpush1.bf16.msra.mxu0 %v4205
        %4331 = vmatprep.subr.bf16.mxu0 %v4210
        %4332 = vmatpush1.bf16.msra.mxu0 %v4209
        %4333 = vmatprep.subr.bf16.mxu0 %v4214
        %4334 = vmatpush1.bf16.msra.mxu0 %v4213
        %4335 = vmatprep.subr.bf16.mxu0 %v4218
        %4336 = vmatpush1.bf16.msra.mxu0 %v4217
        %4337 = vmatprep.subr.bf16.mxu0 %v4222
        %4338 = vmatpush1.bf16.msra.mxu0 %v4221
        %4339 = vmatprep.subr.bf16.mxu0 %v4226
        %4340 = vmatpush1.bf16.msra.mxu0 %v4225
        %4341 = vmatprep.subr.bf16.mxu0 %v4230
        %4342 = vmatpush1.bf16.msra.mxu0 %v4229
        %4343 = vmatprep.subr.bf16.mxu0 %v4234
        %4344 = vmatpush1.bf16.msra.mxu0 %v4233
        %4345 = vmatprep.subr.bf16.mxu0 %v4238
        %4346 = vmatpush1.bf16.msra.mxu0 %v4237
        %4347 = vmatprep.subr.bf16.mxu0 %v4242
        %4348 = vmatpush1.bf16.msra.mxu0 %v4241
        %4349 = vmatprep.subr.bf16.mxu0 %v4246
        %4350 = vmatpush1.bf16.msra.mxu0 %v4245
        %4351 = vmatprep.subr.bf16.mxu0 %v4250
        %4352 = vmatpush1.bf16.msra.mxu0 %v4249
        %4353 = vmatprep.subr.bf16.mxu0 %v4254
        %4354 = vmatpush1.bf16.msra.mxu0 %v4253
        %4355 = vmatprep.subr.bf16.mxu0 %v4258
        %4356 = vmatpush1.bf16.msra.mxu0 %v4257
        %4357 = vmatprep.mubr.bf16.mxu0 %v3990
        %4358 = vmatmul.mubr.bf16.gmra.mrb[0].mxu0 %v3989
        %v4359 = vpop.f32.mrb[0].mxu0
        %v4360 = vadd.f32 0.0, %v4359
        %v4361 = vpop.f32.mrb[0].mxu0
        %v4362 = vadd.f32 0.0, %v4361
        %v4363 = vpop.f32.mrb[0].mxu0
        %v4364 = vadd.f32 0.0, %v4363
        %v4365 = vpop.f32.mrb[0].mxu0
        %v4366 = vadd.f32 0.0, %v4365
        %4367 = vmatprep.mubr.bf16.mxu0 %v3992
        %4368 = vmatmul.mubr.bf16.gmra.mrb[0].mxu0 %v3991
        %v4369 = vpop.f32.mrb[0].mxu0
        %v4370 = vadd.f32 0.0, %v4369
        %v4371 = vpop.f32.mrb[0].mxu0
        %v4372 = vadd.f32 0.0, %v4371
        %v4373 = vpop.f32.mrb[0].mxu0
        %v4374 = vadd.f32 0.0, %v4373
        %v4375 = vpop.f32.mrb[0].mxu0
        %v4376 = vadd.f32 0.0, %v4375
        %4377 = vmatprep.mubr.bf16.mxu0 %v3994
        %4378 = vmatmul.mubr.bf16.gmra.mrb[0].mxu0 %v3993
        %v4379 = vpop.f32.mrb[0].mxu0
        %v4380 = vadd.f32 0.0, %v4379
        %v4381 = vpop.f32.mrb[0].mxu0
        %v4382 = vadd.f32 0.0, %v4381
        %v4383 = vpop.f32.mrb[0].mxu0
        %v4384 = vadd.f32 0.0, %v4383
        %v4385 = vpop.f32.mrb[0].mxu0
        %v4386 = vadd.f32 0.0, %v4385
        %4387 = vmatprep.mubr.bf16.mxu0 %v3996
        %4388 = vmatmul.mubr.bf16.gmra.mrb[0].mxu0 %v3995
        %v4389 = vpop.f32.mrb[0].mxu0
        %v4390 = vadd.f32 0.0, %v4389
        %v4391 = vpop.f32.mrb[0].mxu0
        %v4392 = vadd.f32 0.0, %v4391
        %v4393 = vpop.f32.mrb[0].mxu0
        %v4394 = vadd.f32 0.0, %v4393
        %v4395 = vpop.f32.mrb[0].mxu0
        %v4396 = vadd.f32 0.0, %v4395
        %4397 = vmatprep.mubr.bf16.mxu0 %v3998
        %4398 = vmatmul.mubr.bf16.gmra.mrb[0].mxu0 %v3997
        %v4399 = vpop.f32.mrb[0].mxu0
        %v4400 = vadd.f32 0.0, %v4399
        %v4401 = vpop.f32.mrb[0].mxu0
        %v4402 = vadd.f32 0.0, %v4401
        %v4403 = vpop.f32.mrb[0].mxu0
        %v4404 = vadd.f32 0.0, %v4403
        %v4405 = vpop.f32.mrb[0].mxu0
        %v4406 = vadd.f32 0.0, %v4405
        %4407 = vmatprep.mubr.bf16.mxu0 %v4000
        %4408 = vmatmul.mubr.bf16.gmra.mrb[0].mxu0 %v3999
        %v4409 = vpop.f32.mrb[0].mxu0
        %v4410 = vadd.f32 0.0, %v4409
        %v4411 = vpop.f32.mrb[0].mxu0
        %v4412 = vadd.f32 0.0, %v4411
        %v4413 = vpop.f32.mrb[0].mxu0
        %v4414 = vadd.f32 0.0, %v4413
        %v4415 = vpop.f32.mrb[0].mxu0
        %v4416 = vadd.f32 0.0, %v4415
        %4417 = vmatprep.mubr.bf16.mxu0 %v4002
        %4418 = vmatmul.mubr.bf16.gmra.mrb[0].mxu0 %v4001
        %v4419 = vpop.f32.mrb[0].mxu0
        %v4420 = vadd.f32 0.0, %v4419
        %v4421 = vpop.f32.mrb[0].mxu0
        %v4422 = vadd.f32 0.0, %v4421
        %v4423 = vpop.f32.mrb[0].mxu0
        %v4424 = vadd.f32 0.0, %v4423
        %v4425 = vpop.f32.mrb[0].mxu0
        %v4426 = vadd.f32 0.0, %v4425
        %4427 = vmatprep.mubr.bf16.mxu0 %v4004
        %4428 = vmatmul.mubr.bf16.gmra.mrb[0].mxu0 %v4003
        %v4429 = vpop.f32.mrb[0].mxu0
        %v4430 = vadd.f32 0.0, %v4429
        %v4431 = vpop.f32.mrb[0].mxu0
        %v4432 = vadd.f32 0.0, %v4431
        %v4433 = vpop.f32.mrb[0].mxu0
        %v4434 = vadd.f32 0.0, %v4433
        %v4435 = vpop.f32.mrb[0].mxu0
        %v4436 = vadd.f32 0.0, %v4435
        %4437 = vdwg.mxu0
        %4438 = vmatprep.subr.bf16.mxu0 %v4200
        %4439 = vmatpush1.bf16.msra.mxu0 %v4199
        %4440 = vmatprep.subr.bf16.mxu0 %v4204
        %4441 = vmatpush1.bf16.msra.mxu0 %v4203
        %4442 = vmatprep.subr.bf16.mxu0 %v4208
        %4443 = vmatpush1.bf16.msra.mxu0 %v4207
        %4444 = vmatprep.subr.bf16.mxu0 %v4212
        %4445 = vmatpush1.bf16.msra.mxu0 %v4211
        %4446 = vmatprep.subr.bf16.mxu0 %v4216
        %4447 = vmatpush1.bf16.msra.mxu0 %v4215
        %4448 = vmatprep.subr.bf16.mxu0 %v4220
        %4449 = vmatpush1.bf16.msra.mxu0 %v4219
        %4450 = vmatprep.subr.bf16.mxu0 %v4224
        %4451 = vmatpush1.bf16.msra.mxu0 %v4223
        %4452 = vmatprep.subr.bf16.mxu0 %v4228
        %4453 = vmatpush1.bf16.msra.mxu0 %v4227
        %4454 = vmatprep.subr.bf16.mxu0 %v4232
        %4455 = vmatpush1.bf16.msra.mxu0 %v4231
        %4456 = vmatprep.subr.bf16.mxu0 %v4236
        %4457 = vmatpush1.bf16.msra.mxu0 %v4235
        %4458 = vmatprep.subr.bf16.mxu0 %v4240
        %4459 = vmatpush1.bf16.msra.mxu0 %v4239
        %4460 = vmatprep.subr.bf16.mxu0 %v4244
        %4461 = vmatpush1.bf16.msra.mxu0 %v4243
        %4462 = vmatprep.subr.bf16.mxu0 %v4248
        %4463 = vmatpush1.bf16.msra.mxu0 %v4247
        %4464 = vmatprep.subr.bf16.mxu0 %v4252
        %4465 = vmatpush1.bf16.msra.mxu0 %v4251
        %4466 = vmatprep.subr.bf16.mxu0 %v4256
        %4467 = vmatpush1.bf16.msra.mxu0 %v4255
        %4468 = vmatprep.subr.bf16.mxu0 %v4260
        %4469 = vmatpush1.bf16.msra.mxu0 %v4259
        %4470 = vmatprep.mubr.bf16.mxu0 %v3990
        %4471 = vmatmul.mubr.bf16.gmra.mrb[0].mxu0 %v3989
        %v4472 = vpop.f32.mrb[0].mxu0
        %v4473 = vadd.f32 0.0, %v4472
        %v4474 = vpop.f32.mrb[0].mxu0
        %v4475 = vadd.f32 0.0, %v4474
        %v4476 = vpop.f32.mrb[0].mxu0
        %v4477 = vadd.f32 0.0, %v4476
        %v4478 = vpop.f32.mrb[0].mxu0
        %v4479 = vadd.f32 0.0, %v4478
        %4480 = vmatprep.mubr.bf16.mxu0 %v3992
        %4481 = vmatmul.mubr.bf16.gmra.mrb[0].mxu0 %v3991
        %v4482 = vpop.f32.mrb[0].mxu0
        %v4483 = vadd.f32 0.0, %v4482
        %v4484 = vpop.f32.mrb[0].mxu0
        %v4485 = vadd.f32 0.0, %v4484
        %v4486 = vpop.f32.mrb[0].mxu0
        %v4487 = vadd.f32 0.0, %v4486
        %v4488 = vpop.f32.mrb[0].mxu0
        %v4489 = vadd.f32 0.0, %v4488
        %4490 = vmatprep.mubr.bf16.mxu0 %v3994
        %4491 = vmatmul.mubr.bf16.gmra.mrb[0].mxu0 %v3993
        %v4492 = vpop.f32.mrb[0].mxu0
        %v4493 = vadd.f32 0.0, %v4492
        %v4494 = vpop.f32.mrb[0].mxu0
        %v4495 = vadd.f32 0.0, %v4494
        %v4496 = vpop.f32.mrb[0].mxu0
        %v4497 = vadd.f32 0.0, %v4496
        %v4498 = vpop.f32.mrb[0].mxu0
        %v4499 = vadd.f32 0.0, %v4498
        %4500 = vmatprep.mubr.bf16.mxu0 %v3996
        %4501 = vmatmul.mubr.bf16.gmra.mrb[0].mxu0 %v3995
        %v4502 = vpop.f32.mrb[0].mxu0
        %v4503 = vadd.f32 0.0, %v4502
        %v4504 = vpop.f32.mrb[0].mxu0
        %v4505 = vadd.f32 0.0, %v4504
        %v4506 = vpop.f32.mrb[0].mxu0
        %v4507 = vadd.f32 0.0, %v4506
        %v4508 = vpop.f32.mrb[0].mxu0
        %v4509 = vadd.f32 0.0, %v4508
        %4510 = vmatprep.mubr.bf16.mxu0 %v3998
        %4511 = vmatmul.mubr.bf16.gmra.mrb[0].mxu0 %v3997
        %v4512 = vpop.f32.mrb[0].mxu0
        %v4513 = vadd.f32 0.0, %v4512
        %v4514 = vpop.f32.mrb[0].mxu0
        %v4515 = vadd.f32 0.0, %v4514
        %v4516 = vpop.f32.mrb[0].mxu0
        %v4517 = vadd.f32 0.0, %v4516
        %v4518 = vpop.f32.mrb[0].mxu0
        %v4519 = vadd.f32 0.0, %v4518
        %4520 = vmatprep.mubr.bf16.mxu0 %v4000
        %4521 = vmatmul.mubr.bf16.gmra.mrb[0].mxu0 %v3999
        %v4522 = vpop.f32.mrb[0].mxu0
        %v4523 = vadd.f32 0.0, %v4522
        %v4524 = vpop.f32.mrb[0].mxu0
        %v4525 = vadd.f32 0.0, %v4524
        %v4526 = vpop.f32.mrb[0].mxu0
        %v4527 = vadd.f32 0.0, %v4526
        %v4528 = vpop.f32.mrb[0].mxu0
        %v4529 = vadd.f32 0.0, %v4528
        %4530 = vmatprep.mubr.bf16.mxu0 %v4002
        %4531 = vmatmul.mubr.bf16.gmra.mrb[0].mxu0 %v4001
        %v4532 = vpop.f32.mrb[0].mxu0
        %v4533 = vadd.f32 0.0, %v4532
        %v4534 = vpop.f32.mrb[0].mxu0
        %v4535 = vadd.f32 0.0, %v4534
        %v4536 = vpop.f32.mrb[0].mxu0
        %v4537 = vadd.f32 0.0, %v4536
        %v4538 = vpop.f32.mrb[0].mxu0
        %v4539 = vadd.f32 0.0, %v4538
        %4540 = vmatprep.mubr.bf16.mxu0 %v4004
        %4541 = vmatmul.mubr.bf16.gmra.mrb[0].mxu0 %v4003
        %v4542 = vpop.f32.mrb[0].mxu0
        %v4543 = vadd.f32 0.0, %v4542
        %v4544 = vpop.f32.mrb[0].mxu0
        %v4545 = vadd.f32 0.0, %v4544
        %v4546 = vpop.f32.mrb[0].mxu0
        %v4547 = vadd.f32 0.0, %v4546
        %v4548 = vpop.f32.mrb[0].mxu0
        %v4549 = vadd.f32 0.0, %v4548
        %4550 = vdwg.mxu0
        %v4551 = vadd.f32 %v4360, %v4364
        %v4552 = vadd.f32 %v4551, %v4370
        %v4553 = vadd.f32 %v4552, %v4374
        %v4554 = vadd.f32 %v4553, %v4380
        %v4555 = vadd.f32 %v4554, %v4384
        %v4556 = vadd.f32 %v4555, %v4390
        %v4557 = vadd.f32 %v4556, %v4394
        %v4558 = vadd.f32 %v4557, %v4400
        %v4559 = vadd.f32 %v4558, %v4404
        %v4560 = vadd.f32 %v4559, %v4410
        %v4561 = vadd.f32 %v4560, %v4414
        %v4562 = vadd.f32 %v4561, %v4420
        %v4563 = vadd.f32 %v4562, %v4424
        %v4564 = vadd.f32 %v4563, %v4430
        %v4565 = vadd.f32 %v4564, %v4434
        %v4566 = vrot.slane %v4565, 4
        %v4567 = vadd.f32 %v4565, %v4566
        %v4568 = vrot.slane %v4567, 2
        %v4569 = vadd.f32 %v4567, %v4568
        %v4570 = vrot.slane %v4569, 1
        %v4571 = vadd.f32 %v4569, %v4570
        %v4572 = vadd.f32 %v4362, %v4366
        %v4573 = vadd.f32 %v4572, %v4372
        %v4574 = vadd.f32 %v4573, %v4376
        %v4575 = vadd.f32 %v4574, %v4382
        %v4576 = vadd.f32 %v4575, %v4386
        %v4577 = vadd.f32 %v4576, %v4392
        %v4578 = vadd.f32 %v4577, %v4396
        %v4579 = vadd.f32 %v4578, %v4402
        %v4580 = vadd.f32 %v4579, %v4406
        %v4581 = vadd.f32 %v4580, %v4412
        %v4582 = vadd.f32 %v4581, %v4416
        %v4583 = vadd.f32 %v4582, %v4422
        %v4584 = vadd.f32 %v4583, %v4426
        %v4585 = vadd.f32 %v4584, %v4432
        %v4586 = vadd.f32 %v4585, %v4436
        %v4587 = vrot.slane %v4586, 4
        %v4588 = vadd.f32 %v4586, %v4587
        %v4589 = vrot.slane %v4588, 2
        %v4590 = vadd.f32 %v4588, %v4589
        %v4591 = vrot.slane %v4590, 1
        %v4592 = vadd.f32 %v4590, %v4591
        %v4593 = vadd.f32 %v4473, %v4477
        %v4594 = vadd.f32 %v4593, %v4483
        %v4595 = vadd.f32 %v4594, %v4487
        %v4596 = vadd.f32 %v4595, %v4493
        %v4597 = vadd.f32 %v4596, %v4497
        %v4598 = vadd.f32 %v4597, %v4503
        %v4599 = vadd.f32 %v4598, %v4507
        %v4600 = vadd.f32 %v4599, %v4513
        %v4601 = vadd.f32 %v4600, %v4517
        %v4602 = vadd.f32 %v4601, %v4523
        %v4603 = vadd.f32 %v4602, %v4527
        %v4604 = vadd.f32 %v4603, %v4533
        %v4605 = vadd.f32 %v4604, %v4537
        %v4606 = vadd.f32 %v4605, %v4543
        %v4607 = vadd.f32 %v4606, %v4547
        %v4608 = vrot.slane %v4607, 4
        %v4609 = vadd.f32 %v4607, %v4608
        %v4610 = vrot.slane %v4609, 2
        %v4611 = vadd.f32 %v4609, %v4610
        %v4612 = vrot.slane %v4611, 1
        %v4613 = vadd.f32 %v4611, %v4612
        %v4614 = vadd.f32 %v4475, %v4479
        %v4615 = vadd.f32 %v4614, %v4485
        %v4616 = vadd.f32 %v4615, %v4489
        %v4617 = vadd.f32 %v4616, %v4495
        %v4618 = vadd.f32 %v4617, %v4499
        %v4619 = vadd.f32 %v4618, %v4505
        %v4620 = vadd.f32 %v4619, %v4509
        %v4621 = vadd.f32 %v4620, %v4515
        %v4622 = vadd.f32 %v4621, %v4519
        %v4623 = vadd.f32 %v4622, %v4525
        %v4624 = vadd.f32 %v4623, %v4529
        %v4625 = vadd.f32 %v4624, %v4535
        %v4626 = vadd.f32 %v4625, %v4539
        %v4627 = vadd.f32 %v4626, %v4545
        %v4628 = vadd.f32 %v4627, %v4549
        %v4629 = vrot.slane %v4628, 4
        %v4630 = vadd.f32 %v4628, %v4629
        %v4631 = vrot.slane %v4630, 2
        %v4632 = vadd.f32 %v4630, %v4631
        %v4633 = vrot.slane %v4632, 1
        %v4634 = vadd.f32 %v4632, %v4633
        %v4635 = vmul.f32 %v4571, 0.0078125
        %v4636 = vmul.f32 %v4592, 0.0078125
        %v4637 = vmul.f32 %v4613, 0.0078125
        %v4638 = vmul.f32 %v4634, 0.0078125
        %v4639 = vsub.f32 %v4360, %v4635
        %v4640 = vsub.f32 %v4362, %v4636
        %v4641 = vsub.f32 %v4473, %v4637
        %v4642 = vsub.f32 %v4475, %v4638
        %v4643 = vsub.f32 %v4364, %v4635
        %v4644 = vsub.f32 %v4366, %v4636
        %v4645 = vsub.f32 %v4477, %v4637
        %v4646 = vsub.f32 %v4479, %v4638
        %v4647 = vsub.f32 %v4370, %v4635
        %v4648 = vsub.f32 %v4372, %v4636
        %v4649 = vsub.f32 %v4483, %v4637
        %v4650 = vsub.f32 %v4485, %v4638
        %v4651 = vsub.f32 %v4374, %v4635
        %v4652 = vsub.f32 %v4376, %v4636
        %v4653 = vsub.f32 %v4487, %v4637
        %v4654 = vsub.f32 %v4489, %v4638
        %v4655 = vsub.f32 %v4380, %v4635
        %v4656 = vsub.f32 %v4382, %v4636
        %v4657 = vsub.f32 %v4493, %v4637
        %v4658 = vsub.f32 %v4495, %v4638
        %v4659 = vsub.f32 %v4384, %v4635
        %v4660 = vsub.f32 %v4386, %v4636
        %v4661 = vsub.f32 %v4497, %v4637
        %v4662 = vsub.f32 %v4499, %v4638
        %v4663 = vsub.f32 %v4390, %v4635
        %v4664 = vsub.f32 %v4392, %v4636
        %v4665 = vsub.f32 %v4503, %v4637
        %v4666 = vsub.f32 %v4505, %v4638
        %v4667 = vsub.f32 %v4394, %v4635
        %v4668 = vsub.f32 %v4396, %v4636
        %v4669 = vsub.f32 %v4507, %v4637
        %v4670 = vsub.f32 %v4509, %v4638
        %v4671 = vsub.f32 %v4400, %v4635
        %v4672 = vsub.f32 %v4402, %v4636
        %v4673 = vsub.f32 %v4513, %v4637
        %v4674 = vsub.f32 %v4515, %v4638
        %v4675 = vsub.f32 %v4404, %v4635
        %v4676 = vsub.f32 %v4406, %v4636
        %v4677 = vsub.f32 %v4517, %v4637
        %v4678 = vsub.f32 %v4519, %v4638
        %v4679 = vsub.f32 %v4410, %v4635
        %v4680 = vsub.f32 %v4412, %v4636
        %v4681 = vsub.f32 %v4523, %v4637
        %v4682 = vsub.f32 %v4525, %v4638
        %v4683 = vsub.f32 %v4414, %v4635
        %v4684 = vsub.f32 %v4416, %v4636
        %v4685 = vsub.f32 %v4527, %v4637
        %v4686 = vsub.f32 %v4529, %v4638
        %v4687 = vsub.f32 %v4420, %v4635
        %v4688 = vsub.f32 %v4422, %v4636
        %v4689 = vsub.f32 %v4533, %v4637
        %v4690 = vsub.f32 %v4535, %v4638
        %v4691 = vsub.f32 %v4424, %v4635
        %v4692 = vsub.f32 %v4426, %v4636
        %v4693 = vsub.f32 %v4537, %v4637
        %v4694 = vsub.f32 %v4539, %v4638
        %v4695 = vsub.f32 %v4430, %v4635
        %v4696 = vsub.f32 %v4432, %v4636
        %v4697 = vsub.f32 %v4543, %v4637
        %v4698 = vsub.f32 %v4545, %v4638
        %v4699 = vsub.f32 %v4434, %v4635
        %v4700 = vsub.f32 %v4436, %v4636
        %v4701 = vsub.f32 %v4547, %v4637
        %v4702 = vsub.f32 %v4549, %v4638
        %v4703 = vmul.f32 %v4639, %v4639
        %v4704 = vmul.f32 %v4640, %v4640
        %v4705 = vmul.f32 %v4641, %v4641
        %v4706 = vmul.f32 %v4642, %v4642
        %v4707 = vmul.f32 %v4643, %v4643
        %v4708 = vmul.f32 %v4644, %v4644
        %v4709 = vmul.f32 %v4645, %v4645
        %v4710 = vmul.f32 %v4646, %v4646
        %v4711 = vmul.f32 %v4647, %v4647
        %v4712 = vmul.f32 %v4648, %v4648
        %v4713 = vmul.f32 %v4649, %v4649
        %v4714 = vmul.f32 %v4650, %v4650
        %v4715 = vmul.f32 %v4651, %v4651
        %v4716 = vmul.f32 %v4652, %v4652
        %v4717 = vmul.f32 %v4653, %v4653
        %v4718 = vmul.f32 %v4654, %v4654
        %v4719 = vmul.f32 %v4655, %v4655
        %v4720 = vmul.f32 %v4656, %v4656
        %v4721 = vmul.f32 %v4657, %v4657
        %v4722 = vmul.f32 %v4658, %v4658
        %v4723 = vmul.f32 %v4659, %v4659
        %v4724 = vmul.f32 %v4660, %v4660
        %v4725 = vmul.f32 %v4661, %v4661
        %v4726 = vmul.f32 %v4662, %v4662
        %v4727 = vmul.f32 %v4663, %v4663
        %v4728 = vmul.f32 %v4664, %v4664
        %v4729 = vmul.f32 %v4665, %v4665
        %v4730 = vmul.f32 %v4666, %v4666
        %v4731 = vmul.f32 %v4667, %v4667
        %v4732 = vmul.f32 %v4668, %v4668
        %v4733 = vmul.f32 %v4669, %v4669
        %v4734 = vmul.f32 %v4670, %v4670
        %v4735 = vmul.f32 %v4671, %v4671
        %v4736 = vmul.f32 %v4672, %v4672
        %v4737 = vmul.f32 %v4673, %v4673
        %v4738 = vmul.f32 %v4674, %v4674
        %v4739 = vmul.f32 %v4675, %v4675
        %v4740 = vmul.f32 %v4676, %v4676
        %v4741 = vmul.f32 %v4677, %v4677
        %v4742 = vmul.f32 %v4678, %v4678
        %v4743 = vmul.f32 %v4679, %v4679
        %v4744 = vmul.f32 %v4680, %v4680
        %v4745 = vmul.f32 %v4681, %v4681
        %v4746 = vmul.f32 %v4682, %v4682
        %v4747 = vmul.f32 %v4683, %v4683
        %v4748 = vmul.f32 %v4684, %v4684
        %v4749 = vmul.f32 %v4685, %v4685
        %v4750 = vmul.f32 %v4686, %v4686
        %v4751 = vmul.f32 %v4687, %v4687
        %v4752 = vmul.f32 %v4688, %v4688
        %v4753 = vmul.f32 %v4689, %v4689
        %v4754 = vmul.f32 %v4690, %v4690
        %v4755 = vmul.f32 %v4691, %v4691
        %v4756 = vmul.f32 %v4692, %v4692
        %v4757 = vmul.f32 %v4693, %v4693
        %v4758 = vmul.f32 %v4694, %v4694
        %v4759 = vmul.f32 %v4695, %v4695
        %v4760 = vmul.f32 %v4696, %v4696
        %v4761 = vmul.f32 %v4697, %v4697
        %v4762 = vmul.f32 %v4698, %v4698
        %v4763 = vmul.f32 %v4699, %v4699
        %v4764 = vmul.f32 %v4700, %v4700
        %v4765 = vmul.f32 %v4701, %v4701
        %v4766 = vmul.f32 %v4702, %v4702
        %v4767 = vadd.f32 %v4703, %v4707
        %v4768 = vadd.f32 %v4767, %v4711
        %v4769 = vadd.f32 %v4768, %v4715
        %v4770 = vadd.f32 %v4769, %v4719
        %v4771 = vadd.f32 %v4770, %v4723
        %v4772 = vadd.f32 %v4771, %v4727
        %v4773 = vadd.f32 %v4772, %v4731
        %v4774 = vadd.f32 %v4773, %v4735
        %v4775 = vadd.f32 %v4774, %v4739
        %v4776 = vadd.f32 %v4775, %v4743
        %v4777 = vadd.f32 %v4776, %v4747
        %v4778 = vadd.f32 %v4777, %v4751
        %v4779 = vadd.f32 %v4778, %v4755
        %v4780 = vadd.f32 %v4779, %v4759
        %v4781 = vadd.f32 %v4780, %v4763
        %v4782 = vrot.slane %v4781, 4
        %v4783 = vadd.f32 %v4781, %v4782
        %v4784 = vrot.slane %v4783, 2
        %v4785 = vadd.f32 %v4783, %v4784
        %v4786 = vrot.slane %v4785, 1
        %v4787 = vadd.f32 %v4785, %v4786
        %v4788 = vadd.f32 %v4704, %v4708
        %v4789 = vadd.f32 %v4788, %v4712
        %v4790 = vadd.f32 %v4789, %v4716
        %v4791 = vadd.f32 %v4790, %v4720
        %v4792 = vadd.f32 %v4791, %v4724
        %v4793 = vadd.f32 %v4792, %v4728
        %v4794 = vadd.f32 %v4793, %v4732
        %v4795 = vadd.f32 %v4794, %v4736
        %v4796 = vadd.f32 %v4795, %v4740
        %v4797 = vadd.f32 %v4796, %v4744
        %v4798 = vadd.f32 %v4797, %v4748
        %v4799 = vadd.f32 %v4798, %v4752
        %v4800 = vadd.f32 %v4799, %v4756
        %v4801 = vadd.f32 %v4800, %v4760
        %v4802 = vadd.f32 %v4801, %v4764
        %v4803 = vrot.slane %v4802, 4
        %v4804 = vadd.f32 %v4802, %v4803
        %v4805 = vrot.slane %v4804, 2
        %v4806 = vadd.f32 %v4804, %v4805
        %v4807 = vrot.slane %v4806, 1
        %v4808 = vadd.f32 %v4806, %v4807
        %v4809 = vadd.f32 %v4705, %v4709
        %v4810 = vadd.f32 %v4809, %v4713
        %v4811 = vadd.f32 %v4810, %v4717
        %v4812 = vadd.f32 %v4811, %v4721
        %v4813 = vadd.f32 %v4812, %v4725
        %v4814 = vadd.f32 %v4813, %v4729
        %v4815 = vadd.f32 %v4814, %v4733
        %v4816 = vadd.f32 %v4815, %v4737
        %v4817 = vadd.f32 %v4816, %v4741
        %v4818 = vadd.f32 %v4817, %v4745
        %v4819 = vadd.f32 %v4818, %v4749
        %v4820 = vadd.f32 %v4819, %v4753
        %v4821 = vadd.f32 %v4820, %v4757
        %v4822 = vadd.f32 %v4821, %v4761
        %v4823 = vadd.f32 %v4822, %v4765
        %v4824 = vrot.slane %v4823, 4
        %v4825 = vadd.f32 %v4823, %v4824
        %v4826 = vrot.slane %v4825, 2
        %v4827 = vadd.f32 %v4825, %v4826
        %v4828 = vrot.slane %v4827, 1
        %v4829 = vadd.f32 %v4827, %v4828
        %v4830 = vadd.f32 %v4706, %v4710
        %v4831 = vadd.f32 %v4830, %v4714
        %v4832 = vadd.f32 %v4831, %v4718
        %v4833 = vadd.f32 %v4832, %v4722
        %v4834 = vadd.f32 %v4833, %v4726
        %v4835 = vadd.f32 %v4834, %v4730
        %v4836 = vadd.f32 %v4835, %v4734
        %v4837 = vadd.f32 %v4836, %v4738
        %v4838 = vadd.f32 %v4837, %v4742
        %v4839 = vadd.f32 %v4838, %v4746
        %v4840 = vadd.f32 %v4839, %v4750
        %v4841 = vadd.f32 %v4840, %v4754
        %v4842 = vadd.f32 %v4841, %v4758
        %v4843 = vadd.f32 %v4842, %v4762
        %v4844 = vadd.f32 %v4843, %v4766
        %v4845 = vrot.slane %v4844, 4
        %v4846 = vadd.f32 %v4844, %v4845
        %v4847 = vrot.slane %v4846, 2
        %v4848 = vadd.f32 %v4846, %v4847
        %v4849 = vrot.slane %v4848, 1
        %v4850 = vadd.f32 %v4848, %v4849
        %v4851 = vmul.f32 %v4787, 0.0078125
        %v4852 = vmul.f32 %v4808, 0.0078125
        %v4853 = vmul.f32 %v4829, 0.0078125
        %v4854 = vmul.f32 %v4850, 0.0078125
        %v4855 = vadd.f32 %v4851, 1e-05
        %v4856 = vadd.f32 %v4852, 1e-05
        %v4857 = vadd.f32 %v4853, 1e-05
        %v4858 = vadd.f32 %v4854, 1e-05
        %v4859 = vrsqrt.pop %v4855
        %v4860 = vrsqrt.pop %v4856
        %v4861 = vrsqrt.pop %v4857
        %v4862 = vrsqrt.pop %v4858
        %v4863 = vmul.f32 %v4639, %v4859
        %v4864 = vmul.f32 %v4640, %v4860
        %v4865 = vmul.f32 %v4641, %v4861
        %v4866 = vmul.f32 %v4642, %v4862
        %v4867 = vmul.f32 %v4643, %v4859
        %v4868 = vmul.f32 %v4644, %v4860
        %v4869 = vmul.f32 %v4645, %v4861
        %v4870 = vmul.f32 %v4646, %v4862
        %v4871 = vmul.f32 %v4647, %v4859
        %v4872 = vmul.f32 %v4648, %v4860
        %v4873 = vmul.f32 %v4649, %v4861
        %v4874 = vmul.f32 %v4650, %v4862
        %v4875 = vmul.f32 %v4651, %v4859
        %v4876 = vmul.f32 %v4652, %v4860
        %v4877 = vmul.f32 %v4653, %v4861
        %v4878 = vmul.f32 %v4654, %v4862
        %v4879 = vmul.f32 %v4655, %v4859
        %v4880 = vmul.f32 %v4656, %v4860
        %v4881 = vmul.f32 %v4657, %v4861
        %v4882 = vmul.f32 %v4658, %v4862
        %v4883 = vmul.f32 %v4659, %v4859
        %v4884 = vmul.f32 %v4660, %v4860
        %v4885 = vmul.f32 %v4661, %v4861
        %v4886 = vmul.f32 %v4662, %v4862
        %v4887 = vmul.f32 %v4663, %v4859
        %v4888 = vmul.f32 %v4664, %v4860
        %v4889 = vmul.f32 %v4665, %v4861
        %v4890 = vmul.f32 %v4666, %v4862
        %v4891 = vmul.f32 %v4667, %v4859
        %v4892 = vmul.f32 %v4668, %v4860
        %v4893 = vmul.f32 %v4669, %v4861
        %v4894 = vmul.f32 %v4670, %v4862
        %v4895 = vmul.f32 %v4671, %v4859
        %v4896 = vmul.f32 %v4672, %v4860
        %v4897 = vmul.f32 %v4673, %v4861
        %v4898 = vmul.f32 %v4674, %v4862
        %v4899 = vmul.f32 %v4675, %v4859
        %v4900 = vmul.f32 %v4676, %v4860
        %v4901 = vmul.f32 %v4677, %v4861
        %v4902 = vmul.f32 %v4678, %v4862
        %v4903 = vmul.f32 %v4679, %v4859
        %v4904 = vmul.f32 %v4680, %v4860
        %v4905 = vmul.f32 %v4681, %v4861
        %v4906 = vmul.f32 %v4682, %v4862
        %v4907 = vmul.f32 %v4683, %v4859
        %v4908 = vmul.f32 %v4684, %v4860
        %v4909 = vmul.f32 %v4685, %v4861
        %v4910 = vmul.f32 %v4686, %v4862
        %v4911 = vmul.f32 %v4687, %v4859
        %v4912 = vmul.f32 %v4688, %v4860
        %v4913 = vmul.f32 %v4689, %v4861
        %v4914 = vmul.f32 %v4690, %v4862
        %v4915 = vmul.f32 %v4691, %v4859
        %v4916 = vmul.f32 %v4692, %v4860
        %v4917 = vmul.f32 %v4693, %v4861
        %v4918 = vmul.f32 %v4694, %v4862
        %v4919 = vmul.f32 %v4695, %v4859
        %v4920 = vmul.f32 %v4696, %v4860
        %v4921 = vmul.f32 %v4697, %v4861
        %v4922 = vmul.f32 %v4698, %v4862
        %v4923 = vmul.f32 %v4699, %v4859
        %v4924 = vmul.f32 %v4700, %v4860
        %v4925 = vmul.f32 %v4701, %v4861
        %v4926 = vmul.f32 %v4702, %v4862
        %v4928 = vlaneseq
        %v4929 = vshrl.u32 %v4928, 7
        %v4930 = vsub.s32 0, %v4929
        %v4931 = vrot.slane %v3987, %v4930
        %v4932 = vlaneseq
        %v4933 = vshrl.u32 %v4932, 7
        %v4934 = vsub.s32 1, %v4933
        %v4935 = vrot.slane %v3987, %v4934
        %v4936 = vlaneseq
        %v4937 = vshrl.u32 %v4936, 7
        %v4938 = vsub.s32 2, %v4937
        %v4939 = vrot.slane %v3987, %v4938
        %v4940 = vlaneseq
        %v4941 = vshrl.u32 %v4940, 7
        %v4942 = vsub.s32 3, %v4941
        %v4943 = vrot.slane %v3987, %v4942
        %v4948 = vmul.f32 %v4863, %v4931
        %v4949 = vmul.f32 %v4864, %v4935
        %v4950 = vmul.f32 %v4865, %v4939
        %v4951 = vmul.f32 %v4866, %v4943
        %v4952 = vmul.f32 %v4867, %v4931
        %v4953 = vmul.f32 %v4868, %v4935
        %v4954 = vmul.f32 %v4869, %v4939
        %v4955 = vmul.f32 %v4870, %v4943
        %v4956 = vmul.f32 %v4871, %v4931
        %v4957 = vmul.f32 %v4872, %v4935
        %v4958 = vmul.f32 %v4873, %v4939
        %v4959 = vmul.f32 %v4874, %v4943
        %v4960 = vmul.f32 %v4875, %v4931
        %v4961 = vmul.f32 %v4876, %v4935
        %v4962 = vmul.f32 %v4877, %v4939
        %v4963 = vmul.f32 %v4878, %v4943
        %v4964 = vmul.f32 %v4879, %v4931
        %v4965 = vmul.f32 %v4880, %v4935
        %v4966 = vmul.f32 %v4881, %v4939
        %v4967 = vmul.f32 %v4882, %v4943
        %v4968 = vmul.f32 %v4883, %v4931
        %v4969 = vmul.f32 %v4884, %v4935
        %v4970 = vmul.f32 %v4885, %v4939
        %v4971 = vmul.f32 %v4886, %v4943
        %v4972 = vmul.f32 %v4887, %v4931
        %v4973 = vmul.f32 %v4888, %v4935
        %v4974 = vmul.f32 %v4889, %v4939
        %v4975 = vmul.f32 %v4890, %v4943
        %v4976 = vmul.f32 %v4891, %v4931
        %v4977 = vmul.f32 %v4892, %v4935
        %v4978 = vmul.f32 %v4893, %v4939
        %v4979 = vmul.f32 %v4894, %v4943
        %v4980 = vmul.f32 %v4895, %v4931
        %v4981 = vmul.f32 %v4896, %v4935
        %v4982 = vmul.f32 %v4897, %v4939
        %v4983 = vmul.f32 %v4898, %v4943
        %v4984 = vmul.f32 %v4899, %v4931
        %v4985 = vmul.f32 %v4900, %v4935
        %v4986 = vmul.f32 %v4901, %v4939
        %v4987 = vmul.f32 %v4902, %v4943
        %v4988 = vmul.f32 %v4903, %v4931
        %v4989 = vmul.f32 %v4904, %v4935
        %v4990 = vmul.f32 %v4905, %v4939
        %v4991 = vmul.f32 %v4906, %v4943
        %v4992 = vmul.f32 %v4907, %v4931
        %v4993 = vmul.f32 %v4908, %v4935
        %v4994 = vmul.f32 %v4909, %v4939
        %v4995 = vmul.f32 %v4910, %v4943
        %v4996 = vmul.f32 %v4911, %v4931
        %v4997 = vmul.f32 %v4912, %v4935
        %v4998 = vmul.f32 %v4913, %v4939
        %v4999 = vmul.f32 %v4914, %v4943
        %v5000 = vmul.f32 %v4915, %v4931
        %v5001 = vmul.f32 %v4916, %v4935
        %v5002 = vmul.f32 %v4917, %v4939
        %v5003 = vmul.f32 %v4918, %v4943
        %v5004 = vmul.f32 %v4919, %v4931
        %v5005 = vmul.f32 %v4920, %v4935
        %v5006 = vmul.f32 %v4921, %v4939
        %v5007 = vmul.f32 %v4922, %v4943
        %v5008 = vmul.f32 %v4923, %v4931
        %v5009 = vmul.f32 %v4924, %v4935
        %v5010 = vmul.f32 %v4925, %v4939
        %v5011 = vmul.f32 %v4926, %v4943
        %v5013 = vlaneseq
        %v5014 = vshrl.u32 %v5013, 7
        %v5015 = vsub.s32 0, %v5014
        %v5016 = vrot.slane %v3988, %v5015
        %v5017 = vlaneseq
        %v5018 = vshrl.u32 %v5017, 7
        %v5019 = vsub.s32 1, %v5018
        %v5020 = vrot.slane %v3988, %v5019
        %v5021 = vlaneseq
        %v5022 = vshrl.u32 %v5021, 7
        %v5023 = vsub.s32 2, %v5022
        %v5024 = vrot.slane %v3988, %v5023
        %v5025 = vlaneseq
        %v5026 = vshrl.u32 %v5025, 7
        %v5027 = vsub.s32 3, %v5026
        %v5028 = vrot.slane %v3988, %v5027
        %v5033 = vadd.f32 %v4948, %v5016
        %v5034 = vadd.f32 %v4949, %v5020
        %v5035 = vadd.f32 %v4950, %v5024
        %v5036 = vadd.f32 %v4951, %v5028
        %v5037 = vadd.f32 %v4952, %v5016
        %v5038 = vadd.f32 %v4953, %v5020
        %v5039 = vadd.f32 %v4954, %v5024
        %v5040 = vadd.f32 %v4955, %v5028
        %v5041 = vadd.f32 %v4956, %v5016
        %v5042 = vadd.f32 %v4957, %v5020
        %v5043 = vadd.f32 %v4958, %v5024
        %v5044 = vadd.f32 %v4959, %v5028
        %v5045 = vadd.f32 %v4960, %v5016
        %v5046 = vadd.f32 %v4961, %v5020
        %v5047 = vadd.f32 %v4962, %v5024
        %v5048 = vadd.f32 %v4963, %v5028
        %v5049 = vadd.f32 %v4964, %v5016
        %v5050 = vadd.f32 %v4965, %v5020
        %v5051 = vadd.f32 %v4966, %v5024
        %v5052 = vadd.f32 %v4967, %v5028
        %v5053 = vadd.f32 %v4968, %v5016
        %v5054 = vadd.f32 %v4969, %v5020
        %v5055 = vadd.f32 %v4970, %v5024
        %v5056 = vadd.f32 %v4971, %v5028
        %v5057 = vadd.f32 %v4972, %v5016
        %v5058 = vadd.f32 %v4973, %v5020
        %v5059 = vadd.f32 %v4974, %v5024
        %v5060 = vadd.f32 %v4975, %v5028
        %v5061 = vadd.f32 %v4976, %v5016
        %v5062 = vadd.f32 %v4977, %v5020
        %v5063 = vadd.f32 %v4978, %v5024
        %v5064 = vadd.f32 %v4979, %v5028
        %v5065 = vadd.f32 %v4980, %v5016
        %v5066 = vadd.f32 %v4981, %v5020
        %v5067 = vadd.f32 %v4982, %v5024
        %v5068 = vadd.f32 %v4983, %v5028
        %v5069 = vadd.f32 %v4984, %v5016
        %v5070 = vadd.f32 %v4985, %v5020
        %v5071 = vadd.f32 %v4986, %v5024
        %v5072 = vadd.f32 %v4987, %v5028
        %v5073 = vadd.f32 %v4988, %v5016
        %v5074 = vadd.f32 %v4989, %v5020
        %v5075 = vadd.f32 %v4990, %v5024
        %v5076 = vadd.f32 %v4991, %v5028
        %v5077 = vadd.f32 %v4992, %v5016
        %v5078 = vadd.f32 %v4993, %v5020
        %v5079 = vadd.f32 %v4994, %v5024
        %v5080 = vadd.f32 %v4995, %v5028
        %v5081 = vadd.f32 %v4996, %v5016
        %v5082 = vadd.f32 %v4997, %v5020
        %v5083 = vadd.f32 %v4998, %v5024
        %v5084 = vadd.f32 %v4999, %v5028
        %v5085 = vadd.f32 %v5000, %v5016
        %v5086 = vadd.f32 %v5001, %v5020
        %v5087 = vadd.f32 %v5002, %v5024
        %v5088 = vadd.f32 %v5003, %v5028
        %v5089 = vadd.f32 %v5004, %v5016
        %v5090 = vadd.f32 %v5005, %v5020
        %v5091 = vadd.f32 %v5006, %v5024
        %v5092 = vadd.f32 %v5007, %v5028
        %v5093 = vadd.f32 %v5008, %v5016
        %v5094 = vadd.f32 %v5009, %v5020
        %v5095 = vadd.f32 %v5010, %v5024
        %v5096 = vadd.f32 %v5011, %v5028
        %v5097 = vxor.u32 %v5033, 2147483648
        %v5098 = vxor.u32 %v5034, 2147483648
        %v5099 = vxor.u32 %v5035, 2147483648
        %v5100 = vxor.u32 %v5036, 2147483648
        %v5101 = vxor.u32 %v5037, 2147483648
        %v5102 = vxor.u32 %v5038, 2147483648
        %v5103 = vxor.u32 %v5039, 2147483648
        %v5104 = vxor.u32 %v5040, 2147483648
        %v5105 = vxor.u32 %v5041, 2147483648
        %v5106 = vxor.u32 %v5042, 2147483648
        %v5107 = vxor.u32 %v5043, 2147483648
        %v5108 = vxor.u32 %v5044, 2147483648
        %v5109 = vxor.u32 %v5045, 2147483648
        %v5110 = vxor.u32 %v5046, 2147483648
        %v5111 = vxor.u32 %v5047, 2147483648
        %v5112 = vxor.u32 %v5048, 2147483648
        %v5113 = vxor.u32 %v5049, 2147483648
        %v5114 = vxor.u32 %v5050, 2147483648
        %v5115 = vxor.u32 %v5051, 2147483648
        %v5116 = vxor.u32 %v5052, 2147483648
        %v5117 = vxor.u32 %v5053, 2147483648
        %v5118 = vxor.u32 %v5054, 2147483648
        %v5119 = vxor.u32 %v5055, 2147483648
        %v5120 = vxor.u32 %v5056, 2147483648
        %v5121 = vxor.u32 %v5057, 2147483648
        %v5122 = vxor.u32 %v5058, 2147483648
        %v5123 = vxor.u32 %v5059, 2147483648
        %v5124 = vxor.u32 %v5060, 2147483648
        %v5125 = vxor.u32 %v5061, 2147483648
        %v5126 = vxor.u32 %v5062, 2147483648
        %v5127 = vxor.u32 %v5063, 2147483648
        %v5128 = vxor.u32 %v5064, 2147483648
        %v5129 = vxor.u32 %v5065, 2147483648
        %v5130 = vxor.u32 %v5066, 2147483648
        %v5131 = vxor.u32 %v5067, 2147483648
        %v5132 = vxor.u32 %v5068, 2147483648
        %v5133 = vxor.u32 %v5069, 2147483648
        %v5134 = vxor.u32 %v5070, 2147483648
        %v5135 = vxor.u32 %v5071, 2147483648
        %v5136 = vxor.u32 %v5072, 2147483648
        %v5137 = vxor.u32 %v5073, 2147483648
        %v5138 = vxor.u32 %v5074, 2147483648
        %v5139 = vxor.u32 %v5075, 2147483648
        %v5140 = vxor.u32 %v5076, 2147483648
        %v5141 = vxor.u32 %v5077, 2147483648
        %v5142 = vxor.u32 %v5078, 2147483648
        %v5143 = vxor.u32 %v5079, 2147483648
        %v5144 = vxor.u32 %v5080, 2147483648
        %v5145 = vxor.u32 %v5081, 2147483648
        %v5146 = vxor.u32 %v5082, 2147483648
        %v5147 = vxor.u32 %v5083, 2147483648
        %v5148 = vxor.u32 %v5084, 2147483648
        %v5149 = vxor.u32 %v5085, 2147483648
        %v5150 = vxor.u32 %v5086, 2147483648
        %v5151 = vxor.u32 %v5087, 2147483648
        %v5152 = vxor.u32 %v5088, 2147483648
        %v5153 = vxor.u32 %v5089, 2147483648
        %v5154 = vxor.u32 %v5090, 2147483648
        %v5155 = vxor.u32 %v5091, 2147483648
        %v5156 = vxor.u32 %v5092, 2147483648
        %v5157 = vxor.u32 %v5093, 2147483648
        %v5158 = vxor.u32 %v5094, 2147483648
        %v5159 = vxor.u32 %v5095, 2147483648
        %v5160 = vxor.u32 %v5096, 2147483648
        %v5161 = vmul.f32 %v5097, 1.442695
        %v5162 = vpow.pop %v5161
        %v5163 = vmul.f32 %v5098, 1.442695
        %v5164 = vpow.pop %v5163
        %v5165 = vmul.f32 %v5099, 1.442695
        %v5166 = vpow.pop %v5165
        %v5167 = vmul.f32 %v5100, 1.442695
        %v5168 = vpow.pop %v5167
        %v5169 = vmul.f32 %v5101, 1.442695
        %v5170 = vpow.pop %v5169
        %v5171 = vmul.f32 %v5102, 1.442695
        %v5172 = vpow.pop %v5171
        %v5173 = vmul.f32 %v5103, 1.442695
        %v5174 = vpow.pop %v5173
        %v5175 = vmul.f32 %v5104, 1.442695
        %v5176 = vpow.pop %v5175
        %v5177 = vmul.f32 %v5105, 1.442695
        %v5178 = vpow.pop %v5177
        %v5179 = vmul.f32 %v5106, 1.442695
        %v5180 = vpow.pop %v5179
        %v5181 = vmul.f32 %v5107, 1.442695
        %v5182 = vpow.pop %v5181
        %v5183 = vmul.f32 %v5108, 1.442695
        %v5184 = vpow.pop %v5183
        %v5185 = vmul.f32 %v5109, 1.442695
        %v5186 = vpow.pop %v5185
        %v5187 = vmul.f32 %v5110, 1.442695
        %v5188 = vpow.pop %v5187
        %v5189 = vmul.f32 %v5111, 1.442695
        %v5190 = vpow.pop %v5189
        %v5191 = vmul.f32 %v5112, 1.442695
        %v5192 = vpow.pop %v5191
        %v5193 = vmul.f32 %v5113, 1.442695
        %v5194 = vpow.pop %v5193
        %v5195 = vmul.f32 %v5114, 1.442695
        %v5196 = vpow.pop %v5195
        %v5197 = vmul.f32 %v5115, 1.442695
        %v5198 = vpow.pop %v5197
        %v5199 = vmul.f32 %v5116, 1.442695
        %v5200 = vpow.pop %v5199
        %v5201 = vmul.f32 %v5117, 1.442695
        %v5202 = vpow.pop %v5201
        %v5203 = vmul.f32 %v5118, 1.442695
        %v5204 = vpow.pop %v5203
        %v5205 = vmul.f32 %v5119, 1.442695
        %v5206 = vpow.pop %v5205
        %v5207 = vmul.f32 %v5120, 1.442695
        %v5208 = vpow.pop %v5207
        %v5209 = vmul.f32 %v5121, 1.442695
        %v5210 = vpow.pop %v5209
        %v5211 = vmul.f32 %v5122, 1.442695
        %v5212 = vpow.pop %v5211
        %v5213 = vmul.f32 %v5123, 1.442695
        %v5214 = vpow.pop %v5213
        %v5215 = vmul.f32 %v5124, 1.442695
        %v5216 = vpow.pop %v5215
        %v5217 = vmul.f32 %v5125, 1.442695
        %v5218 = vpow.pop %v5217
        %v5219 = vmul.f32 %v5126, 1.442695
        %v5220 = vpow.pop %v5219
        %v5221 = vmul.f32 %v5127, 1.442695
        %v5222 = vpow.pop %v5221
        %v5223 = vmul.f32 %v5128, 1.442695
        %v5224 = vpow.pop %v5223
        %v5225 = vmul.f32 %v5129, 1.442695
        %v5226 = vpow.pop %v5225
        %v5227 = vmul.f32 %v5130, 1.442695
        %v5228 = vpow.pop %v5227
        %v5229 = vmul.f32 %v5131, 1.442695
        %v5230 = vpow.pop %v5229
        %v5231 = vmul.f32 %v5132, 1.442695
        %v5232 = vpow.pop %v5231
        %v5233 = vmul.f32 %v5133, 1.442695
        %v5234 = vpow.pop %v5233
        %v5235 = vmul.f32 %v5134, 1.442695
        %v5236 = vpow.pop %v5235
        %v5237 = vmul.f32 %v5135, 1.442695
        %v5238 = vpow.pop %v5237
        %v5239 = vmul.f32 %v5136, 1.442695
        %v5240 = vpow.pop %v5239
        %v5241 = vmul.f32 %v5137, 1.442695
        %v5242 = vpow.pop %v5241
        %v5243 = vmul.f32 %v5138, 1.442695
        %v5244 = vpow.pop %v5243
        %v5245 = vmul.f32 %v5139, 1.442695
        %v5246 = vpow.pop %v5245
        %v5247 = vmul.f32 %v5140, 1.442695
        %v5248 = vpow.pop %v5247
        %v5249 = vmul.f32 %v5141, 1.442695
        %v5250 = vpow.pop %v5249
        %v5251 = vmul.f32 %v5142, 1.442695
        %v5252 = vpow.pop %v5251
        %v5253 = vmul.f32 %v5143, 1.442695
        %v5254 = vpow.pop %v5253
        %v5255 = vmul.f32 %v5144, 1.442695
        %v5256 = vpow.pop %v5255
        %v5257 = vmul.f32 %v5145, 1.442695
        %v5258 = vpow.pop %v5257
        %v5259 = vmul.f32 %v5146, 1.442695
        %v5260 = vpow.pop %v5259
        %v5261 = vmul.f32 %v5147, 1.442695
        %v5262 = vpow.pop %v5261
        %v5263 = vmul.f32 %v5148, 1.442695
        %v5264 = vpow.pop %v5263
        %v5265 = vmul.f32 %v5149, 1.442695
        %v5266 = vpow.pop %v5265
        %v5267 = vmul.f32 %v5150, 1.442695
        %v5268 = vpow.pop %v5267
        %v5269 = vmul.f32 %v5151, 1.442695
        %v5270 = vpow.pop %v5269
        %v5271 = vmul.f32 %v5152, 1.442695
        %v5272 = vpow.pop %v5271
        %v5273 = vmul.f32 %v5153, 1.442695
        %v5274 = vpow.pop %v5273
        %v5275 = vmul.f32 %v5154, 1.442695
        %v5276 = vpow.pop %v5275
        %v5277 = vmul.f32 %v5155, 1.442695
        %v5278 = vpow.pop %v5277
        %v5279 = vmul.f32 %v5156, 1.442695
        %v5280 = vpow.pop %v5279
        %v5281 = vmul.f32 %v5157, 1.442695
        %v5282 = vpow.pop %v5281
        %v5283 = vmul.f32 %v5158, 1.442695
        %v5284 = vpow.pop %v5283
        %v5285 = vmul.f32 %v5159, 1.442695
        %v5286 = vpow.pop %v5285
        %v5287 = vmul.f32 %v5160, 1.442695
        %v5288 = vpow.pop %v5287
        %v5289 = vadd.f32 %v5162, 1.0
        %v5290 = vadd.f32 %v5164, 1.0
        %v5291 = vadd.f32 %v5166, 1.0
        %v5292 = vadd.f32 %v5168, 1.0
        %v5293 = vadd.f32 %v5170, 1.0
        %v5294 = vadd.f32 %v5172, 1.0
        %v5295 = vadd.f32 %v5174, 1.0
        %v5296 = vadd.f32 %v5176, 1.0
        %v5297 = vadd.f32 %v5178, 1.0
        %v5298 = vadd.f32 %v5180, 1.0
        %v5299 = vadd.f32 %v5182, 1.0
        %v5300 = vadd.f32 %v5184, 1.0
        %v5301 = vadd.f32 %v5186, 1.0
        %v5302 = vadd.f32 %v5188, 1.0
        %v5303 = vadd.f32 %v5190, 1.0
        %v5304 = vadd.f32 %v5192, 1.0
        %v5305 = vadd.f32 %v5194, 1.0
        %v5306 = vadd.f32 %v5196, 1.0
        %v5307 = vadd.f32 %v5198, 1.0
        %v5308 = vadd.f32 %v5200, 1.0
        %v5309 = vadd.f32 %v5202, 1.0
        %v5310 = vadd.f32 %v5204, 1.0
        %v5311 = vadd.f32 %v5206, 1.0
        %v5312 = vadd.f32 %v5208, 1.0
        %v5313 = vadd.f32 %v5210, 1.0
        %v5314 = vadd.f32 %v5212, 1.0
        %v5315 = vadd.f32 %v5214, 1.0
        %v5316 = vadd.f32 %v5216, 1.0
        %v5317 = vadd.f32 %v5218, 1.0
        %v5318 = vadd.f32 %v5220, 1.0
        %v5319 = vadd.f32 %v5222, 1.0
        %v5320 = vadd.f32 %v5224, 1.0
        %v5321 = vadd.f32 %v5226, 1.0
        %v5322 = vadd.f32 %v5228, 1.0
        %v5323 = vadd.f32 %v5230, 1.0
        %v5324 = vadd.f32 %v5232, 1.0
        %v5325 = vadd.f32 %v5234, 1.0
        %v5326 = vadd.f32 %v5236, 1.0
        %v5327 = vadd.f32 %v5238, 1.0
        %v5328 = vadd.f32 %v5240, 1.0
        %v5329 = vadd.f32 %v5242, 1.0
        %v5330 = vadd.f32 %v5244, 1.0
        %v5331 = vadd.f32 %v5246, 1.0
        %v5332 = vadd.f32 %v5248, 1.0
        %v5333 = vadd.f32 %v5250, 1.0
        %v5334 = vadd.f32 %v5252, 1.0
        %v5335 = vadd.f32 %v5254, 1.0
        %v5336 = vadd.f32 %v5256, 1.0
        %v5337 = vadd.f32 %v5258, 1.0
        %v5338 = vadd.f32 %v5260, 1.0
        %v5339 = vadd.f32 %v5262, 1.0
        %v5340 = vadd.f32 %v5264, 1.0
        %v5341 = vadd.f32 %v5266, 1.0
        %v5342 = vadd.f32 %v5268, 1.0
        %v5343 = vadd.f32 %v5270, 1.0
        %v5344 = vadd.f32 %v5272, 1.0
        %v5345 = vadd.f32 %v5274, 1.0
        %v5346 = vadd.f32 %v5276, 1.0
        %v5347 = vadd.f32 %v5278, 1.0
        %v5348 = vadd.f32 %v5280, 1.0
        %v5349 = vadd.f32 %v5282, 1.0
        %v5350 = vadd.f32 %v5284, 1.0
        %v5351 = vadd.f32 %v5286, 1.0
        %v5352 = vadd.f32 %v5288, 1.0
        %v5353 = vrcp.pop %v5289
        %v5354 = vmul.f32 1.0, %v5353
        %v5355 = vrcp.pop %v5290
        %v5356 = vmul.f32 1.0, %v5355
        %v5357 = vrcp.pop %v5291
        %v5358 = vmul.f32 1.0, %v5357
        %v5359 = vrcp.pop %v5292
        %v5360 = vmul.f32 1.0, %v5359
        %v5361 = vrcp.pop %v5293
        %v5362 = vmul.f32 1.0, %v5361
        %v5363 = vrcp.pop %v5294
        %v5364 = vmul.f32 1.0, %v5363
        %v5365 = vrcp.pop %v5295
        %v5366 = vmul.f32 1.0, %v5365
        %v5367 = vrcp.pop %v5296
        %v5368 = vmul.f32 1.0, %v5367
        %v5369 = vrcp.pop %v5297
        %v5370 = vmul.f32 1.0, %v5369
        %v5371 = vrcp.pop %v5298
        %v5372 = vmul.f32 1.0, %v5371
        %v5373 = vrcp.pop %v5299
        %v5374 = vmul.f32 1.0, %v5373
        %v5375 = vrcp.pop %v5300
        %v5376 = vmul.f32 1.0, %v5375
        %v5377 = vrcp.pop %v5301
        %v5378 = vmul.f32 1.0, %v5377
        %v5379 = vrcp.pop %v5302
        %v5380 = vmul.f32 1.0, %v5379
        %v5381 = vrcp.pop %v5303
        %v5382 = vmul.f32 1.0, %v5381
        %v5383 = vrcp.pop %v5304
        %v5384 = vmul.f32 1.0, %v5383
        %v5385 = vrcp.pop %v5305
        %v5386 = vmul.f32 1.0, %v5385
        %v5387 = vrcp.pop %v5306
        %v5388 = vmul.f32 1.0, %v5387
        %v5389 = vrcp.pop %v5307
        %v5390 = vmul.f32 1.0, %v5389
        %v5391 = vrcp.pop %v5308
        %v5392 = vmul.f32 1.0, %v5391
        %v5393 = vrcp.pop %v5309
        %v5394 = vmul.f32 1.0, %v5393
        %v5395 = vrcp.pop %v5310
        %v5396 = vmul.f32 1.0, %v5395
        %v5397 = vrcp.pop %v5311
        %v5398 = vmul.f32 1.0, %v5397
        %v5399 = vrcp.pop %v5312
        %v5400 = vmul.f32 1.0, %v5399
        %v5401 = vrcp.pop %v5313
        %v5402 = vmul.f32 1.0, %v5401
        %v5403 = vrcp.pop %v5314
        %v5404 = vmul.f32 1.0, %v5403
        %v5405 = vrcp.pop %v5315
        %v5406 = vmul.f32 1.0, %v5405
        %v5407 = vrcp.pop %v5316
        %v5408 = vmul.f32 1.0, %v5407
        %v5409 = vrcp.pop %v5317
        %v5410 = vmul.f32 1.0, %v5409
        %v5411 = vrcp.pop %v5318
        %v5412 = vmul.f32 1.0, %v5411
        %v5413 = vrcp.pop %v5319
        %v5414 = vmul.f32 1.0, %v5413
        %v5415 = vrcp.pop %v5320
        %v5416 = vmul.f32 1.0, %v5415
        %v5417 = vrcp.pop %v5321
        %v5418 = vmul.f32 1.0, %v5417
        %v5419 = vrcp.pop %v5322
        %v5420 = vmul.f32 1.0, %v5419
        %v5421 = vrcp.pop %v5323
        %v5422 = vmul.f32 1.0, %v5421
        %v5423 = vrcp.pop %v5324
        %v5424 = vmul.f32 1.0, %v5423
        %v5425 = vrcp.pop %v5325
        %v5426 = vmul.f32 1.0, %v5425
        %v5427 = vrcp.pop %v5326
        %v5428 = vmul.f32 1.0, %v5427
        %v5429 = vrcp.pop %v5327
        %v5430 = vmul.f32 1.0, %v5429
        %v5431 = vrcp.pop %v5328
        %v5432 = vmul.f32 1.0, %v5431
        %v5433 = vrcp.pop %v5329
        %v5434 = vmul.f32 1.0, %v5433
        %v5435 = vrcp.pop %v5330
        %v5436 = vmul.f32 1.0, %v5435
        %v5437 = vrcp.pop %v5331
        %v5438 = vmul.f32 1.0, %v5437
        %v5439 = vrcp.pop %v5332
        %v5440 = vmul.f32 1.0, %v5439
        %v5441 = vrcp.pop %v5333
        %v5442 = vmul.f32 1.0, %v5441
        %v5443 = vrcp.pop %v5334
        %v5444 = vmul.f32 1.0, %v5443
        %v5445 = vrcp.pop %v5335
        %v5446 = vmul.f32 1.0, %v5445
        %v5447 = vrcp.pop %v5336
        %v5448 = vmul.f32 1.0, %v5447
        %v5449 = vrcp.pop %v5337
        %v5450 = vmul.f32 1.0, %v5449
        %v5451 = vrcp.pop %v5338
        %v5452 = vmul.f32 1.0, %v5451
        %v5453 = vrcp.pop %v5339
        %v5454 = vmul.f32 1.0, %v5453
        %v5455 = vrcp.pop %v5340
        %v5456 = vmul.f32 1.0, %v5455
        %v5457 = vrcp.pop %v5341
        %v5458 = vmul.f32 1.0, %v5457
        %v5459 = vrcp.pop %v5342
        %v5460 = vmul.f32 1.0, %v5459
        %v5461 = vrcp.pop %v5343
        %v5462 = vmul.f32 1.0, %v5461
        %v5463 = vrcp.pop %v5344
        %v5464 = vmul.f32 1.0, %v5463
        %v5465 = vrcp.pop %v5345
        %v5466 = vmul.f32 1.0, %v5465
        %v5467 = vrcp.pop %v5346
        %v5468 = vmul.f32 1.0, %v5467
        %v5469 = vrcp.pop %v5347
        %v5470 = vmul.f32 1.0, %v5469
        %v5471 = vrcp.pop %v5348
        %v5472 = vmul.f32 1.0, %v5471
        %v5473 = vrcp.pop %v5349
        %v5474 = vmul.f32 1.0, %v5473
        %v5475 = vrcp.pop %v5350
        %v5476 = vmul.f32 1.0, %v5475
        %v5477 = vrcp.pop %v5351
        %v5478 = vmul.f32 1.0, %v5477
        %v5479 = vrcp.pop %v5352
        %v5480 = vmul.f32 1.0, %v5479
        %5481 = vst [vmem:[%s900] sm:$0xff] %v5354
        %5482 = vst [vmem:[%s900 + $0x8] sm:$0xff] %v5356
        %5483 = vst [vmem:[%s900 + $0x10] sm:$0xff] %v5358
        %5484 = vst [vmem:[%s900 + $0x18] sm:$0xff] %v5360
        %5485 = vst [vmem:[%s900 + $0x20] sm:$0xff] %v5362
        %5486 = vst [vmem:[%s900 + $0x28] sm:$0xff] %v5364
        %5487 = vst [vmem:[%s900 + $0x30] sm:$0xff] %v5366
        %5488 = vst [vmem:[%s900 + $0x38] sm:$0xff] %v5368
        %5489 = vst [vmem:[%s900 + $0x40] sm:$0xff] %v5370
        %5490 = vst [vmem:[%s900 + $0x48] sm:$0xff] %v5372
        %5491 = vst [vmem:[%s900 + $0x50] sm:$0xff] %v5374
        %5492 = vst [vmem:[%s900 + $0x58] sm:$0xff] %v5376
        %5493 = vst [vmem:[%s900 + $0x60] sm:$0xff] %v5378
        %5494 = vst [vmem:[%s900 + $0x68] sm:$0xff] %v5380
        %5495 = vst [vmem:[%s900 + $0x70] sm:$0xff] %v5382
        %5496 = vst [vmem:[%s900 + $0x78] sm:$0xff] %v5384
        %5497 = vst [vmem:[%s900 + $0x80] sm:$0xff] %v5386
        %5498 = vst [vmem:[%s900 + $0x88] sm:$0xff] %v5388
        %5499 = vst [vmem:[%s900 + $0x90] sm:$0xff] %v5390
        %5500 = vst [vmem:[%s900 + $0x98] sm:$0xff] %v5392
        %5501 = vst [vmem:[%s900 + $0xa0] sm:$0xff] %v5394
        %5502 = vst [vmem:[%s900 + $0xa8] sm:$0xff] %v5396
        %5503 = vst [vmem:[%s900 + $0xb0] sm:$0xff] %v5398
        %5504 = vst [vmem:[%s900 + $0xb8] sm:$0xff] %v5400
        %5505 = vst [vmem:[%s900 + $0xc0] sm:$0xff] %v5402
        %5506 = vst [vmem:[%s900 + $0xc8] sm:$0xff] %v5404
        %5507 = vst [vmem:[%s900 + $0xd0] sm:$0xff] %v5406
        %5508 = vst [vmem:[%s900 + $0xd8] sm:$0xff] %v5408
        %5509 = vst [vmem:[%s900 + $0xe0] sm:$0xff] %v5410
        %5510 = vst [vmem:[%s900 + $0xe8] sm:$0xff] %v5412
        %5511 = vst [vmem:[%s900 + $0xf0] sm:$0xff] %v5414
        %5512 = vst [vmem:[%s900 + $0xf8] sm:$0xff] %v5416
        %5513 = vst [vmem:[%s900 + $0x100] sm:$0xff] %v5418
        %5514 = vst [vmem:[%s900 + $0x108] sm:$0xff] %v5420
        %5515 = vst [vmem:[%s900 + $0x110] sm:$0xff] %v5422
        %5516 = vst [vmem:[%s900 + $0x118] sm:$0xff] %v5424
        %5517 = vst [vmem:[%s900 + $0x120] sm:$0xff] %v5426
        %5518 = vst [vmem:[%s900 + $0x128] sm:$0xff] %v5428
        %5519 = vst [vmem:[%s900 + $0x130] sm:$0xff] %v5430
        %5520 = vst [vmem:[%s900 + $0x138] sm:$0xff] %v5432
        %5521 = vst [vmem:[%s900 + $0x140] sm:$0xff] %v5434
        %5522 = vst [vmem:[%s900 + $0x148] sm:$0xff] %v5436
        %5523 = vst [vmem:[%s900 + $0x150] sm:$0xff] %v5438
        %5524 = vst [vmem:[%s900 + $0x158] sm:$0xff] %v5440
        %5525 = vst [vmem:[%s900 + $0x160] sm:$0xff] %v5442
        %5526 = vst [vmem:[%s900 + $0x168] sm:$0xff] %v5444
        %5527 = vst [vmem:[%s900 + $0x170] sm:$0xff] %v5446
        %5528 = vst [vmem:[%s900 + $0x178] sm:$0xff] %v5448
        %5529 = vst [vmem:[%s900 + $0x180] sm:$0xff] %v5450
        %5530 = vst [vmem:[%s900 + $0x188] sm:$0xff] %v5452
        %5531 = vst [vmem:[%s900 + $0x190] sm:$0xff] %v5454
        %5532 = vst [vmem:[%s900 + $0x198] sm:$0xff] %v5456
        %5533 = vst [vmem:[%s900 + $0x1a0] sm:$0xff] %v5458
        %5534 = vst [vmem:[%s900 + $0x1a8] sm:$0xff] %v5460
        %5535 = vst [vmem:[%s900 + $0x1b0] sm:$0xff] %v5462
        %5536 = vst [vmem:[%s900 + $0x1b8] sm:$0xff] %v5464
        %5537 = vst [vmem:[%s900 + $0x1c0] sm:$0xff] %v5466
        %5538 = vst [vmem:[%s900 + $0x1c8] sm:$0xff] %v5468
        %5539 = vst [vmem:[%s900 + $0x1d0] sm:$0xff] %v5470
        %5540 = vst [vmem:[%s900 + $0x1d8] sm:$0xff] %v5472
        %5541 = vst [vmem:[%s900 + $0x1e0] sm:$0xff] %v5474
        %5542 = vst [vmem:[%s900 + $0x1e8] sm:$0xff] %v5476
        %5543 = vst [vmem:[%s900 + $0x1f0] sm:$0xff] %v5478
        %5544 = vst [vmem:[%s900 + $0x1f8] sm:$0xff] %v5480
        %s5545 = sand.u32 %s492, 1
        %s5546 = scalar_lea.sflag [#allocation4], %s5545
        %s5547 = sand.u32 %s492, 1
        %s5548 = smul.addr %s5547, 512
        %s5549 = scalar_lea.vmem [#allocation20], %s5548
        %s5550 = sand.u32 %s54, 1
        %s5551 = scalar_lea.sflag [#allocation22], %s5550
        %s5552 = sand.u32 %s518, 1
        %s5553 = smul.addr %s5552, 128
        %s5554 = scalar_lea.vmem [#allocation21], %s5553
        %s5555 = sand.u32 %s54, 1
        %s5556 = scalar_lea.sflag [#allocation22], %s5555
        %s5557 = sand.u32 %s544, 1
        %s5558 = smul.addr %s5557, 128
        %s5559 = scalar_lea.vmem [#allocation23], %s5558
        %s5560 = sand.u32 %s570, 1
        %s5561 = scalar_lea.sflag [#allocation25], %s5560
        %s5562 = sand.u32 %s570, 1
        %s5563 = smul.addr %s5562, 128
        %s5564 = scalar_lea.vmem [#allocation24], %s5563
        // Predicated region
        $region145: #{vae_forward.1} parent=99 // pred_check
          %p5565 = pneg %p502
        $region146: #{vae_forward.1} parent=99 // pred_check_branch
          %5567 = sbr.rel (%p5565) target = $region148
        $region147: #{vae_forward.1} parent=99 // pred_region
          %s5568 = smul.u32 16, %s54
          %s5570 = ssub.s32 8192, 8192
          %5571 = vsyncadd %s5546, %s5570
          %s5572 = smul.addr %s5568, 4
          %s5573 = smul.addr %s5572, 128
          %s5574 = scalar_lea.hbm %s20, %s5573
          %s5575 = sshll.u32 %s5549, 4
          %s5576 = int_to_ptr.vmem [resolvable:$true] %s5575
          %5581 = dma.vmem_to_hbm [thread:$0]  %s5576, 8192, %s5574, %s5546, 512, 512, 32
        $region148: #{vae_forward.1} parent=99 // pred_fallthru
          _
        // Predicated region
        $region149: #{vae_forward.1} parent=99 // pred_check
          %p5582 = pneg %p528
        $region150: #{vae_forward.1} parent=99 // pred_check_branch
          %5584 = sbr.rel (%p5582) target = $region152
        $region151: #{vae_forward.1} parent=99 // pred_region
          %s5585 = smul.u32 16, %s54
          %s5587 = ssub.s32 2048, 2048
          %5588 = vsyncadd %s5551, %s5587
          %s5589 = smul.addr %s5585, 128
          %s5590 = scalar_lea.hbm %s21, %s5589
          %s5591 = sshll.u32 %s5554, 4
          %s5592 = int_to_ptr.vmem [resolvable:$true] %s5591
          %5597 = dma.vmem_to_hbm [thread:$0]  %s5592, 2048, %s5590, %s5551, 128, 128, 8
        $region152: #{vae_forward.1} parent=99 // pred_fallthru
          _
        // Predicated region
        $region153: #{vae_forward.1} parent=99 // pred_check
          %p5598 = pneg %p554
        $region154: #{vae_forward.1} parent=99 // pred_check_branch
          %5600 = sbr.rel (%p5598) target = $region156
        $region155: #{vae_forward.1} parent=99 // pred_region
          %s5601 = smul.u32 16, %s54
          %s5603 = ssub.s32 2048, 2048
          %5604 = vsyncadd %s5556, %s5603
          %s5605 = smul.addr %s5601, 128
          %s5606 = scalar_lea.hbm %s22, %s5605
          %s5607 = sshll.u32 %s5559, 4
          %s5608 = int_to_ptr.vmem [resolvable:$true] %s5607
          %5613 = dma.vmem_to_hbm [thread:$0]  %s5608, 2048, %s5606, %s5556, 128, 128, 8
        $region156: #{vae_forward.1} parent=99 // pred_fallthru
          _
        // Predicated region
        $region157: #{vae_forward.1} parent=99 // pred_check
          %p5614 = pneg %p580
        $region158: #{vae_forward.1} parent=99 // pred_check_branch
          %5616 = sbr.rel (%p5614) target = $region160
        $region159: #{vae_forward.1} parent=99 // pred_region
          %s5617 = smul.u32 16, %s54
          %s5619 = ssub.s32 2048, 2048
          %5620 = vsyncadd %s5561, %s5619
          %s5621 = smul.addr %s5617, 128
          %s5622 = scalar_lea.hbm %s23, %s5621
          %s5623 = sshll.u32 %s5564, 4
          %s5624 = int_to_ptr.vmem [resolvable:$true] %s5623
          %5629 = dma.vmem_to_hbm [thread:$0]  %s5624, 2048, %s5622, %s5561, 128, 128, 8
        $region160: #{vae_forward.1} parent=99 // pred_fallthru
          _
      $region100: #{vae_forward.1} parent=5 // pred_fallthru
        _
      %p5630 = scmp.le.s32.totalorder 2, %s49
      // Predicated region
      $region161: #{vae_forward.1} parent=5 // pred_check
        %p5631 = pneg %p5630
      $region162: #{vae_forward.1} parent=5 // pred_check_branch
        %5633 = sbr.rel (%p5631) target = $region164
      $region163: #{vae_forward.1} parent=5 // pred_region
        %s5634 = ssub.s32 %s49, 2
        // Predicated region
        $region165: #{vae_forward.1} parent=163 // pred_check
          %p5635 = pneg %p508
        $region166: #{vae_forward.1} parent=163 // pred_check_branch
          %5637 = sbr.rel (%p5635) target = $region168
        $region167: #{vae_forward.1} parent=163 // pred_region
          %s5638 = sand.u32 %s493, 1
          %s5639 = scalar_lea.sflag [#allocation4], %s5638
          %s5640 = sand.u32 %s493, 1
          %s5641 = smul.addr %s5640, 512
          %s5642 = scalar_lea.vmem [#allocation20], %s5641
          %5643 = dma.done %s5639, 8192
        $region168: #{vae_forward.1} parent=163 // pred_fallthru
          _
        // Predicated region
        $region169: #{vae_forward.1} parent=163 // pred_check
          %p5644 = pneg %p534
        $region170: #{vae_forward.1} parent=163 // pred_check_branch
          %5646 = sbr.rel (%p5644) target = $region172
        $region171: #{vae_forward.1} parent=163 // pred_region
          %s5647 = sand.u32 %s55, 1
          %s5648 = scalar_lea.sflag [#allocation22], %s5647
          %s5649 = sand.u32 %s519, 1
          %s5650 = smul.addr %s5649, 128
          %s5651 = scalar_lea.vmem [#allocation21], %s5650
          %5652 = dma.done %s5648, 2048
        $region172: #{vae_forward.1} parent=163 // pred_fallthru
          _
        // Predicated region
        $region173: #{vae_forward.1} parent=163 // pred_check
          %p5653 = pneg %p560
        $region174: #{vae_forward.1} parent=163 // pred_check_branch
          %5655 = sbr.rel (%p5653) target = $region176
        $region175: #{vae_forward.1} parent=163 // pred_region
          %s5656 = sand.u32 %s55, 1
          %s5657 = scalar_lea.sflag [#allocation22], %s5656
          %s5658 = sand.u32 %s545, 1
          %s5659 = smul.addr %s5658, 128
          %s5660 = scalar_lea.vmem [#allocation23], %s5659
          %5661 = dma.done %s5657, 2048
        $region176: #{vae_forward.1} parent=163 // pred_fallthru
          _
        // Predicated region
        $region177: #{vae_forward.1} parent=163 // pred_check
          %p5662 = pneg %p586
        $region178: #{vae_forward.1} parent=163 // pred_check_branch
          %5664 = sbr.rel (%p5662) target = $region180
        $region179: #{vae_forward.1} parent=163 // pred_region
          %s5665 = sand.u32 %s571, 1
          %s5666 = scalar_lea.sflag [#allocation25], %s5665
          %s5667 = sand.u32 %s571, 1
          %s5668 = smul.addr %s5667, 128
          %s5669 = scalar_lea.vmem [#allocation24], %s5668
          %5670 = dma.done %s5666, 2048
        $region180: #{vae_forward.1} parent=163 // pred_fallthru
          _
      $region164: #{vae_forward.1} parent=5 // pred_fallthru
        _
    $region6: #{vae_forward.1} parent=1 // loop_footer
      %s53 = sadd.s32 1, %s49
    $region7: #{vae_forward.1} parent=1 // loop_footer_branch
      %48 = sbr.rel target = $region3
    $region8: #{vae_forward.1} parent=1 // loop_exit
      _
    %5671 = vsyncpa [#allocation3], 1
    %s5672 = scalar_lea.sflag [#allocation3], 1
    %5673 = vsyncpa %s5672, 1
    %5674 = vsyncpa [#allocation6], 1
    %s5675 = scalar_lea.sflag [#allocation6], 1
    %5676 = vsyncpa %s5675, 1
    %5677 = vsyncpa [#allocation9], 1
    %5678 = vsyncpa [#allocation12], 1
    %5679 = vsyncpa [#allocation15], 1
    %5680 = vsyncpa [#allocation18], 1
    %5681 = vsyncpa [#allocation4], 1
    %s5682 = scalar_lea.sflag [#allocation4], 1
    %5683 = vsyncpa %s5682, 1
    %5684 = vsyncpa [#allocation22], 1
    %s5685 = scalar_lea.sflag [#allocation22], 1
    %5686 = vsyncpa %s5685, 1
    %5687 = vsyncpa [#allocation25], 1
    %s5688 = scalar_lea.sflag [#allocation25], 1
    %5689 = vsyncpa %s5688, 1

</llo_original>
